<compile_context>
chip_gen: v7x
topology: tpu7x:2x2x1
jax: 0.10.0
libtpu: 0.0.40
codegen_flags: <defaults>
</compile_context>

<pallas_src>
import jax
import jax.numpy as jnp
from jax import lax
from jax.experimental import pallas as pl
from jax.experimental.pallas import tpu as pltpu


def _char_lstm_kernel(ids_ref, ew_ref, whh_ref, h_out_ref, xp_ref):
    """Single-layer LSTM over chars; writes only the last hidden state.

    ids_ref:   [tn, T]     int32 char ids for this tile of words (T chars/word)
    ew_ref:    [Vc, 4*Hp]  fused table  char_embedding @ W_ih + (b_ih + b_hh)
    whh_ref:   [Hp, 4*Hp]  fused hidden->gate weights (gates i|f|g|o along lanes)
    h_out_ref: [tn, Hp]    hidden state at the last timestep (padded to Hp)
    xp_ref:    [T, tn, 4*Hp] VMEM scratch for the hoisted input projection
    """
    tn, T = ids_ref.shape
    Vc, G4 = ew_ref.shape
    Hp = whh_ref.shape[0]

    ew = ew_ref[...]                                              # [Vc, 4*Hp]
    lane_ids = jax.lax.broadcasted_iota(jnp.int32, (tn, Vc), 1)   # hoisted iota

    # --- Input projection, hoisted out of the recurrence ---------------------
    # x_t @ W_ih + b == onehot(id_t) @ (E @ W_ih + b)   (each onehot row sums to 1)
    # => embedding gather + input matmul + bias collapse into one lane-dense
    #    [tn, Vc] x [Vc, 4*Hp] MXU matmul per timestep, with no serial dependence.
    for t in range(T):                                            # static, independent
        onehot = (lane_ids == ids_ref[:, t:t + 1]).astype(jnp.float32)  # [tn, Vc]
        xp_ref[t] = jnp.dot(onehot, ew, preferred_element_type=jnp.float32)

    # --- Recurrence: one fused [tn, Hp] x [Hp, 4*Hp] matmul per step ----------
    # TODO(synk): on v5e, pltpu.matmul_push_rhs could keep whh staged across steps.
    whh = whh_ref[...]

    def step(t, carry):
        h, c = carry
        g = xp_ref[t] + jnp.dot(h, whh, preferred_element_type=jnp.float32)  # [tn, 4*Hp]
        i = jax.nn.sigmoid(g[:, 0 * Hp:1 * Hp])
        f = jax.nn.sigmoid(g[:, 1 * Hp:2 * Hp])
        gg = jnp.tanh(g[:, 2 * Hp:3 * Hp])
        o = jax.nn.sigmoid(g[:, 3 * Hp:4 * Hp])
        c_new = f * c + i * gg
        h_new = o * jnp.tanh(c_new)
        return (h_new, c_new)

    h0 = jnp.zeros((tn, Hp), jnp.float32)
    c0 = jnp.zeros((tn, Hp), jnp.float32)
    # Full unroll for short words; partial unroll bounds vreg pressure otherwise.
    h_last, _ = lax.fori_loop(0, T, step, (h0, c0),
                              unroll=True if T <= 16 else 4)
    h_out_ref[...] = h_last


def _choose_tile(n):
    # Multiple of 128 keeps the ids / one-hot / output blocks (8,128)-friendly.
    # Cap at 256 so the [T, tn, 4*Hp] x_proj scratch stays well inside v7x's
    # 64 MiB VMEM (and the default scoped limit) even for realistic T/H.
    return 256 if n >= 256 else 128


def char_lstm_last_hidden(char_ids, ew_b, whh_p, H):
    """char_ids: [N, T] int32 -> last LSTM hidden state [N, H] f32."""
    N, T = char_ids.shape
    Vc, G4 = ew_b.shape
    Hp = whh_p.shape[0]

    tn = _choose_tile(N)
    n_pad = pl.cdiv(N, tn) * tn
    if n_pad != N:
        # Pad with a valid id (0); padded rows are discarded below.
        char_ids = jnp.pad(char_ids, ((0, n_pad - N), (0, 0)))

    h = pl.pallas_call(
        _char_lstm_kernel,
        out_shape=jax.ShapeDtypeStruct((n_pad, Hp), jnp.float32),
        grid_spec=pltpu.PrefetchScalarGridSpec(
            num_scalar_prefetch=0,
            grid=(n_pad // tn,),
            in_specs=[
                pl.BlockSpec((tn, T), lambda i: (i, 0)),     # int32 ids only (no f32 embs in HBM)
                pl.BlockSpec((Vc, G4), lambda i: (0, 0)),    # fused E@Wih + b, resident
                pl.BlockSpec((Hp, G4), lambda i: (0, 0)),    # fused Whh, resident
            ],
            out_specs=pl.BlockSpec((tn, Hp), lambda i: (i, 0)),
            scratch_shapes=[pltpu.VMEM((T, tn, G4), jnp.float32)],
        ),
        compiler_params=pltpu.CompilerParams(
            dimension_semantics=("parallel",)),
    )(char_ids, ew_b, whh_p)
    return h[:N, :H]


def _fuse_lstm_params(char_embedding, w_ih, w_hh, b_ih, b_hh):
    """Build the fused, lane-dense kernel parameters from PyTorch-layout LSTM params."""
    H = w_hh.shape[1]
    Hp = ((H + 31) // 32) * 32           # pad hidden so 4*Hp is a multiple of 128 lanes

    def pack(w):                          # [4H, in] -> [in, 4*Hp], gate order i|f|g|o
        gates = [w[k * H:(k + 1) * H].T for k in range(4)]            # each [in, H]
        gates = [jnp.pad(g, ((0, 0), (0, Hp - H))) for g in gates]    # each [in, Hp]
        return jnp.concatenate(gates, axis=1)                         # [in, 4*Hp]

    wih_p = pack(w_ih)                                                # [Dc, 4*Hp]
    whh_p = jnp.pad(pack(w_hh), ((0, Hp - H), (0, 0)))                # [Hp, 4*Hp]

    b = (b_ih + b_hh).reshape(4, H)
    b_p = jnp.pad(b, ((0, 0), (0, Hp - H))).reshape(1, 4 * Hp)        # [1, 4*Hp]

    # Fuse embedding gather + input projection + bias:
    # E[id] @ Wih + b == onehot(id) @ (E @ Wih + b)
    # Padded gate columns stay exactly zero -> padded h/c lanes stay zero.
    # TODO(synk): ew_b / whh_p could be cast to bf16 for v6e/v7x MXU; kept f32 to
    # match PyTorch f32 numerics exactly.
    ew_b = char_embedding @ wih_p + b_p                               # [Vc, 4*Hp]
    return ew_b, whh_p


def word_representation_forward(words, chars, params):
    """words: [B, S] int32, chars: [B, S, W] int32 -> [S, B, word_dim + H] f32."""
    word_emb = params["word_embedding"]
    H = params["char_lstm_dim"]
    B, S = words.shape
    W = chars.shape[2]

    # Glue: word-embedding gather + permutes stay in plain JAX.
    words_t = jnp.transpose(words, (1, 0))                        # [S, B]
    word_embs = jnp.take(word_emb, words_t, axis=0)               # [S, B, word_dim]

    # Hot path: char-level LSTM (Pallas). Only int32 ids go to the kernel.
    char_ids = chars.reshape(B * S, W)                            # [N, T]
    h_last = char_lstm_last_hidden(char_ids, params["ew_b"], params["whh_p"], H)
    char_composed = jnp.transpose(h_last.reshape(B, S, H), (1, 0, 2))   # [S, B, H]

    return jnp.concatenate([word_embs, char_composed], axis=2)    # [S, B, word_dim+H]


def init_params(key, vocab_size, char_vocab_size, word_dim, char_dim, char_lstm_dim):
    kw, kc, k1, k2, k3, k4 = jax.random.split(key, 6)
    # word embedding: copied from provided embedding_weights in PyTorch (frozen);
    # here generated deterministically.
    word_embedding = jax.random.normal(kw, (vocab_size, word_dim), jnp.float32)
    # char embedding: N(0,1) with the padding row (last index) zeroed, as nn.Embedding does.
    char_embedding = jax.random.normal(kc, (char_vocab_size, char_dim), jnp.float32)
    char_embedding = char_embedding.at[char_vocab_size - 1].set(0.0)

    H = char_lstm_dim
    bound = 1.0 / (H ** 0.5)
    # PyTorch nn.LSTM parameter layout: [4H, in], gate order i, f, g, o.
    w_ih = jax.random.uniform(k1, (4 * H, char_dim), jnp.float32, -bound, bound)
    w_hh = jax.random.uniform(k2, (4 * H, H), jnp.float32, -bound, bound)
    b_ih = jax.random.uniform(k3, (4 * H,), jnp.float32, -bound, bound)
    b_hh = jax.random.uniform(k4, (4 * H,), jnp.float32, -bound, bound)

    ew_b, whh_p = _fuse_lstm_params(char_embedding, w_ih, w_hh, b_ih, b_hh)

    # TODO(synk): nn.LSTM(dropout=0.1) with num_layers=1 never applies dropout -> no-op.
    return {
        "word_embedding": word_embedding,
        "char_embedding": char_embedding,
        "w_ih": w_ih, "w_hh": w_hh, "b_ih": b_ih, "b_hh": b_hh,
        "char_lstm_dim": H,
        "ew_b": ew_b, "whh_p": whh_p,
    }


def _lstm_last_hidden_ref(char_ids, char_embedding, w_ih, w_hh, b_ih, b_hh):
    """Pure-JAX reference matching PyTorch nn.LSTM semantics (last hidden state)."""
    H = w_hh.shape[1]
    N = char_ids.shape[0]
    x_seq = jnp.take(char_embedding, char_ids.T, axis=0)          # [T, N, Dc]

    def step(carry, x_t):
        h, c = carry
        gates = x_t @ w_ih.T + h @ w_hh.T + b_ih + b_hh
        i = jax.nn.sigmoid(gates[:, 0 * H:1 * H])
        f = jax.nn.sigmoid(gates[:, 1 * H:2 * H])
        g = jnp.tanh(gates[:, 2 * H:3 * H])
        o = jax.nn.sigmoid(gates[:, 3 * H:4 * H])
        c = f * c + i * g
        h = o * jnp.tanh(c)
        return (h, c), None

    init = (jnp.zeros((N, H), jnp.float32), jnp.zeros((N, H), jnp.float32))
    (h, _), _ = lax.scan(step, init, x_seq)
    return h


if __name__ == "__main__":
    key = jax.random.PRNGKey(0)
    B, S, W = 2, 8, 6                      # batch, seq_len, word_len
    word_dim, char_dim, char_lstm_dim = 32, 8, 16
    vocab_size, char_vocab_size = 20, 30

    k_params, k_words, k_chars = jax.random.split(key, 3)
    params = init_params(k_params, vocab_size, char_vocab_size,
                         word_dim, char_dim, char_lstm_dim)

    words = jax.random.randint(k_words, (B, S), 0, vocab_size, dtype=jnp.int32)
    chars = jax.random.randint(k_chars, (B, S, W), 0, char_vocab_size, dtype=jnp.int32)

    out = jax.block_until_ready(word_representation_forward(words, chars, params))
    assert out.shape == (S, B, word_dim + char_lstm_dim), out.shape
    assert out.dtype == jnp.float32

    # Correctness check of the Pallas LSTM against a pure-JAX reference.
    char_ids = chars.reshape(B * S, W)
    h_kernel = jax.block_until_ready(
        char_lstm_last_hidden(char_ids, params["ew_b"], params["whh_p"], char_lstm_dim))
    h_ref = _lstm_last_hidden_ref(char_ids, params["char_embedding"],
                                  params["w_ih"], params["w_hh"],
                                  params["b_ih"], params["b_hh"])
    assert jnp.allclose(h_kernel, h_ref, atol=2e-5), \
        float(jnp.max(jnp.abs(h_kernel - h_ref)))

    print("KERNEL_OK")
</pallas_src>

<mosaic_0001>
module attributes {stable_mosaic.version = 11 : i64} {
  func.func @_char_lstm_kernel(%arg0: i32, %arg1: memref<128x6xi32, #tpu.memory_space<vmem>>, %arg2: memref<30x128xf32, #tpu.memory_space<vmem>>, %arg3: memref<32x128xf32, #tpu.memory_space<vmem>>, %arg4: memref<128x32xf32, #tpu.memory_space<vmem>>, %arg5: memref<6x128x128xf32, #tpu.memory_space<vmem>>) attributes {dimension_semantics = [#tpu.dimension_semantics<parallel>], iteration_bounds = array<i64: 1>, scalar_prefetch = 0 : i64, scratch_operands = 1 : i64, tpu.core_type = #tpu.core_type<tc>, window_params = [{transform_indices = @transform_0, window_bounds = array<i64: 128, 6>}, {pipeline_mode = #tpu.pipeline_mode<synchronous>, transform_indices = @transform_1, window_bounds = array<i64: 30, 128>}, {pipeline_mode = #tpu.pipeline_mode<synchronous>, transform_indices = @transform_2, window_bounds = array<i64: 32, 128>}, {transform_indices = @transform_3, window_bounds = array<i64: 128, 32>}]} {
    %c0 = arith.constant 0 : index
    %c0_0 = arith.constant 0 : index
    %0 = vector.load %arg2[%c0, %c0_0] : memref<30x128xf32, #tpu.memory_space<vmem>>, vector<30x128xf32>
    %1 = tpu.iota {dimensions = array<i32: 1>} : vector<128x30xi32>
    %c0_1 = arith.constant 0 : index
    %c0_2 = arith.constant 0 : index
    %2 = vector.load %arg1[%c0_1, %c0_2] : memref<128x6xi32, #tpu.memory_space<vmem>>, vector<128x1xi32>
    %3 = vector.broadcast %2 : vector<128x1xi32> to vector<128x30xi32>
    %4 = arith.cmpi eq, %1, %3 : vector<128x30xi32>
    %5 = arith.extui %4 : vector<128x30xi1> to vector<128x30xi32>
    %6 = arith.sitofp %5 : vector<128x30xi32> to vector<128x30xf32>
    %cst = arith.constant dense<0.000000e+00> : vector<128x128xf32>
    %7 = tpu.matmul %6, %0, %cst {dimension_numbers = #tpu.dot_dimension_numbers<[1], [0], [0], [1], [0, 0, 1, 1], [], []>} : vector<128x30xf32>, vector<30x128xf32>, vector<128x128xf32> -> vector<128x128xf32>
    %c0_3 = arith.constant 0 : index
    %c0_4 = arith.constant 0 : index
    %c0_5 = arith.constant 0 : index
    %8 = vector.load %arg5[%c0_3, %c0_4, %c0_5] : memref<6x128x128xf32, #tpu.memory_space<vmem>>, vector<1x128x128xf32>
    %9 = vector.shape_cast %8 : vector<1x128x128xf32> to vector<128x128xf32>
    %10 = vector.shape_cast %7 : vector<128x128xf32> to vector<1x128x128xf32>
    tpu.vector_store %arg5[%c0_3, %c0_4, %c0_5], %10 {strides = array<i32>} : memref<6x128x128xf32, #tpu.memory_space<vmem>>, vector<1x128x128xf32>,
    %c0_6 = arith.constant 0 : index
    %c1 = arith.constant 1 : index
    %11 = vector.load %arg1[%c0_6, %c1] : memref<128x6xi32, #tpu.memory_space<vmem>>, vector<128x1xi32>
    %12 = vector.broadcast %11 : vector<128x1xi32> to vector<128x30xi32>
    %13 = arith.cmpi eq, %1, %12 : vector<128x30xi32>
    %14 = arith.extui %13 : vector<128x30xi1> to vector<128x30xi32>
    %15 = arith.sitofp %14 : vector<128x30xi32> to vector<128x30xf32>
    %cst_7 = arith.constant dense<0.000000e+00> : vector<128x128xf32>
    %16 = tpu.matmul %15, %0, %cst_7 {dimension_numbers = #tpu.dot_dimension_numbers<[1], [0], [0], [1], [0, 0, 1, 1], [], []>} : vector<128x30xf32>, vector<30x128xf32>, vector<128x128xf32> -> vector<128x128xf32>
    %c1_8 = arith.constant 1 : index
    %c0_9 = arith.constant 0 : index
    %c0_10 = arith.constant 0 : index
    %17 = vector.load %arg5[%c1_8, %c0_9, %c0_10] : memref<6x128x128xf32, #tpu.memory_space<vmem>>, vector<1x128x128xf32>
    %18 = vector.shape_cast %17 : vector<1x128x128xf32> to vector<128x128xf32>
    %19 = vector.shape_cast %16 : vector<128x128xf32> to vector<1x128x128xf32>
    tpu.vector_store %arg5[%c1_8, %c0_9, %c0_10], %19 {strides = array<i32>} : memref<6x128x128xf32, #tpu.memory_space<vmem>>, vector<1x128x128xf32>,
    %c0_11 = arith.constant 0 : index
    %c2 = arith.constant 2 : index
    %20 = vector.load %arg1[%c0_11, %c2] : memref<128x6xi32, #tpu.memory_space<vmem>>, vector<128x1xi32>
    %21 = vector.broadcast %20 : vector<128x1xi32> to vector<128x30xi32>
    %22 = arith.cmpi eq, %1, %21 : vector<128x30xi32>
    %23 = arith.extui %22 : vector<128x30xi1> to vector<128x30xi32>
    %24 = arith.sitofp %23 : vector<128x30xi32> to vector<128x30xf32>
    %cst_12 = arith.constant dense<0.000000e+00> : vector<128x128xf32>
    %25 = tpu.matmul %24, %0, %cst_12 {dimension_numbers = #tpu.dot_dimension_numbers<[1], [0], [0], [1], [0, 0, 1, 1], [], []>} : vector<128x30xf32>, vector<30x128xf32>, vector<128x128xf32> -> vector<128x128xf32>
    %c2_13 = arith.constant 2 : index
    %c0_14 = arith.constant 0 : index
    %c0_15 = arith.constant 0 : index
    %26 = vector.load %arg5[%c2_13, %c0_14, %c0_15] : memref<6x128x128xf32, #tpu.memory_space<vmem>>, vector<1x128x128xf32>
    %27 = vector.shape_cast %26 : vector<1x128x128xf32> to vector<128x128xf32>
    %28 = vector.shape_cast %25 : vector<128x128xf32> to vector<1x128x128xf32>
    tpu.vector_store %arg5[%c2_13, %c0_14, %c0_15], %28 {strides = array<i32>} : memref<6x128x128xf32, #tpu.memory_space<vmem>>, vector<1x128x128xf32>,
    %c0_16 = arith.constant 0 : index
    %c3 = arith.constant 3 : index
    %29 = vector.load %arg1[%c0_16, %c3] : memref<128x6xi32, #tpu.memory_space<vmem>>, vector<128x1xi32>
    %30 = vector.broadcast %29 : vector<128x1xi32> to vector<128x30xi32>
    %31 = arith.cmpi eq, %1, %30 : vector<128x30xi32>
    %32 = arith.extui %31 : vector<128x30xi1> to vector<128x30xi32>
    %33 = arith.sitofp %32 : vector<128x30xi32> to vector<128x30xf32>
    %cst_17 = arith.constant dense<0.000000e+00> : vector<128x128xf32>
    %34 = tpu.matmul %33, %0, %cst_17 {dimension_numbers = #tpu.dot_dimension_numbers<[1], [0], [0], [1], [0, 0, 1, 1], [], []>} : vector<128x30xf32>, vector<30x128xf32>, vector<128x128xf32> -> vector<128x128xf32>
    %c3_18 = arith.constant 3 : index
    %c0_19 = arith.constant 0 : index
    %c0_20 = arith.constant 0 : index
    %35 = vector.load %arg5[%c3_18, %c0_19, %c0_20] : memref<6x128x128xf32, #tpu.memory_space<vmem>>, vector<1x128x128xf32>
    %36 = vector.shape_cast %35 : vector<1x128x128xf32> to vector<128x128xf32>
    %37 = vector.shape_cast %34 : vector<128x128xf32> to vector<1x128x128xf32>
    tpu.vector_store %arg5[%c3_18, %c0_19, %c0_20], %37 {strides = array<i32>} : memref<6x128x128xf32, #tpu.memory_space<vmem>>, vector<1x128x128xf32>,
    %c0_21 = arith.constant 0 : index
    %c4 = arith.constant 4 : index
    %38 = vector.load %arg1[%c0_21, %c4] : memref<128x6xi32, #tpu.memory_space<vmem>>, vector<128x1xi32>
    %39 = vector.broadcast %38 : vector<128x1xi32> to vector<128x30xi32>
    %40 = arith.cmpi eq, %1, %39 : vector<128x30xi32>
    %41 = arith.extui %40 : vector<128x30xi1> to vector<128x30xi32>
    %42 = arith.sitofp %41 : vector<128x30xi32> to vector<128x30xf32>
    %cst_22 = arith.constant dense<0.000000e+00> : vector<128x128xf32>
    %43 = tpu.matmul %42, %0, %cst_22 {dimension_numbers = #tpu.dot_dimension_numbers<[1], [0], [0], [1], [0, 0, 1, 1], [], []>} : vector<128x30xf32>, vector<30x128xf32>, vector<128x128xf32> -> vector<128x128xf32>
    %c4_23 = arith.constant 4 : index
    %c0_24 = arith.constant 0 : index
    %c0_25 = arith.constant 0 : index
    %44 = vector.load %arg5[%c4_23, %c0_24, %c0_25] : memref<6x128x128xf32, #tpu.memory_space<vmem>>, vector<1x128x128xf32>
    %45 = vector.shape_cast %44 : vector<1x128x128xf32> to vector<128x128xf32>
    %46 = vector.shape_cast %43 : vector<128x128xf32> to vector<1x128x128xf32>
    tpu.vector_store %arg5[%c4_23, %c0_24, %c0_25], %46 {strides = array<i32>} : memref<6x128x128xf32, #tpu.memory_space<vmem>>, vector<1x128x128xf32>,
    %c0_26 = arith.constant 0 : index
    %c5 = arith.constant 5 : index
    %47 = vector.load %arg1[%c0_26, %c5] : memref<128x6xi32, #tpu.memory_space<vmem>>, vector<128x1xi32>
    %48 = vector.broadcast %47 : vector<128x1xi32> to vector<128x30xi32>
    %49 = arith.cmpi eq, %1, %48 : vector<128x30xi32>
    %50 = arith.extui %49 : vector<128x30xi1> to vector<128x30xi32>
    %51 = arith.sitofp %50 : vector<128x30xi32> to vector<128x30xf32>
    %cst_27 = arith.constant dense<0.000000e+00> : vector<128x128xf32>
    %52 = tpu.matmul %51, %0, %cst_27 {dimension_numbers = #tpu.dot_dimension_numbers<[1], [0], [0], [1], [0, 0, 1, 1], [], []>} : vector<128x30xf32>, vector<30x128xf32>, vector<128x128xf32> -> vector<128x128xf32>
    %c5_28 = arith.constant 5 : index
    %c0_29 = arith.constant 0 : index
    %c0_30 = arith.constant 0 : index
    %53 = vector.load %arg5[%c5_28, %c0_29, %c0_30] : memref<6x128x128xf32, #tpu.memory_space<vmem>>, vector<1x128x128xf32>
    %54 = vector.shape_cast %53 : vector<1x128x128xf32> to vector<128x128xf32>
    %55 = vector.shape_cast %52 : vector<128x128xf32> to vector<1x128x128xf32>
    tpu.vector_store %arg5[%c5_28, %c0_29, %c0_30], %55 {strides = array<i32>} : memref<6x128x128xf32, #tpu.memory_space<vmem>>, vector<1x128x128xf32>,
    %c0_31 = arith.constant 0 : index
    %c0_32 = arith.constant 0 : index
    %56 = vector.load %arg3[%c0_31, %c0_32] : memref<32x128xf32, #tpu.memory_space<vmem>>, vector<32x128xf32>
    %cst_33 = arith.constant 0.000000e+00 : f32
    %57 = vector.broadcast %cst_33 : f32 to vector<128x32xf32>
    %cst_34 = arith.constant 0.000000e+00 : f32
    %58 = vector.broadcast %cst_34 : f32 to vector<128x32xf32>
    %c0_i32 = arith.constant 0 : i32
    %59 = arith.index_cast %c0_i32 : i32 to index
    %c0_35 = arith.constant 0 : index
    %c0_36 = arith.constant 0 : index
    %60 = vector.load %arg5[%59, %c0_35, %c0_36] : memref<6x128x128xf32, #tpu.memory_space<vmem>>, vector<1x128x128xf32>
    %61 = vector.shape_cast %60 : vector<1x128x128xf32> to vector<128x128xf32>
    %cst_37 = arith.constant dense<0.000000e+00> : vector<128x128xf32>
    %62 = tpu.matmul %57, %56, %cst_37 {dimension_numbers = #tpu.dot_dimension_numbers<[1], [0], [0], [1], [0, 0, 1, 1], [], []>} : vector<128x32xf32>, vector<32x128xf32>, vector<128x128xf32> -> vector<128x128xf32>
    %63 = arith.addf %61, %62 : vector<128x128xf32>
    %64 = vector.extract_strided_slice %63 {offsets = [0, 0], sizes = [128, 32], strides = [1, 1]} : vector<128x128xf32> to vector<128x32xf32>
    %65 = arith.negf %64 : vector<128x32xf32>
    %66 = math.exp %65 : vector<128x32xf32>
    %cst_38 = arith.constant 1.000000e+00 : f32
    %67 = vector.broadcast %cst_38 : f32 to vector<128x32xf32>
    %68 = arith.addf %67, %66 : vector<128x32xf32>
    %69 = arith.divf %67, %68 : vector<128x32xf32>
    %70 = vector.extract_strided_slice %63 {offsets = [0, 32], sizes = [128, 32], strides = [1, 1]} : vector<128x128xf32> to vector<128x32xf32>
    %71 = arith.negf %70 : vector<128x32xf32>
    %72 = math.exp %71 : vector<128x32xf32>
    %cst_39 = arith.constant 1.000000e+00 : f32
    %73 = vector.broadcast %cst_39 : f32 to vector<128x32xf32>
    %74 = arith.addf %73, %72 : vector<128x32xf32>
    %75 = arith.divf %73, %74 : vector<128x32xf32>
    %76 = vector.extract_strided_slice %63 {offsets = [0, 64], sizes = [128, 32], strides = [1, 1]} : vector<128x128xf32> to vector<128x32xf32>
    %77 = math.tanh %76 : vector<128x32xf32>
    %78 = vector.extract_strided_slice %63 {offsets = [0, 96], sizes = [128, 32], strides = [1, 1]} : vector<128x128xf32> to vector<128x32xf32>
    %79 = arith.negf %78 : vector<128x32xf32>
    %80 = math.exp %79 : vector<128x32xf32>
    %cst_40 = arith.constant 1.000000e+00 : f32
    %81 = vector.broadcast %cst_40 : f32 to vector<128x32xf32>
    %82 = arith.addf %81, %80 : vector<128x32xf32>
    %83 = arith.divf %81, %82 : vector<128x32xf32>
    %84 = arith.mulf %75, %58 : vector<128x32xf32>
    %85 = arith.mulf %69, %77 : vector<128x32xf32>
    %86 = arith.addf %84, %85 : vector<128x32xf32>
    %87 = math.tanh %86 : vector<128x32xf32>
    %88 = arith.mulf %83, %87 : vector<128x32xf32>
    %c1_i32 = arith.constant 1 : i32
    %89 = arith.index_cast %c1_i32 : i32 to index
    %c0_41 = arith.constant 0 : index
    %c0_42 = arith.constant 0 : index
    %90 = vector.load %arg5[%89, %c0_41, %c0_42] : memref<6x128x128xf32, #tpu.memory_space<vmem>>, vector<1x128x128xf32>
    %91 = vector.shape_cast %90 : vector<1x128x128xf32> to vector<128x128xf32>
    %cst_43 = arith.constant dense<0.000000e+00> : vector<128x128xf32>
    %92 = tpu.matmul %88, %56, %cst_43 {dimension_numbers = #tpu.dot_dimension_numbers<[1], [0], [0], [1], [0, 0, 1, 1], [], []>} : vector<128x32xf32>, vector<32x128xf32>, vector<128x128xf32> -> vector<128x128xf32>
    %93 = arith.addf %91, %92 : vector<128x128xf32>
    %94 = vector.extract_strided_slice %93 {offsets = [0, 0], sizes = [128, 32], strides = [1, 1]} : vector<128x128xf32> to vector<128x32xf32>
    %95 = arith.negf %94 : vector<128x32xf32>
    %96 = math.exp %95 : vector<128x32xf32>
    %cst_44 = arith.constant 1.000000e+00 : f32
    %97 = vector.broadcast %cst_44 : f32 to vector<128x32xf32>
    %98 = arith.addf %97, %96 : vector<128x32xf32>
    %99 = arith.divf %97, %98 : vector<128x32xf32>
    %100 = vector.extract_strided_slice %93 {offsets = [0, 32], sizes = [128, 32], strides = [1, 1]} : vector<128x128xf32> to vector<128x32xf32>
    %101 = arith.negf %100 : vector<128x32xf32>
    %102 = math.exp %101 : vector<128x32xf32>
    %cst_45 = arith.constant 1.000000e+00 : f32
    %103 = vector.broadcast %cst_45 : f32 to vector<128x32xf32>
    %104 = arith.addf %103, %102 : vector<128x32xf32>
    %105 = arith.divf %103, %104 : vector<128x32xf32>
    %106 = vector.extract_strided_slice %93 {offsets = [0, 64], sizes = [128, 32], strides = [1, 1]} : vector<128x128xf32> to vector<128x32xf32>
    %107 = math.tanh %106 : vector<128x32xf32>
    %108 = vector.extract_strided_slice %93 {offsets = [0, 96], sizes = [128, 32], strides = [1, 1]} : vector<128x128xf32> to vector<128x32xf32>
    %109 = arith.negf %108 : vector<128x32xf32>
    %110 = math.exp %109 : vector<128x32xf32>
    %cst_46 = arith.constant 1.000000e+00 : f32
    %111 = vector.broadcast %cst_46 : f32 to vector<128x32xf32>
    %112 = arith.addf %111, %110 : vector<128x32xf32>
    %113 = arith.divf %111, %112 : vector<128x32xf32>
    %114 = arith.mulf %105, %86 : vector<128x32xf32>
    %115 = arith.mulf %99, %107 : vector<128x32xf32>
    %116 = arith.addf %114, %115 : vector<128x32xf32>
    %117 = math.tanh %116 : vector<128x32xf32>
    %118 = arith.mulf %113, %117 : vector<128x32xf32>
    %c2_i32 = arith.constant 2 : i32
    %119 = arith.index_cast %c2_i32 : i32 to index
    %c0_47 = arith.constant 0 : index
    %c0_48 = arith.constant 0 : index
    %120 = vector.load %arg5[%119, %c0_47, %c0_48] : memref<6x128x128xf32, #tpu.memory_space<vmem>>, vector<1x128x128xf32>
    %121 = vector.shape_cast %120 : vector<1x128x128xf32> to vector<128x128xf32>
    %cst_49 = arith.constant dense<0.000000e+00> : vector<128x128xf32>
    %122 = tpu.matmul %118, %56, %cst_49 {dimension_numbers = #tpu.dot_dimension_numbers<[1], [0], [0], [1], [0, 0, 1, 1], [], []>} : vector<128x32xf32>, vector<32x128xf32>, vector<128x128xf32> -> vector<128x128xf32>
    %123 = arith.addf %121, %122 : vector<128x128xf32>
    %124 = vector.extract_strided_slice %123 {offsets = [0, 0], sizes = [128, 32], strides = [1, 1]} : vector<128x128xf32> to vector<128x32xf32>
    %125 = arith.negf %124 : vector<128x32xf32>
    %126 = math.exp %125 : vector<128x32xf32>
    %cst_50 = arith.constant 1.000000e+00 : f32
    %127 = vector.broadcast %cst_50 : f32 to vector<128x32xf32>
    %128 = arith.addf %127, %126 : vector<128x32xf32>
    %129 = arith.divf %127, %128 : vector<128x32xf32>
    %130 = vector.extract_strided_slice %123 {offsets = [0, 32], sizes = [128, 32], strides = [1, 1]} : vector<128x128xf32> to vector<128x32xf32>
    %131 = arith.negf %130 : vector<128x32xf32>
    %132 = math.exp %131 : vector<128x32xf32>
    %cst_51 = arith.constant 1.000000e+00 : f32
    %133 = vector.broadcast %cst_51 : f32 to vector<128x32xf32>
    %134 = arith.addf %133, %132 : vector<128x32xf32>
    %135 = arith.divf %133, %134 : vector<128x32xf32>
    %136 = vector.extract_strided_slice %123 {offsets = [0, 64], sizes = [128, 32], strides = [1, 1]} : vector<128x128xf32> to vector<128x32xf32>
    %137 = math.tanh %136 : vector<128x32xf32>
    %138 = vector.extract_strided_slice %123 {offsets = [0, 96], sizes = [128, 32], strides = [1, 1]} : vector<128x128xf32> to vector<128x32xf32>
    %139 = arith.negf %138 : vector<128x32xf32>
    %140 = math.exp %139 : vector<128x32xf32>
    %cst_52 = arith.constant 1.000000e+00 : f32
    %141 = vector.broadcast %cst_52 : f32 to vector<128x32xf32>
    %142 = arith.addf %141, %140 : vector<128x32xf32>
    %143 = arith.divf %141, %142 : vector<128x32xf32>
    %144 = arith.mulf %135, %116 : vector<128x32xf32>
    %145 = arith.mulf %129, %137 : vector<128x32xf32>
    %146 = arith.addf %144, %145 : vector<128x32xf32>
    %147 = math.tanh %146 : vector<128x32xf32>
    %148 = arith.mulf %143, %147 : vector<128x32xf32>
    %c3_i32 = arith.constant 3 : i32
    %149 = arith.index_cast %c3_i32 : i32 to index
    %c0_53 = arith.constant 0 : index
    %c0_54 = arith.constant 0 : index
    %150 = vector.load %arg5[%149, %c0_53, %c0_54] : memref<6x128x128xf32, #tpu.memory_space<vmem>>, vector<1x128x128xf32>
    %151 = vector.shape_cast %150 : vector<1x128x128xf32> to vector<128x128xf32>
    %cst_55 = arith.constant dense<0.000000e+00> : vector<128x128xf32>
    %152 = tpu.matmul %148, %56, %cst_55 {dimension_numbers = #tpu.dot_dimension_numbers<[1], [0], [0], [1], [0, 0, 1, 1], [], []>} : vector<128x32xf32>, vector<32x128xf32>, vector<128x128xf32> -> vector<128x128xf32>
    %153 = arith.addf %151, %152 : vector<128x128xf32>
    %154 = vector.extract_strided_slice %153 {offsets = [0, 0], sizes = [128, 32], strides = [1, 1]} : vector<128x128xf32> to vector<128x32xf32>
    %155 = arith.negf %154 : vector<128x32xf32>
    %156 = math.exp %155 : vector<128x32xf32>
    %cst_56 = arith.constant 1.000000e+00 : f32
    %157 = vector.broadcast %cst_56 : f32 to vector<128x32xf32>
    %158 = arith.addf %157, %156 : vector<128x32xf32>
    %159 = arith.divf %157, %158 : vector<128x32xf32>
    %160 = vector.extract_strided_slice %153 {offsets = [0, 32], sizes = [128, 32], strides = [1, 1]} : vector<128x128xf32> to vector<128x32xf32>
    %161 = arith.negf %160 : vector<128x32xf32>
    %162 = math.exp %161 : vector<128x32xf32>
    %cst_57 = arith.constant 1.000000e+00 : f32
    %163 = vector.broadcast %cst_57 : f32 to vector<128x32xf32>
    %164 = arith.addf %163, %162 : vector<128x32xf32>
    %165 = arith.divf %163, %164 : vector<128x32xf32>
    %166 = vector.extract_strided_slice %153 {offsets = [0, 64], sizes = [128, 32], strides = [1, 1]} : vector<128x128xf32> to vector<128x32xf32>
    %167 = math.tanh %166 : vector<128x32xf32>
    %168 = vector.extract_strided_slice %153 {offsets = [0, 96], sizes = [128, 32], strides = [1, 1]} : vector<128x128xf32> to vector<128x32xf32>
    %169 = arith.negf %168 : vector<128x32xf32>
    %170 = math.exp %169 : vector<128x32xf32>
    %cst_58 = arith.constant 1.000000e+00 : f32
    %171 = vector.broadcast %cst_58 : f32 to vector<128x32xf32>
    %172 = arith.addf %171, %170 : vector<128x32xf32>
    %173 = arith.divf %171, %172 : vector<128x32xf32>
    %174 = arith.mulf %165, %146 : vector<128x32xf32>
    %175 = arith.mulf %159, %167 : vector<128x32xf32>
    %176 = arith.addf %174, %175 : vector<128x32xf32>
    %177 = math.tanh %176 : vector<128x32xf32>
    %178 = arith.mulf %173, %177 : vector<128x32xf32>
    %c4_i32 = arith.constant 4 : i32
    %179 = arith.index_cast %c4_i32 : i32 to index
    %c0_59 = arith.constant 0 : index
    %c0_60 = arith.constant 0 : index
    %180 = vector.load %arg5[%179, %c0_59, %c0_60] : memref<6x128x128xf32, #tpu.memory_space<vmem>>, vector<1x128x128xf32>
    %181 = vector.shape_cast %180 : vector<1x128x128xf32> to vector<128x128xf32>
    %cst_61 = arith.constant dense<0.000000e+00> : vector<128x128xf32>
    %182 = tpu.matmul %178, %56, %cst_61 {dimension_numbers = #tpu.dot_dimension_numbers<[1], [0], [0], [1], [0, 0, 1, 1], [], []>} : vector<128x32xf32>, vector<32x128xf32>, vector<128x128xf32> -> vector<128x128xf32>
    %183 = arith.addf %181, %182 : vector<128x128xf32>
    %184 = vector.extract_strided_slice %183 {offsets = [0, 0], sizes = [128, 32], strides = [1, 1]} : vector<128x128xf32> to vector<128x32xf32>
    %185 = arith.negf %184 : vector<128x32xf32>
    %186 = math.exp %185 : vector<128x32xf32>
    %cst_62 = arith.constant 1.000000e+00 : f32
    %187 = vector.broadcast %cst_62 : f32 to vector<128x32xf32>
    %188 = arith.addf %187, %186 : vector<128x32xf32>
    %189 = arith.divf %187, %188 : vector<128x32xf32>
    %190 = vector.extract_strided_slice %183 {offsets = [0, 32], sizes = [128, 32], strides = [1, 1]} : vector<128x128xf32> to vector<128x32xf32>
    %191 = arith.negf %190 : vector<128x32xf32>
    %192 = math.exp %191 : vector<128x32xf32>
    %cst_63 = arith.constant 1.000000e+00 : f32
    %193 = vector.broadcast %cst_63 : f32 to vector<128x32xf32>
    %194 = arith.addf %193, %192 : vector<128x32xf32>
    %195 = arith.divf %193, %194 : vector<128x32xf32>
    %196 = vector.extract_strided_slice %183 {offsets = [0, 64], sizes = [128, 32], strides = [1, 1]} : vector<128x128xf32> to vector<128x32xf32>
    %197 = math.tanh %196 : vector<128x32xf32>
    %198 = vector.extract_strided_slice %183 {offsets = [0, 96], sizes = [128, 32], strides = [1, 1]} : vector<128x128xf32> to vector<128x32xf32>
    %199 = arith.negf %198 : vector<128x32xf32>
    %200 = math.exp %199 : vector<128x32xf32>
    %cst_64 = arith.constant 1.000000e+00 : f32
    %201 = vector.broadcast %cst_64 : f32 to vector<128x32xf32>
    %202 = arith.addf %201, %200 : vector<128x32xf32>
    %203 = arith.divf %201, %202 : vector<128x32xf32>
    %204 = arith.mulf %195, %176 : vector<128x32xf32>
    %205 = arith.mulf %189, %197 : vector<128x32xf32>
    %206 = arith.addf %204, %205 : vector<128x32xf32>
    %207 = math.tanh %206 : vector<128x32xf32>
    %208 = arith.mulf %203, %207 : vector<128x32xf32>
    %c5_i32 = arith.constant 5 : i32
    %209 = arith.index_cast %c5_i32 : i32 to index
    %c0_65 = arith.constant 0 : index
    %c0_66 = arith.constant 0 : index
    %210 = vector.load %arg5[%209, %c0_65, %c0_66] : memref<6x128x128xf32, #tpu.memory_space<vmem>>, vector<1x128x128xf32>
    %211 = vector.shape_cast %210 : vector<1x128x128xf32> to vector<128x128xf32>
    %cst_67 = arith.constant dense<0.000000e+00> : vector<128x128xf32>
    %212 = tpu.matmul %208, %56, %cst_67 {dimension_numbers = #tpu.dot_dimension_numbers<[1], [0], [0], [1], [0, 0, 1, 1], [], []>} : vector<128x32xf32>, vector<32x128xf32>, vector<128x128xf32> -> vector<128x128xf32>
    %213 = arith.addf %211, %212 : vector<128x128xf32>
    %214 = vector.extract_strided_slice %213 {offsets = [0, 0], sizes = [128, 32], strides = [1, 1]} : vector<128x128xf32> to vector<128x32xf32>
    %215 = arith.negf %214 : vector<128x32xf32>
    %216 = math.exp %215 : vector<128x32xf32>
    %cst_68 = arith.constant 1.000000e+00 : f32
    %217 = vector.broadcast %cst_68 : f32 to vector<128x32xf32>
    %218 = arith.addf %217, %216 : vector<128x32xf32>
    %219 = arith.divf %217, %218 : vector<128x32xf32>
    %220 = vector.extract_strided_slice %213 {offsets = [0, 32], sizes = [128, 32], strides = [1, 1]} : vector<128x128xf32> to vector<128x32xf32>
    %221 = arith.negf %220 : vector<128x32xf32>
    %222 = math.exp %221 : vector<128x32xf32>
    %cst_69 = arith.constant 1.000000e+00 : f32
    %223 = vector.broadcast %cst_69 : f32 to vector<128x32xf32>
    %224 = arith.addf %223, %222 : vector<128x32xf32>
    %225 = arith.divf %223, %224 : vector<128x32xf32>
    %226 = vector.extract_strided_slice %213 {offsets = [0, 64], sizes = [128, 32], strides = [1, 1]} : vector<128x128xf32> to vector<128x32xf32>
    %227 = math.tanh %226 : vector<128x32xf32>
    %228 = vector.extract_strided_slice %213 {offsets = [0, 96], sizes = [128, 32], strides = [1, 1]} : vector<128x128xf32> to vector<128x32xf32>
    %229 = arith.negf %228 : vector<128x32xf32>
    %230 = math.exp %229 : vector<128x32xf32>
    %cst_70 = arith.constant 1.000000e+00 : f32
    %231 = vector.broadcast %cst_70 : f32 to vector<128x32xf32>
    %232 = arith.addf %231, %230 : vector<128x32xf32>
    %233 = arith.divf %231, %232 : vector<128x32xf32>
    %234 = arith.mulf %225, %206 : vector<128x32xf32>
    %235 = arith.mulf %219, %227 : vector<128x32xf32>
    %236 = arith.addf %234, %235 : vector<128x32xf32>
    %237 = math.tanh %236 : vector<128x32xf32>
    %238 = arith.mulf %233, %237 : vector<128x32xf32>
    %c6_i32 = arith.constant 6 : i32
    %c0_71 = arith.constant 0 : index
    %c0_72 = arith.constant 0 : index
    %239 = vector.load %arg4[%c0_71, %c0_72] : memref<128x32xf32, #tpu.memory_space<vmem>>, vector<128x32xf32>
    tpu.vector_store %arg4[%c0_71, %c0_72], %238 {strides = array<i32>} : memref<128x32xf32, #tpu.memory_space<vmem>>, vector<128x32xf32>,
    return
  }
  func.func @transform_0(%arg0: i32) -> (i32, i32) {
    %c0_i32 = arith.constant 0 : i32
    %c0_i32_0 = arith.constant 0 : i32
    return %arg0, %c0_i32 : i32, i32
  }
  func.func @transform_1(%arg0: i32) -> (i32, i32) {
    %c0_i32 = arith.constant 0 : i32
    %c0_i32_0 = arith.constant 0 : i32
    %c0_i32_1 = arith.constant 0 : i32
    return %c0_i32, %c0_i32_0 : i32, i32
  }
  func.func @transform_2(%arg0: i32) -> (i32, i32) {
    %c0_i32 = arith.constant 0 : i32
    %c0_i32_0 = arith.constant 0 : i32
    %c0_i32_1 = arith.constant 0 : i32
    return %c0_i32, %c0_i32_0 : i32, i32
  }
  func.func @transform_3(%arg0: i32) -> (i32, i32) {
    %c0_i32 = arith.constant 0 : i32
    %c0_i32_0 = arith.constant 0 : i32
    return %arg0, %c0_i32 : i32, i32
  }
}

</mosaic_0001>

<llo_original>
// kernel: tpu_custom_call.1
$region0: #{tpu_custom_call.1}
  #allocation0 [shape = 'u32[]', space=smem, size = 0x4, offset = 0x4, fixed_abs, tag = 'smem constant byte address 0x4 - core index']
  #allocation1 [shape = 'u32[144,128]{1,0:T(1,128)}', space=vmem, size = 0x12000, scoped, tag = 'internal scratch']
  #allocation2 [shape = 'f32[6,128,128]{2,1,0:T(8,128)}', space=vmem, size = 0x60000, scoped, tag = 'scratch operand']
  %s0 = inlined_call_operand.vmem [shape: s32[128,6], index: 0, kind: input, shape index: {}]
  %s1 = inlined_call_operand.vmem [shape: f32[30,128], index: 1, kind: input, shape index: {}]
  %s2 = inlined_call_operand.vmem [shape: f32[32,128], index: 2, kind: input, shape index: {}]
  %s3 = inlined_call_operand.vmem [shape: f32[128,32], index: 3, kind: output, shape index: {}]
  %s4 = sld [smem:[#allocation0]]
  $region22: #{tpu_custom_call.1} parent=0
    _
  %s6 = ssub.s32 1, %s4
  %s7 = scalar_select 0, %s6, %s4
  // Predicated region
  $region2: #{tpu_custom_call.1} parent=0 // pred_check
    _
  $region3: #{tpu_custom_call.1} parent=0 // pred_check_branch
    %9 = sbr.rel (0) target = $region5
  $region4: #{tpu_custom_call.1} parent=0 // pred_region
    _
  $region5: #{tpu_custom_call.1} parent=0 // pred_fallthru
    _
  // Predicated region
  $region6: #{tpu_custom_call.1} parent=0 // pred_check
    _
  $region7: #{tpu_custom_call.1} parent=0 // pred_check_branch
    %11 = sbr.rel (0) target = $region9
  $region8: #{tpu_custom_call.1} parent=0 // pred_region
    _
  $region9: #{tpu_custom_call.1} parent=0 // pred_fallthru
    _
  // Predicated region
  $region10: #{tpu_custom_call.1} parent=0 // pred_check
    _
  $region11: #{tpu_custom_call.1} parent=0 // pred_check_branch
    %13 = sbr.rel (0) target = $region13
  $region12: #{tpu_custom_call.1} parent=0 // pred_region
    _
  $region13: #{tpu_custom_call.1} parent=0 // pred_fallthru
    _
  %v14 = vld [vmem:[%s1] sm:$0xff]
  %v15 = vld [vmem:[%s1 + $0x8] sm:$0xff]
  %v16 = vld [vmem:[%s1 + $0x10] sm:$0xff]
  %v17 = vld [vmem:[%s1 + $0x18] sm:$0x3f]
  %v18 = vlaneseq
  %v19 = vand.u32 %v18, 127
  %v20 = vld [vmem:[%s0] sm:$0xff]
  %v21 = vld [vmem:[%s0 + $0x8] sm:$0xff]
  %v22 = vld [vmem:[%s0 + $0x10] sm:$0xff]
  %v23 = vld [vmem:[%s0 + $0x18] sm:$0xff]
  %v24 = vld [vmem:[%s0 + $0x20] sm:$0xff]
  %v25 = vld [vmem:[%s0 + $0x28] sm:$0xff]
  %v26 = vld [vmem:[%s0 + $0x30] sm:$0xff]
  %v27 = vld [vmem:[%s0 + $0x38] sm:$0xff]
  %v28 = vld [vmem:[%s0 + $0x40] sm:$0xff]
  %v29 = vld [vmem:[%s0 + $0x48] sm:$0xff]
  %v30 = vld [vmem:[%s0 + $0x50] sm:$0xff]
  %v31 = vld [vmem:[%s0 + $0x58] sm:$0xff]
  %v32 = vld [vmem:[%s0 + $0x60] sm:$0xff]
  %v33 = vld [vmem:[%s0 + $0x68] sm:$0xff]
  %v34 = vld [vmem:[%s0 + $0x70] sm:$0xff]
  %v35 = vld [vmem:[%s0 + $0x78] sm:$0xff]
  %36 = vset.pattern.permute.xlu0 0
  %37 = vperm.xlu0 %36, %v20
  %v38 = vpop.permute.xlu0 %37
  %39 = vset.pattern.permute.xlu0 0
  %40 = vperm.xlu0 %39, %v21
  %v41 = vpop.permute.xlu0 %40
  %42 = vset.pattern.permute.xlu0 0
  %43 = vperm.xlu0 %42, %v22
  %v44 = vpop.permute.xlu0 %43
  %45 = vset.pattern.permute.xlu0 0
  %46 = vperm.xlu0 %45, %v23
  %v47 = vpop.permute.xlu0 %46
  %48 = vset.pattern.permute.xlu0 0
  %49 = vperm.xlu0 %48, %v24
  %v50 = vpop.permute.xlu0 %49
  %51 = vset.pattern.permute.xlu0 0
  %52 = vperm.xlu0 %51, %v25
  %v53 = vpop.permute.xlu0 %52
  %54 = vset.pattern.permute.xlu0 0
  %55 = vperm.xlu0 %54, %v26
  %v56 = vpop.permute.xlu0 %55
  %57 = vset.pattern.permute.xlu0 0
  %58 = vperm.xlu0 %57, %v27
  %v59 = vpop.permute.xlu0 %58
  %60 = vset.pattern.permute.xlu0 0
  %61 = vperm.xlu0 %60, %v28
  %v62 = vpop.permute.xlu0 %61
  %63 = vset.pattern.permute.xlu0 0
  %64 = vperm.xlu0 %63, %v29
  %v65 = vpop.permute.xlu0 %64
  %66 = vset.pattern.permute.xlu0 0
  %67 = vperm.xlu0 %66, %v30
  %v68 = vpop.permute.xlu0 %67
  %69 = vset.pattern.permute.xlu0 0
  %70 = vperm.xlu0 %69, %v31
  %v71 = vpop.permute.xlu0 %70
  %72 = vset.pattern.permute.xlu0 0
  %73 = vperm.xlu0 %72, %v32
  %v74 = vpop.permute.xlu0 %73
  %75 = vset.pattern.permute.xlu0 0
  %76 = vperm.xlu0 %75, %v33
  %v77 = vpop.permute.xlu0 %76
  %78 = vset.pattern.permute.xlu0 0
  %79 = vperm.xlu0 %78, %v34
  %v80 = vpop.permute.xlu0 %79
  %81 = vset.pattern.permute.xlu0 0
  %82 = vperm.xlu0 %81, %v35
  %v83 = vpop.permute.xlu0 %82
  %vm84 = vcmp.eq.s32.totalorder %v19, %v38
  %vm85 = vcmp.eq.s32.totalorder %v19, %v41
  %vm86 = vcmp.eq.s32.totalorder %v19, %v44
  %vm87 = vcmp.eq.s32.totalorder %v19, %v47
  %vm88 = vcmp.eq.s32.totalorder %v19, %v50
  %vm89 = vcmp.eq.s32.totalorder %v19, %v53
  %vm90 = vcmp.eq.s32.totalorder %v19, %v56
  %vm91 = vcmp.eq.s32.totalorder %v19, %v59
  %vm92 = vcmp.eq.s32.totalorder %v19, %v62
  %vm93 = vcmp.eq.s32.totalorder %v19, %v65
  %vm94 = vcmp.eq.s32.totalorder %v19, %v68
  %vm95 = vcmp.eq.s32.totalorder %v19, %v71
  %vm96 = vcmp.eq.s32.totalorder %v19, %v74
  %vm97 = vcmp.eq.s32.totalorder %v19, %v77
  %vm98 = vcmp.eq.s32.totalorder %v19, %v80
  %vm99 = vcmp.eq.s32.totalorder %v19, %v83
  %v100 = vsel %vm84, 1, 0
  %v101 = vsel %vm85, 1, 0
  %v102 = vsel %vm86, 1, 0
  %v103 = vsel %vm87, 1, 0
  %v104 = vsel %vm88, 1, 0
  %v105 = vsel %vm89, 1, 0
  %v106 = vsel %vm90, 1, 0
  %v107 = vsel %vm91, 1, 0
  %v108 = vsel %vm92, 1, 0
  %v109 = vsel %vm93, 1, 0
  %v110 = vsel %vm94, 1, 0
  %v111 = vsel %vm95, 1, 0
  %v112 = vsel %vm96, 1, 0
  %v113 = vsel %vm97, 1, 0
  %v114 = vsel %vm98, 1, 0
  %v115 = vsel %vm99, 1, 0
  %v116 = vcvt.s32.f32 %v100
  %v117 = vcvt.s32.f32 %v101
  %v118 = vcvt.s32.f32 %v102
  %v119 = vcvt.s32.f32 %v103
  %v120 = vcvt.s32.f32 %v104
  %v121 = vcvt.s32.f32 %v105
  %v122 = vcvt.s32.f32 %v106
  %v123 = vcvt.s32.f32 %v107
  %v124 = vcvt.s32.f32 %v108
  %v125 = vcvt.s32.f32 %v109
  %v126 = vcvt.s32.f32 %v110
  %v127 = vcvt.s32.f32 %v111
  %v128 = vcvt.s32.f32 %v112
  %v129 = vcvt.s32.f32 %v113
  %v130 = vcvt.s32.f32 %v114
  %v131 = vcvt.s32.f32 %v115
  %vm132 = vcmask 244736
  %v134 = vsel %vm132, %v116, 0
  %v137 = vsel %vm132, %v117, 0
  %v140 = vsel %vm132, %v118, 0
  %v143 = vsel %vm132, %v119, 0
  %v146 = vsel %vm132, %v120, 0
  %v149 = vsel %vm132, %v121, 0
  %v152 = vsel %vm132, %v122, 0
  %v155 = vsel %vm132, %v123, 0
  %v158 = vsel %vm132, %v124, 0
  %v161 = vsel %vm132, %v125, 0
  %v164 = vsel %vm132, %v126, 0
  %v167 = vsel %vm132, %v127, 0
  %v170 = vsel %vm132, %v128, 0
  %v173 = vsel %vm132, %v129, 0
  %v176 = vsel %vm132, %v130, 0
  %v179 = vsel %vm132, %v131, 0
  %vm181 = vcmask 1045504
  %v183 = vsel %vm181, %v17, 0
  %185 = vmatprep.subr.mxu0 0.0
  %186 = vmatpush1.msra.mxu0 %v14
  %187 = vmatprep.subr.mxu0 0.0
  %188 = vmatpush1.msra.mxu0 %v15
  %189 = vmatprep.subr.mxu0 0.0
  %190 = vmatpush1.msra.mxu0 %v16
  %191 = vmatprep.subr.mxu0 0.0
  %192 = vmatpush1.msra.mxu0 %v183
  %193 = vmatprep.subr.mxu0 0.0
  %194 = vmatpush1.msra.mxu0 0.0
  %195 = vmatprep.subr.mxu0 0.0
  %196 = vmatpush1.msra.mxu0 0.0
  %197 = vmatprep.subr.mxu0 0.0
  %198 = vmatpush1.msra.mxu0 0.0
  %199 = vmatprep.subr.mxu0 0.0
  %200 = vmatpush1.msra.mxu0 0.0
  %201 = vmatprep.subr.mxu0 0.0
  %202 = vmatpush1.msra.mxu0 0.0
  %203 = vmatprep.subr.mxu0 0.0
  %204 = vmatpush1.msra.mxu0 0.0
  %205 = vmatprep.subr.mxu0 0.0
  %206 = vmatpush1.msra.mxu0 0.0
  %207 = vmatprep.subr.mxu0 0.0
  %208 = vmatpush1.msra.mxu0 0.0
  %209 = vmatprep.subr.mxu0 0.0
  %210 = vmatpush1.msra.mxu0 0.0
  %211 = vmatprep.subr.mxu0 0.0
  %212 = vmatpush1.msra.mxu0 0.0
  %213 = vmatprep.subr.mxu0 0.0
  %214 = vmatpush1.msra.mxu0 0.0
  %215 = vmatprep.subr.mxu0 0.0
  %216 = vmatpush1.msra.mxu0 0.0
  %217 = vmatprep.subr.mxu0 0.0
  %218 = vmatpush1.msra.mxu0 0.0
  %219 = vmatprep.subr.mxu0 0.0
  %220 = vmatpush1.msra.mxu0 0.0
  %221 = vmatprep.subr.mxu0 0.0
  %222 = vmatpush1.msra.mxu0 0.0
  %223 = vmatprep.subr.mxu0 0.0
  %224 = vmatpush1.msra.mxu0 0.0
  %225 = vmatprep.subr.mxu0 0.0
  %226 = vmatpush1.msra.mxu0 0.0
  %227 = vmatprep.subr.mxu0 0.0
  %228 = vmatpush1.msra.mxu0 0.0
  %229 = vmatprep.subr.mxu0 0.0
  %230 = vmatpush1.msra.mxu0 0.0
  %231 = vmatprep.subr.mxu0 0.0
  %232 = vmatpush1.msra.mxu0 0.0
  %233 = vmatprep.subr.mxu0 0.0
  %234 = vmatpush1.msra.mxu0 0.0
  %235 = vmatprep.subr.mxu0 0.0
  %236 = vmatpush1.msra.mxu0 0.0
  %237 = vmatprep.subr.mxu0 0.0
  %238 = vmatpush1.msra.mxu0 0.0
  %239 = vmatprep.subr.mxu0 0.0
  %240 = vmatpush1.msra.mxu0 0.0
  %241 = vmatprep.subr.mxu0 0.0
  %242 = vmatpush1.msra.mxu0 0.0
  %243 = vmatprep.subr.mxu0 0.0
  %244 = vmatpush1.msra.mxu0 0.0
  %245 = vmatprep.subr.mxu0 0.0
  %246 = vmatpush1.msra.mxu0 0.0
  %247 = vmatprep.subr.mxu0 0.0
  %248 = vmatpush1.msra.mxu0 0.0
  %249 = vmatprep.mubr.f32.mxu0 0.0
  %250 = vmatmul.mubr.f32.gmra.mrb[0].mxu0 %v134
  %v251 = vpop.f32.mrb[0].mxu0
  %v252 = vadd.f32 0.0, %v251
  %v253 = vpop.f32.mrb[0].mxu0
  %254 = vmatprep.mubr.f32.mxu0 0.0
  %255 = vmatmul.mubr.f32.gmra.mrb[0].mxu0 %v137
  %v256 = vpop.f32.mrb[0].mxu0
  %v257 = vadd.f32 0.0, %v256
  %v258 = vpop.f32.mrb[0].mxu0
  %259 = vmatprep.mubr.f32.mxu0 0.0
  %260 = vmatmul.mubr.f32.gmra.mrb[0].mxu0 %v140
  %v261 = vpop.f32.mrb[0].mxu0
  %v262 = vadd.f32 0.0, %v261
  %v263 = vpop.f32.mrb[0].mxu0
  %264 = vmatprep.mubr.f32.mxu0 0.0
  %265 = vmatmul.mubr.f32.gmra.mrb[0].mxu0 %v143
  %v266 = vpop.f32.mrb[0].mxu0
  %v267 = vadd.f32 0.0, %v266
  %v268 = vpop.f32.mrb[0].mxu0
  %269 = vmatprep.mubr.f32.mxu0 0.0
  %270 = vmatmul.mubr.f32.gmra.mrb[0].mxu0 %v146
  %v271 = vpop.f32.mrb[0].mxu0
  %v272 = vadd.f32 0.0, %v271
  %v273 = vpop.f32.mrb[0].mxu0
  %274 = vmatprep.mubr.f32.mxu0 0.0
  %275 = vmatmul.mubr.f32.gmra.mrb[0].mxu0 %v149
  %v276 = vpop.f32.mrb[0].mxu0
  %v277 = vadd.f32 0.0, %v276
  %v278 = vpop.f32.mrb[0].mxu0
  %279 = vmatprep.mubr.f32.mxu0 0.0
  %280 = vmatmul.mubr.f32.gmra.mrb[0].mxu0 %v152
  %v281 = vpop.f32.mrb[0].mxu0
  %v282 = vadd.f32 0.0, %v281
  %v283 = vpop.f32.mrb[0].mxu0
  %284 = vmatprep.mubr.f32.mxu0 0.0
  %285 = vmatmul.mubr.f32.gmra.mrb[0].mxu0 %v155
  %v286 = vpop.f32.mrb[0].mxu0
  %v287 = vadd.f32 0.0, %v286
  %v288 = vpop.f32.mrb[0].mxu0
  %289 = vmatprep.mubr.f32.mxu0 0.0
  %290 = vmatmul.mubr.f32.gmra.mrb[0].mxu0 %v158
  %v291 = vpop.f32.mrb[0].mxu0
  %v292 = vadd.f32 0.0, %v291
  %v293 = vpop.f32.mrb[0].mxu0
  %294 = vmatprep.mubr.f32.mxu0 0.0
  %295 = vmatmul.mubr.f32.gmra.mrb[0].mxu0 %v161
  %v296 = vpop.f32.mrb[0].mxu0
  %v297 = vadd.f32 0.0, %v296
  %v298 = vpop.f32.mrb[0].mxu0
  %299 = vmatprep.mubr.f32.mxu0 0.0
  %300 = vmatmul.mubr.f32.gmra.mrb[0].mxu0 %v164
  %v301 = vpop.f32.mrb[0].mxu0
  %v302 = vadd.f32 0.0, %v301
  %v303 = vpop.f32.mrb[0].mxu0
  %304 = vmatprep.mubr.f32.mxu0 0.0
  %305 = vmatmul.mubr.f32.gmra.mrb[0].mxu0 %v167
  %v306 = vpop.f32.mrb[0].mxu0
  %v307 = vadd.f32 0.0, %v306
  %v308 = vpop.f32.mrb[0].mxu0
  %309 = vmatprep.mubr.f32.mxu0 0.0
  %310 = vmatmul.mubr.f32.gmra.mrb[0].mxu0 %v170
  %v311 = vpop.f32.mrb[0].mxu0
  %v312 = vadd.f32 0.0, %v311
  %v313 = vpop.f32.mrb[0].mxu0
  %314 = vmatprep.mubr.f32.mxu0 0.0
  %315 = vmatmul.mubr.f32.gmra.mrb[0].mxu0 %v173
  %v316 = vpop.f32.mrb[0].mxu0
  %v317 = vadd.f32 0.0, %v316
  %v318 = vpop.f32.mrb[0].mxu0
  %319 = vmatprep.mubr.f32.mxu0 0.0
  %320 = vmatmul.mubr.f32.gmra.mrb[0].mxu0 %v176
  %v321 = vpop.f32.mrb[0].mxu0
  %v322 = vadd.f32 0.0, %v321
  %v323 = vpop.f32.mrb[0].mxu0
  %324 = vmatprep.mubr.f32.mxu0 0.0
  %325 = vmatmul.mubr.f32.gmra.mrb[0].mxu0 %v179
  %v326 = vpop.f32.mrb[0].mxu0
  %v327 = vadd.f32 0.0, %v326
  %v328 = vpop.f32.mrb[0].mxu0
  %329 = vdwg.mxu0
  %330 = vst [vmem:[#allocation2] sm:$0xff] %v252
  %331 = vst [vmem:[#allocation2 + $0x8] sm:$0xff] %v257
  %332 = vst [vmem:[#allocation2 + $0x10] sm:$0xff] %v262
  %333 = vst [vmem:[#allocation2 + $0x18] sm:$0xff] %v267
  %334 = vst [vmem:[#allocation2 + $0x20] sm:$0xff] %v272
  %335 = vst [vmem:[#allocation2 + $0x28] sm:$0xff] %v277
  %336 = vst [vmem:[#allocation2 + $0x30] sm:$0xff] %v282
  %337 = vst [vmem:[#allocation2 + $0x38] sm:$0xff] %v287
  %338 = vst [vmem:[#allocation2 + $0x40] sm:$0xff] %v292
  %339 = vst [vmem:[#allocation2 + $0x48] sm:$0xff] %v297
  %340 = vst [vmem:[#allocation2 + $0x50] sm:$0xff] %v302
  %341 = vst [vmem:[#allocation2 + $0x58] sm:$0xff] %v307
  %342 = vst [vmem:[#allocation2 + $0x60] sm:$0xff] %v312
  %343 = vst [vmem:[#allocation2 + $0x68] sm:$0xff] %v317
  %344 = vst [vmem:[#allocation2 + $0x70] sm:$0xff] %v322
  %345 = vst [vmem:[#allocation2 + $0x78] sm:$0xff] %v327
  %v346 = vld [vmem:[%s0] sm:$0xff]
  %v347 = vld [vmem:[%s0 + $0x8] sm:$0xff]
  %v348 = vld [vmem:[%s0 + $0x10] sm:$0xff]
  %v349 = vld [vmem:[%s0 + $0x18] sm:$0xff]
  %v350 = vld [vmem:[%s0 + $0x20] sm:$0xff]
  %v351 = vld [vmem:[%s0 + $0x28] sm:$0xff]
  %v352 = vld [vmem:[%s0 + $0x30] sm:$0xff]
  %v353 = vld [vmem:[%s0 + $0x38] sm:$0xff]
  %v354 = vld [vmem:[%s0 + $0x40] sm:$0xff]
  %v355 = vld [vmem:[%s0 + $0x48] sm:$0xff]
  %v356 = vld [vmem:[%s0 + $0x50] sm:$0xff]
  %v357 = vld [vmem:[%s0 + $0x58] sm:$0xff]
  %v358 = vld [vmem:[%s0 + $0x60] sm:$0xff]
  %v359 = vld [vmem:[%s0 + $0x68] sm:$0xff]
  %v360 = vld [vmem:[%s0 + $0x70] sm:$0xff]
  %v361 = vld [vmem:[%s0 + $0x78] sm:$0xff]
  %362 = vset.pattern.permute.xlu0 1
  %363 = vperm.xlu0 %362, %v346
  %v364 = vpop.permute.xlu0 %363
  %365 = vset.pattern.permute.xlu0 1
  %366 = vperm.xlu0 %365, %v347
  %v367 = vpop.permute.xlu0 %366
  %368 = vset.pattern.permute.xlu0 1
  %369 = vperm.xlu0 %368, %v348
  %v370 = vpop.permute.xlu0 %369
  %371 = vset.pattern.permute.xlu0 1
  %372 = vperm.xlu0 %371, %v349
  %v373 = vpop.permute.xlu0 %372
  %374 = vset.pattern.permute.xlu0 1
  %375 = vperm.xlu0 %374, %v350
  %v376 = vpop.permute.xlu0 %375
  %377 = vset.pattern.permute.xlu0 1
  %378 = vperm.xlu0 %377, %v351
  %v379 = vpop.permute.xlu0 %378
  %380 = vset.pattern.permute.xlu0 1
  %381 = vperm.xlu0 %380, %v352
  %v382 = vpop.permute.xlu0 %381
  %383 = vset.pattern.permute.xlu0 1
  %384 = vperm.xlu0 %383, %v353
  %v385 = vpop.permute.xlu0 %384
  %386 = vset.pattern.permute.xlu0 1
  %387 = vperm.xlu0 %386, %v354
  %v388 = vpop.permute.xlu0 %387
  %389 = vset.pattern.permute.xlu0 1
  %390 = vperm.xlu0 %389, %v355
  %v391 = vpop.permute.xlu0 %390
  %392 = vset.pattern.permute.xlu0 1
  %393 = vperm.xlu0 %392, %v356
  %v394 = vpop.permute.xlu0 %393
  %395 = vset.pattern.permute.xlu0 1
  %396 = vperm.xlu0 %395, %v357
  %v397 = vpop.permute.xlu0 %396
  %398 = vset.pattern.permute.xlu0 1
  %399 = vperm.xlu0 %398, %v358
  %v400 = vpop.permute.xlu0 %399
  %401 = vset.pattern.permute.xlu0 1
  %402 = vperm.xlu0 %401, %v359
  %v403 = vpop.permute.xlu0 %402
  %404 = vset.pattern.permute.xlu0 1
  %405 = vperm.xlu0 %404, %v360
  %v406 = vpop.permute.xlu0 %405
  %407 = vset.pattern.permute.xlu0 1
  %408 = vperm.xlu0 %407, %v361
  %v409 = vpop.permute.xlu0 %408
  %vm410 = vcmp.eq.s32.totalorder %v19, %v364
  %vm411 = vcmp.eq.s32.totalorder %v19, %v367
  %vm412 = vcmp.eq.s32.totalorder %v19, %v370
  %vm413 = vcmp.eq.s32.totalorder %v19, %v373
  %vm414 = vcmp.eq.s32.totalorder %v19, %v376
  %vm415 = vcmp.eq.s32.totalorder %v19, %v379
  %vm416 = vcmp.eq.s32.totalorder %v19, %v382
  %vm417 = vcmp.eq.s32.totalorder %v19, %v385
  %vm418 = vcmp.eq.s32.totalorder %v19, %v388
  %vm419 = vcmp.eq.s32.totalorder %v19, %v391
  %vm420 = vcmp.eq.s32.totalorder %v19, %v394
  %vm421 = vcmp.eq.s32.totalorder %v19, %v397
  %vm422 = vcmp.eq.s32.totalorder %v19, %v400
  %vm423 = vcmp.eq.s32.totalorder %v19, %v403
  %vm424 = vcmp.eq.s32.totalorder %v19, %v406
  %vm425 = vcmp.eq.s32.totalorder %v19, %v409
  %v426 = vsel %vm410, 1, 0
  %v427 = vsel %vm411, 1, 0
  %v428 = vsel %vm412, 1, 0
  %v429 = vsel %vm413, 1, 0
  %v430 = vsel %vm414, 1, 0
  %v431 = vsel %vm415, 1, 0
  %v432 = vsel %vm416, 1, 0
  %v433 = vsel %vm417, 1, 0
  %v434 = vsel %vm418, 1, 0
  %v435 = vsel %vm419, 1, 0
  %v436 = vsel %vm420, 1, 0
  %v437 = vsel %vm421, 1, 0
  %v438 = vsel %vm422, 1, 0
  %v439 = vsel %vm423, 1, 0
  %v440 = vsel %vm424, 1, 0
  %v441 = vsel %vm425, 1, 0
  %v442 = vcvt.s32.f32 %v426
  %v443 = vcvt.s32.f32 %v427
  %v444 = vcvt.s32.f32 %v428
  %v445 = vcvt.s32.f32 %v429
  %v446 = vcvt.s32.f32 %v430
  %v447 = vcvt.s32.f32 %v431
  %v448 = vcvt.s32.f32 %v432
  %v449 = vcvt.s32.f32 %v433
  %v450 = vcvt.s32.f32 %v434
  %v451 = vcvt.s32.f32 %v435
  %v452 = vcvt.s32.f32 %v436
  %v453 = vcvt.s32.f32 %v437
  %v454 = vcvt.s32.f32 %v438
  %v455 = vcvt.s32.f32 %v439
  %v456 = vcvt.s32.f32 %v440
  %v457 = vcvt.s32.f32 %v441
  %v459 = vsel %vm132, %v442, 0
  %v462 = vsel %vm132, %v443, 0
  %v465 = vsel %vm132, %v444, 0
  %v468 = vsel %vm132, %v445, 0
  %v471 = vsel %vm132, %v446, 0
  %v474 = vsel %vm132, %v447, 0
  %v477 = vsel %vm132, %v448, 0
  %v480 = vsel %vm132, %v449, 0
  %v483 = vsel %vm132, %v450, 0
  %v486 = vsel %vm132, %v451, 0
  %v489 = vsel %vm132, %v452, 0
  %v492 = vsel %vm132, %v453, 0
  %v495 = vsel %vm132, %v454, 0
  %v498 = vsel %vm132, %v455, 0
  %v501 = vsel %vm132, %v456, 0
  %v504 = vsel %vm132, %v457, 0
  %506 = vmatprep.subr.mxu0 0.0
  %507 = vmatpush1.msra.mxu0 %v14
  %508 = vmatprep.subr.mxu0 0.0
  %509 = vmatpush1.msra.mxu0 %v15
  %510 = vmatprep.subr.mxu0 0.0
  %511 = vmatpush1.msra.mxu0 %v16
  %512 = vmatprep.subr.mxu0 0.0
  %513 = vmatpush1.msra.mxu0 %v183
  %514 = vmatprep.subr.mxu0 0.0
  %515 = vmatpush1.msra.mxu0 0.0
  %516 = vmatprep.subr.mxu0 0.0
  %517 = vmatpush1.msra.mxu0 0.0
  %518 = vmatprep.subr.mxu0 0.0
  %519 = vmatpush1.msra.mxu0 0.0
  %520 = vmatprep.subr.mxu0 0.0
  %521 = vmatpush1.msra.mxu0 0.0
  %522 = vmatprep.subr.mxu0 0.0
  %523 = vmatpush1.msra.mxu0 0.0
  %524 = vmatprep.subr.mxu0 0.0
  %525 = vmatpush1.msra.mxu0 0.0
  %526 = vmatprep.subr.mxu0 0.0
  %527 = vmatpush1.msra.mxu0 0.0
  %528 = vmatprep.subr.mxu0 0.0
  %529 = vmatpush1.msra.mxu0 0.0
  %530 = vmatprep.subr.mxu0 0.0
  %531 = vmatpush1.msra.mxu0 0.0
  %532 = vmatprep.subr.mxu0 0.0
  %533 = vmatpush1.msra.mxu0 0.0
  %534 = vmatprep.subr.mxu0 0.0
  %535 = vmatpush1.msra.mxu0 0.0
  %536 = vmatprep.subr.mxu0 0.0
  %537 = vmatpush1.msra.mxu0 0.0
  %538 = vmatprep.subr.mxu0 0.0
  %539 = vmatpush1.msra.mxu0 0.0
  %540 = vmatprep.subr.mxu0 0.0
  %541 = vmatpush1.msra.mxu0 0.0
  %542 = vmatprep.subr.mxu0 0.0
  %543 = vmatpush1.msra.mxu0 0.0
  %544 = vmatprep.subr.mxu0 0.0
  %545 = vmatpush1.msra.mxu0 0.0
  %546 = vmatprep.subr.mxu0 0.0
  %547 = vmatpush1.msra.mxu0 0.0
  %548 = vmatprep.subr.mxu0 0.0
  %549 = vmatpush1.msra.mxu0 0.0
  %550 = vmatprep.subr.mxu0 0.0
  %551 = vmatpush1.msra.mxu0 0.0
  %552 = vmatprep.subr.mxu0 0.0
  %553 = vmatpush1.msra.mxu0 0.0
  %554 = vmatprep.subr.mxu0 0.0
  %555 = vmatpush1.msra.mxu0 0.0
  %556 = vmatprep.subr.mxu0 0.0
  %557 = vmatpush1.msra.mxu0 0.0
  %558 = vmatprep.subr.mxu0 0.0
  %559 = vmatpush1.msra.mxu0 0.0
  %560 = vmatprep.subr.mxu0 0.0
  %561 = vmatpush1.msra.mxu0 0.0
  %562 = vmatprep.subr.mxu0 0.0
  %563 = vmatpush1.msra.mxu0 0.0
  %564 = vmatprep.subr.mxu0 0.0
  %565 = vmatpush1.msra.mxu0 0.0
  %566 = vmatprep.subr.mxu0 0.0
  %567 = vmatpush1.msra.mxu0 0.0
  %568 = vmatprep.subr.mxu0 0.0
  %569 = vmatpush1.msra.mxu0 0.0
  %570 = vmatprep.mubr.f32.mxu0 0.0
  %571 = vmatmul.mubr.f32.gmra.mrb[0].mxu0 %v459
  %v572 = vpop.f32.mrb[0].mxu0
  %v573 = vadd.f32 0.0, %v572
  %v574 = vpop.f32.mrb[0].mxu0
  %575 = vmatprep.mubr.f32.mxu0 0.0
  %576 = vmatmul.mubr.f32.gmra.mrb[0].mxu0 %v462
  %v577 = vpop.f32.mrb[0].mxu0
  %v578 = vadd.f32 0.0, %v577
  %v579 = vpop.f32.mrb[0].mxu0
  %580 = vmatprep.mubr.f32.mxu0 0.0
  %581 = vmatmul.mubr.f32.gmra.mrb[0].mxu0 %v465
  %v582 = vpop.f32.mrb[0].mxu0
  %v583 = vadd.f32 0.0, %v582
  %v584 = vpop.f32.mrb[0].mxu0
  %585 = vmatprep.mubr.f32.mxu0 0.0
  %586 = vmatmul.mubr.f32.gmra.mrb[0].mxu0 %v468
  %v587 = vpop.f32.mrb[0].mxu0
  %v588 = vadd.f32 0.0, %v587
  %v589 = vpop.f32.mrb[0].mxu0
  %590 = vmatprep.mubr.f32.mxu0 0.0
  %591 = vmatmul.mubr.f32.gmra.mrb[0].mxu0 %v471
  %v592 = vpop.f32.mrb[0].mxu0
  %v593 = vadd.f32 0.0, %v592
  %v594 = vpop.f32.mrb[0].mxu0
  %595 = vmatprep.mubr.f32.mxu0 0.0
  %596 = vmatmul.mubr.f32.gmra.mrb[0].mxu0 %v474
  %v597 = vpop.f32.mrb[0].mxu0
  %v598 = vadd.f32 0.0, %v597
  %v599 = vpop.f32.mrb[0].mxu0
  %600 = vmatprep.mubr.f32.mxu0 0.0
  %601 = vmatmul.mubr.f32.gmra.mrb[0].mxu0 %v477
  %v602 = vpop.f32.mrb[0].mxu0
  %v603 = vadd.f32 0.0, %v602
  %v604 = vpop.f32.mrb[0].mxu0
  %605 = vmatprep.mubr.f32.mxu0 0.0
  %606 = vmatmul.mubr.f32.gmra.mrb[0].mxu0 %v480
  %v607 = vpop.f32.mrb[0].mxu0
  %v608 = vadd.f32 0.0, %v607
  %v609 = vpop.f32.mrb[0].mxu0
  %610 = vmatprep.mubr.f32.mxu0 0.0
  %611 = vmatmul.mubr.f32.gmra.mrb[0].mxu0 %v483
  %v612 = vpop.f32.mrb[0].mxu0
  %v613 = vadd.f32 0.0, %v612
  %v614 = vpop.f32.mrb[0].mxu0
  %615 = vmatprep.mubr.f32.mxu0 0.0
  %616 = vmatmul.mubr.f32.gmra.mrb[0].mxu0 %v486
  %v617 = vpop.f32.mrb[0].mxu0
  %v618 = vadd.f32 0.0, %v617
  %v619 = vpop.f32.mrb[0].mxu0
  %620 = vmatprep.mubr.f32.mxu0 0.0
  %621 = vmatmul.mubr.f32.gmra.mrb[0].mxu0 %v489
  %v622 = vpop.f32.mrb[0].mxu0
  %v623 = vadd.f32 0.0, %v622
  %v624 = vpop.f32.mrb[0].mxu0
  %625 = vmatprep.mubr.f32.mxu0 0.0
  %626 = vmatmul.mubr.f32.gmra.mrb[0].mxu0 %v492
  %v627 = vpop.f32.mrb[0].mxu0
  %v628 = vadd.f32 0.0, %v627
  %v629 = vpop.f32.mrb[0].mxu0
  %630 = vmatprep.mubr.f32.mxu0 0.0
  %631 = vmatmul.mubr.f32.gmra.mrb[0].mxu0 %v495
  %v632 = vpop.f32.mrb[0].mxu0
  %v633 = vadd.f32 0.0, %v632
  %v634 = vpop.f32.mrb[0].mxu0
  %635 = vmatprep.mubr.f32.mxu0 0.0
  %636 = vmatmul.mubr.f32.gmra.mrb[0].mxu0 %v498
  %v637 = vpop.f32.mrb[0].mxu0
  %v638 = vadd.f32 0.0, %v637
  %v639 = vpop.f32.mrb[0].mxu0
  %640 = vmatprep.mubr.f32.mxu0 0.0
  %641 = vmatmul.mubr.f32.gmra.mrb[0].mxu0 %v501
  %v642 = vpop.f32.mrb[0].mxu0
  %v643 = vadd.f32 0.0, %v642
  %v644 = vpop.f32.mrb[0].mxu0
  %645 = vmatprep.mubr.f32.mxu0 0.0
  %646 = vmatmul.mubr.f32.gmra.mrb[0].mxu0 %v504
  %v647 = vpop.f32.mrb[0].mxu0
  %v648 = vadd.f32 0.0, %v647
  %v649 = vpop.f32.mrb[0].mxu0
  %650 = vdwg.mxu0
  %s651 = scalar_lea.vmem [#allocation2], 128
  %652 = vst [vmem:[%s651] sm:$0xff] %v573
  %653 = vst [vmem:[%s651 + $0x8] sm:$0xff] %v578
  %654 = vst [vmem:[%s651 + $0x10] sm:$0xff] %v583
  %655 = vst [vmem:[%s651 + $0x18] sm:$0xff] %v588
  %656 = vst [vmem:[%s651 + $0x20] sm:$0xff] %v593
  %657 = vst [vmem:[%s651 + $0x28] sm:$0xff] %v598
  %658 = vst [vmem:[%s651 + $0x30] sm:$0xff] %v603
  %659 = vst [vmem:[%s651 + $0x38] sm:$0xff] %v608
  %660 = vst [vmem:[%s651 + $0x40] sm:$0xff] %v613
  %661 = vst [vmem:[%s651 + $0x48] sm:$0xff] %v618
  %662 = vst [vmem:[%s651 + $0x50] sm:$0xff] %v623
  %663 = vst [vmem:[%s651 + $0x58] sm:$0xff] %v628
  %664 = vst [vmem:[%s651 + $0x60] sm:$0xff] %v633
  %665 = vst [vmem:[%s651 + $0x68] sm:$0xff] %v638
  %666 = vst [vmem:[%s651 + $0x70] sm:$0xff] %v643
  %667 = vst [vmem:[%s651 + $0x78] sm:$0xff] %v648
  %v668 = vld [vmem:[%s0] sm:$0xff]
  %v669 = vld [vmem:[%s0 + $0x8] sm:$0xff]
  %v670 = vld [vmem:[%s0 + $0x10] sm:$0xff]
  %v671 = vld [vmem:[%s0 + $0x18] sm:$0xff]
  %v672 = vld [vmem:[%s0 + $0x20] sm:$0xff]
  %v673 = vld [vmem:[%s0 + $0x28] sm:$0xff]
  %v674 = vld [vmem:[%s0 + $0x30] sm:$0xff]
  %v675 = vld [vmem:[%s0 + $0x38] sm:$0xff]
  %v676 = vld [vmem:[%s0 + $0x40] sm:$0xff]
  %v677 = vld [vmem:[%s0 + $0x48] sm:$0xff]
  %v678 = vld [vmem:[%s0 + $0x50] sm:$0xff]
  %v679 = vld [vmem:[%s0 + $0x58] sm:$0xff]
  %v680 = vld [vmem:[%s0 + $0x60] sm:$0xff]
  %v681 = vld [vmem:[%s0 + $0x68] sm:$0xff]
  %v682 = vld [vmem:[%s0 + $0x70] sm:$0xff]
  %v683 = vld [vmem:[%s0 + $0x78] sm:$0xff]
  %684 = vset.pattern.permute.xlu0 2
  %685 = vperm.xlu0 %684, %v668
  %v686 = vpop.permute.xlu0 %685
  %687 = vset.pattern.permute.xlu0 2
  %688 = vperm.xlu0 %687, %v669
  %v689 = vpop.permute.xlu0 %688
  %690 = vset.pattern.permute.xlu0 2
  %691 = vperm.xlu0 %690, %v670
  %v692 = vpop.permute.xlu0 %691
  %693 = vset.pattern.permute.xlu0 2
  %694 = vperm.xlu0 %693, %v671
  %v695 = vpop.permute.xlu0 %694
  %696 = vset.pattern.permute.xlu0 2
  %697 = vperm.xlu0 %696, %v672
  %v698 = vpop.permute.xlu0 %697
  %699 = vset.pattern.permute.xlu0 2
  %700 = vperm.xlu0 %699, %v673
  %v701 = vpop.permute.xlu0 %700
  %702 = vset.pattern.permute.xlu0 2
  %703 = vperm.xlu0 %702, %v674
  %v704 = vpop.permute.xlu0 %703
  %705 = vset.pattern.permute.xlu0 2
  %706 = vperm.xlu0 %705, %v675
  %v707 = vpop.permute.xlu0 %706
  %708 = vset.pattern.permute.xlu0 2
  %709 = vperm.xlu0 %708, %v676
  %v710 = vpop.permute.xlu0 %709
  %711 = vset.pattern.permute.xlu0 2
  %712 = vperm.xlu0 %711, %v677
  %v713 = vpop.permute.xlu0 %712
  %714 = vset.pattern.permute.xlu0 2
  %715 = vperm.xlu0 %714, %v678
  %v716 = vpop.permute.xlu0 %715
  %717 = vset.pattern.permute.xlu0 2
  %718 = vperm.xlu0 %717, %v679
  %v719 = vpop.permute.xlu0 %718
  %720 = vset.pattern.permute.xlu0 2
  %721 = vperm.xlu0 %720, %v680
  %v722 = vpop.permute.xlu0 %721
  %723 = vset.pattern.permute.xlu0 2
  %724 = vperm.xlu0 %723, %v681
  %v725 = vpop.permute.xlu0 %724
  %726 = vset.pattern.permute.xlu0 2
  %727 = vperm.xlu0 %726, %v682
  %v728 = vpop.permute.xlu0 %727
  %729 = vset.pattern.permute.xlu0 2
  %730 = vperm.xlu0 %729, %v683
  %v731 = vpop.permute.xlu0 %730
  %vm732 = vcmp.eq.s32.totalorder %v19, %v686
  %vm733 = vcmp.eq.s32.totalorder %v19, %v689
  %vm734 = vcmp.eq.s32.totalorder %v19, %v692
  %vm735 = vcmp.eq.s32.totalorder %v19, %v695
  %vm736 = vcmp.eq.s32.totalorder %v19, %v698
  %vm737 = vcmp.eq.s32.totalorder %v19, %v701
  %vm738 = vcmp.eq.s32.totalorder %v19, %v704
  %vm739 = vcmp.eq.s32.totalorder %v19, %v707
  %vm740 = vcmp.eq.s32.totalorder %v19, %v710
  %vm741 = vcmp.eq.s32.totalorder %v19, %v713
  %vm742 = vcmp.eq.s32.totalorder %v19, %v716
  %vm743 = vcmp.eq.s32.totalorder %v19, %v719
  %vm744 = vcmp.eq.s32.totalorder %v19, %v722
  %vm745 = vcmp.eq.s32.totalorder %v19, %v725
  %vm746 = vcmp.eq.s32.totalorder %v19, %v728
  %vm747 = vcmp.eq.s32.totalorder %v19, %v731
  %v748 = vsel %vm732, 1, 0
  %v749 = vsel %vm733, 1, 0
  %v750 = vsel %vm734, 1, 0
  %v751 = vsel %vm735, 1, 0
  %v752 = vsel %vm736, 1, 0
  %v753 = vsel %vm737, 1, 0
  %v754 = vsel %vm738, 1, 0
  %v755 = vsel %vm739, 1, 0
  %v756 = vsel %vm740, 1, 0
  %v757 = vsel %vm741, 1, 0
  %v758 = vsel %vm742, 1, 0
  %v759 = vsel %vm743, 1, 0
  %v760 = vsel %vm744, 1, 0
  %v761 = vsel %vm745, 1, 0
  %v762 = vsel %vm746, 1, 0
  %v763 = vsel %vm747, 1, 0
  %v764 = vcvt.s32.f32 %v748
  %v765 = vcvt.s32.f32 %v749
  %v766 = vcvt.s32.f32 %v750
  %v767 = vcvt.s32.f32 %v751
  %v768 = vcvt.s32.f32 %v752
  %v769 = vcvt.s32.f32 %v753
  %v770 = vcvt.s32.f32 %v754
  %v771 = vcvt.s32.f32 %v755
  %v772 = vcvt.s32.f32 %v756
  %v773 = vcvt.s32.f32 %v757
  %v774 = vcvt.s32.f32 %v758
  %v775 = vcvt.s32.f32 %v759
  %v776 = vcvt.s32.f32 %v760
  %v777 = vcvt.s32.f32 %v761
  %v778 = vcvt.s32.f32 %v762
  %v779 = vcvt.s32.f32 %v763
  %v781 = vsel %vm132, %v764, 0
  %v784 = vsel %vm132, %v765, 0
  %v787 = vsel %vm132, %v766, 0
  %v790 = vsel %vm132, %v767, 0
  %v793 = vsel %vm132, %v768, 0
  %v796 = vsel %vm132, %v769, 0
  %v799 = vsel %vm132, %v770, 0
  %v802 = vsel %vm132, %v771, 0
  %v805 = vsel %vm132, %v772, 0
  %v808 = vsel %vm132, %v773, 0
  %v811 = vsel %vm132, %v774, 0
  %v814 = vsel %vm132, %v775, 0
  %v817 = vsel %vm132, %v776, 0
  %v820 = vsel %vm132, %v777, 0
  %v823 = vsel %vm132, %v778, 0
  %v826 = vsel %vm132, %v779, 0
  %828 = vmatprep.subr.mxu0 0.0
  %829 = vmatpush1.msra.mxu0 %v14
  %830 = vmatprep.subr.mxu0 0.0
  %831 = vmatpush1.msra.mxu0 %v15
  %832 = vmatprep.subr.mxu0 0.0
  %833 = vmatpush1.msra.mxu0 %v16
  %834 = vmatprep.subr.mxu0 0.0
  %835 = vmatpush1.msra.mxu0 %v183
  %836 = vmatprep.subr.mxu0 0.0
  %837 = vmatpush1.msra.mxu0 0.0
  %838 = vmatprep.subr.mxu0 0.0
  %839 = vmatpush1.msra.mxu0 0.0
  %840 = vmatprep.subr.mxu0 0.0
  %841 = vmatpush1.msra.mxu0 0.0
  %842 = vmatprep.subr.mxu0 0.0
  %843 = vmatpush1.msra.mxu0 0.0
  %844 = vmatprep.subr.mxu0 0.0
  %845 = vmatpush1.msra.mxu0 0.0
  %846 = vmatprep.subr.mxu0 0.0
  %847 = vmatpush1.msra.mxu0 0.0
  %848 = vmatprep.subr.mxu0 0.0
  %849 = vmatpush1.msra.mxu0 0.0
  %850 = vmatprep.subr.mxu0 0.0
  %851 = vmatpush1.msra.mxu0 0.0
  %852 = vmatprep.subr.mxu0 0.0
  %853 = vmatpush1.msra.mxu0 0.0
  %854 = vmatprep.subr.mxu0 0.0
  %855 = vmatpush1.msra.mxu0 0.0
  %856 = vmatprep.subr.mxu0 0.0
  %857 = vmatpush1.msra.mxu0 0.0
  %858 = vmatprep.subr.mxu0 0.0
  %859 = vmatpush1.msra.mxu0 0.0
  %860 = vmatprep.subr.mxu0 0.0
  %861 = vmatpush1.msra.mxu0 0.0
  %862 = vmatprep.subr.mxu0 0.0
  %863 = vmatpush1.msra.mxu0 0.0
  %864 = vmatprep.subr.mxu0 0.0
  %865 = vmatpush1.msra.mxu0 0.0
  %866 = vmatprep.subr.mxu0 0.0
  %867 = vmatpush1.msra.mxu0 0.0
  %868 = vmatprep.subr.mxu0 0.0
  %869 = vmatpush1.msra.mxu0 0.0
  %870 = vmatprep.subr.mxu0 0.0
  %871 = vmatpush1.msra.mxu0 0.0
  %872 = vmatprep.subr.mxu0 0.0
  %873 = vmatpush1.msra.mxu0 0.0
  %874 = vmatprep.subr.mxu0 0.0
  %875 = vmatpush1.msra.mxu0 0.0
  %876 = vmatprep.subr.mxu0 0.0
  %877 = vmatpush1.msra.mxu0 0.0
  %878 = vmatprep.subr.mxu0 0.0
  %879 = vmatpush1.msra.mxu0 0.0
  %880 = vmatprep.subr.mxu0 0.0
  %881 = vmatpush1.msra.mxu0 0.0
  %882 = vmatprep.subr.mxu0 0.0
  %883 = vmatpush1.msra.mxu0 0.0
  %884 = vmatprep.subr.mxu0 0.0
  %885 = vmatpush1.msra.mxu0 0.0
  %886 = vmatprep.subr.mxu0 0.0
  %887 = vmatpush1.msra.mxu0 0.0
  %888 = vmatprep.subr.mxu0 0.0
  %889 = vmatpush1.msra.mxu0 0.0
  %890 = vmatprep.subr.mxu0 0.0
  %891 = vmatpush1.msra.mxu0 0.0
  %892 = vmatprep.mubr.f32.mxu0 0.0
  %893 = vmatmul.mubr.f32.gmra.mrb[0].mxu0 %v781
  %v894 = vpop.f32.mrb[0].mxu0
  %v895 = vadd.f32 0.0, %v894
  %v896 = vpop.f32.mrb[0].mxu0
  %897 = vmatprep.mubr.f32.mxu0 0.0
  %898 = vmatmul.mubr.f32.gmra.mrb[0].mxu0 %v784
  %v899 = vpop.f32.mrb[0].mxu0
  %v900 = vadd.f32 0.0, %v899
  %v901 = vpop.f32.mrb[0].mxu0
  %902 = vmatprep.mubr.f32.mxu0 0.0
  %903 = vmatmul.mubr.f32.gmra.mrb[0].mxu0 %v787
  %v904 = vpop.f32.mrb[0].mxu0
  %v905 = vadd.f32 0.0, %v904
  %v906 = vpop.f32.mrb[0].mxu0
  %907 = vmatprep.mubr.f32.mxu0 0.0
  %908 = vmatmul.mubr.f32.gmra.mrb[0].mxu0 %v790
  %v909 = vpop.f32.mrb[0].mxu0
  %v910 = vadd.f32 0.0, %v909
  %v911 = vpop.f32.mrb[0].mxu0
  %912 = vmatprep.mubr.f32.mxu0 0.0
  %913 = vmatmul.mubr.f32.gmra.mrb[0].mxu0 %v793
  %v914 = vpop.f32.mrb[0].mxu0
  %v915 = vadd.f32 0.0, %v914
  %v916 = vpop.f32.mrb[0].mxu0
  %917 = vmatprep.mubr.f32.mxu0 0.0
  %918 = vmatmul.mubr.f32.gmra.mrb[0].mxu0 %v796
  %v919 = vpop.f32.mrb[0].mxu0
  %v920 = vadd.f32 0.0, %v919
  %v921 = vpop.f32.mrb[0].mxu0
  %922 = vmatprep.mubr.f32.mxu0 0.0
  %923 = vmatmul.mubr.f32.gmra.mrb[0].mxu0 %v799
  %v924 = vpop.f32.mrb[0].mxu0
  %v925 = vadd.f32 0.0, %v924
  %v926 = vpop.f32.mrb[0].mxu0
  %927 = vmatprep.mubr.f32.mxu0 0.0
  %928 = vmatmul.mubr.f32.gmra.mrb[0].mxu0 %v802
  %v929 = vpop.f32.mrb[0].mxu0
  %v930 = vadd.f32 0.0, %v929
  %v931 = vpop.f32.mrb[0].mxu0
  %932 = vmatprep.mubr.f32.mxu0 0.0
  %933 = vmatmul.mubr.f32.gmra.mrb[0].mxu0 %v805
  %v934 = vpop.f32.mrb[0].mxu0
  %v935 = vadd.f32 0.0, %v934
  %v936 = vpop.f32.mrb[0].mxu0
  %937 = vmatprep.mubr.f32.mxu0 0.0
  %938 = vmatmul.mubr.f32.gmra.mrb[0].mxu0 %v808
  %v939 = vpop.f32.mrb[0].mxu0
  %v940 = vadd.f32 0.0, %v939
  %v941 = vpop.f32.mrb[0].mxu0
  %942 = vmatprep.mubr.f32.mxu0 0.0
  %943 = vmatmul.mubr.f32.gmra.mrb[0].mxu0 %v811
  %v944 = vpop.f32.mrb[0].mxu0
  %v945 = vadd.f32 0.0, %v944
  %v946 = vpop.f32.mrb[0].mxu0
  %947 = vmatprep.mubr.f32.mxu0 0.0
  %948 = vmatmul.mubr.f32.gmra.mrb[0].mxu0 %v814
  %v949 = vpop.f32.mrb[0].mxu0
  %v950 = vadd.f32 0.0, %v949
  %v951 = vpop.f32.mrb[0].mxu0
  %952 = vmatprep.mubr.f32.mxu0 0.0
  %953 = vmatmul.mubr.f32.gmra.mrb[0].mxu0 %v817
  %v954 = vpop.f32.mrb[0].mxu0
  %v955 = vadd.f32 0.0, %v954
  %v956 = vpop.f32.mrb[0].mxu0
  %957 = vmatprep.mubr.f32.mxu0 0.0
  %958 = vmatmul.mubr.f32.gmra.mrb[0].mxu0 %v820
  %v959 = vpop.f32.mrb[0].mxu0
  %v960 = vadd.f32 0.0, %v959
  %v961 = vpop.f32.mrb[0].mxu0
  %962 = vmatprep.mubr.f32.mxu0 0.0
  %963 = vmatmul.mubr.f32.gmra.mrb[0].mxu0 %v823
  %v964 = vpop.f32.mrb[0].mxu0
  %v965 = vadd.f32 0.0, %v964
  %v966 = vpop.f32.mrb[0].mxu0
  %967 = vmatprep.mubr.f32.mxu0 0.0
  %968 = vmatmul.mubr.f32.gmra.mrb[0].mxu0 %v826
  %v969 = vpop.f32.mrb[0].mxu0
  %v970 = vadd.f32 0.0, %v969
  %v971 = vpop.f32.mrb[0].mxu0
  %972 = vdwg.mxu0
  %s973 = scalar_lea.vmem [#allocation2], 256
  %974 = vst [vmem:[%s973] sm:$0xff] %v895
  %975 = vst [vmem:[%s973 + $0x8] sm:$0xff] %v900
  %976 = vst [vmem:[%s973 + $0x10] sm:$0xff] %v905
  %977 = vst [vmem:[%s973 + $0x18] sm:$0xff] %v910
  %978 = vst [vmem:[%s973 + $0x20] sm:$0xff] %v915
  %979 = vst [vmem:[%s973 + $0x28] sm:$0xff] %v920
  %980 = vst [vmem:[%s973 + $0x30] sm:$0xff] %v925
  %981 = vst [vmem:[%s973 + $0x38] sm:$0xff] %v930
  %982 = vst [vmem:[%s973 + $0x40] sm:$0xff] %v935
  %983 = vst [vmem:[%s973 + $0x48] sm:$0xff] %v940
  %984 = vst [vmem:[%s973 + $0x50] sm:$0xff] %v945
  %985 = vst [vmem:[%s973 + $0x58] sm:$0xff] %v950
  %986 = vst [vmem:[%s973 + $0x60] sm:$0xff] %v955
  %987 = vst [vmem:[%s973 + $0x68] sm:$0xff] %v960
  %988 = vst [vmem:[%s973 + $0x70] sm:$0xff] %v965
  %989 = vst [vmem:[%s973 + $0x78] sm:$0xff] %v970
  %v990 = vld [vmem:[%s0] sm:$0xff]
  %v991 = vld [vmem:[%s0 + $0x8] sm:$0xff]
  %v992 = vld [vmem:[%s0 + $0x10] sm:$0xff]
  %v993 = vld [vmem:[%s0 + $0x18] sm:$0xff]
  %v994 = vld [vmem:[%s0 + $0x20] sm:$0xff]
  %v995 = vld [vmem:[%s0 + $0x28] sm:$0xff]
  %v996 = vld [vmem:[%s0 + $0x30] sm:$0xff]
  %v997 = vld [vmem:[%s0 + $0x38] sm:$0xff]
  %v998 = vld [vmem:[%s0 + $0x40] sm:$0xff]
  %v999 = vld [vmem:[%s0 + $0x48] sm:$0xff]
  %v1000 = vld [vmem:[%s0 + $0x50] sm:$0xff]
  %v1001 = vld [vmem:[%s0 + $0x58] sm:$0xff]
  %v1002 = vld [vmem:[%s0 + $0x60] sm:$0xff]
  %v1003 = vld [vmem:[%s0 + $0x68] sm:$0xff]
  %v1004 = vld [vmem:[%s0 + $0x70] sm:$0xff]
  %v1005 = vld [vmem:[%s0 + $0x78] sm:$0xff]
  %1006 = vset.pattern.permute.xlu0 3
  %1007 = vperm.xlu0 %1006, %v990
  %v1008 = vpop.permute.xlu0 %1007
  %1009 = vset.pattern.permute.xlu0 3
  %1010 = vperm.xlu0 %1009, %v991
  %v1011 = vpop.permute.xlu0 %1010
  %1012 = vset.pattern.permute.xlu0 3
  %1013 = vperm.xlu0 %1012, %v992
  %v1014 = vpop.permute.xlu0 %1013
  %1015 = vset.pattern.permute.xlu0 3
  %1016 = vperm.xlu0 %1015, %v993
  %v1017 = vpop.permute.xlu0 %1016
  %1018 = vset.pattern.permute.xlu0 3
  %1019 = vperm.xlu0 %1018, %v994
  %v1020 = vpop.permute.xlu0 %1019
  %1021 = vset.pattern.permute.xlu0 3
  %1022 = vperm.xlu0 %1021, %v995
  %v1023 = vpop.permute.xlu0 %1022
  %1024 = vset.pattern.permute.xlu0 3
  %1025 = vperm.xlu0 %1024, %v996
  %v1026 = vpop.permute.xlu0 %1025
  %1027 = vset.pattern.permute.xlu0 3
  %1028 = vperm.xlu0 %1027, %v997
  %v1029 = vpop.permute.xlu0 %1028
  %1030 = vset.pattern.permute.xlu0 3
  %1031 = vperm.xlu0 %1030, %v998
  %v1032 = vpop.permute.xlu0 %1031
  %1033 = vset.pattern.permute.xlu0 3
  %1034 = vperm.xlu0 %1033, %v999
  %v1035 = vpop.permute.xlu0 %1034
  %1036 = vset.pattern.permute.xlu0 3
  %1037 = vperm.xlu0 %1036, %v1000
  %v1038 = vpop.permute.xlu0 %1037
  %1039 = vset.pattern.permute.xlu0 3
  %1040 = vperm.xlu0 %1039, %v1001
  %v1041 = vpop.permute.xlu0 %1040
  %1042 = vset.pattern.permute.xlu0 3
  %1043 = vperm.xlu0 %1042, %v1002
  %v1044 = vpop.permute.xlu0 %1043
  %1045 = vset.pattern.permute.xlu0 3
  %1046 = vperm.xlu0 %1045, %v1003
  %v1047 = vpop.permute.xlu0 %1046
  %1048 = vset.pattern.permute.xlu0 3
  %1049 = vperm.xlu0 %1048, %v1004
  %v1050 = vpop.permute.xlu0 %1049
  %1051 = vset.pattern.permute.xlu0 3
  %1052 = vperm.xlu0 %1051, %v1005
  %v1053 = vpop.permute.xlu0 %1052
  %vm1054 = vcmp.eq.s32.totalorder %v19, %v1008
  %vm1055 = vcmp.eq.s32.totalorder %v19, %v1011
  %vm1056 = vcmp.eq.s32.totalorder %v19, %v1014
  %vm1057 = vcmp.eq.s32.totalorder %v19, %v1017
  %vm1058 = vcmp.eq.s32.totalorder %v19, %v1020
  %vm1059 = vcmp.eq.s32.totalorder %v19, %v1023
  %vm1060 = vcmp.eq.s32.totalorder %v19, %v1026
  %vm1061 = vcmp.eq.s32.totalorder %v19, %v1029
  %vm1062 = vcmp.eq.s32.totalorder %v19, %v1032
  %vm1063 = vcmp.eq.s32.totalorder %v19, %v1035
  %vm1064 = vcmp.eq.s32.totalorder %v19, %v1038
  %vm1065 = vcmp.eq.s32.totalorder %v19, %v1041
  %vm1066 = vcmp.eq.s32.totalorder %v19, %v1044
  %vm1067 = vcmp.eq.s32.totalorder %v19, %v1047
  %vm1068 = vcmp.eq.s32.totalorder %v19, %v1050
  %vm1069 = vcmp.eq.s32.totalorder %v19, %v1053
  %v1070 = vsel %vm1054, 1, 0
  %v1071 = vsel %vm1055, 1, 0
  %v1072 = vsel %vm1056, 1, 0
  %v1073 = vsel %vm1057, 1, 0
  %v1074 = vsel %vm1058, 1, 0
  %v1075 = vsel %vm1059, 1, 0
  %v1076 = vsel %vm1060, 1, 0
  %v1077 = vsel %vm1061, 1, 0
  %v1078 = vsel %vm1062, 1, 0
  %v1079 = vsel %vm1063, 1, 0
  %v1080 = vsel %vm1064, 1, 0
  %v1081 = vsel %vm1065, 1, 0
  %v1082 = vsel %vm1066, 1, 0
  %v1083 = vsel %vm1067, 1, 0
  %v1084 = vsel %vm1068, 1, 0
  %v1085 = vsel %vm1069, 1, 0
  %v1086 = vcvt.s32.f32 %v1070
  %v1087 = vcvt.s32.f32 %v1071
  %v1088 = vcvt.s32.f32 %v1072
  %v1089 = vcvt.s32.f32 %v1073
  %v1090 = vcvt.s32.f32 %v1074
  %v1091 = vcvt.s32.f32 %v1075
  %v1092 = vcvt.s32.f32 %v1076
  %v1093 = vcvt.s32.f32 %v1077
  %v1094 = vcvt.s32.f32 %v1078
  %v1095 = vcvt.s32.f32 %v1079
  %v1096 = vcvt.s32.f32 %v1080
  %v1097 = vcvt.s32.f32 %v1081
  %v1098 = vcvt.s32.f32 %v1082
  %v1099 = vcvt.s32.f32 %v1083
  %v1100 = vcvt.s32.f32 %v1084
  %v1101 = vcvt.s32.f32 %v1085
  %v1103 = vsel %vm132, %v1086, 0
  %v1106 = vsel %vm132, %v1087, 0
  %v1109 = vsel %vm132, %v1088, 0
  %v1112 = vsel %vm132, %v1089, 0
  %v1115 = vsel %vm132, %v1090, 0
  %v1118 = vsel %vm132, %v1091, 0
  %v1121 = vsel %vm132, %v1092, 0
  %v1124 = vsel %vm132, %v1093, 0
  %v1127 = vsel %vm132, %v1094, 0
  %v1130 = vsel %vm132, %v1095, 0
  %v1133 = vsel %vm132, %v1096, 0
  %v1136 = vsel %vm132, %v1097, 0
  %v1139 = vsel %vm132, %v1098, 0
  %v1142 = vsel %vm132, %v1099, 0
  %v1145 = vsel %vm132, %v1100, 0
  %v1148 = vsel %vm132, %v1101, 0
  %1150 = vmatprep.subr.mxu0 0.0
  %1151 = vmatpush1.msra.mxu0 %v14
  %1152 = vmatprep.subr.mxu0 0.0
  %1153 = vmatpush1.msra.mxu0 %v15
  %1154 = vmatprep.subr.mxu0 0.0
  %1155 = vmatpush1.msra.mxu0 %v16
  %1156 = vmatprep.subr.mxu0 0.0
  %1157 = vmatpush1.msra.mxu0 %v183
  %1158 = vmatprep.subr.mxu0 0.0
  %1159 = vmatpush1.msra.mxu0 0.0
  %1160 = vmatprep.subr.mxu0 0.0
  %1161 = vmatpush1.msra.mxu0 0.0
  %1162 = vmatprep.subr.mxu0 0.0
  %1163 = vmatpush1.msra.mxu0 0.0
  %1164 = vmatprep.subr.mxu0 0.0
  %1165 = vmatpush1.msra.mxu0 0.0
  %1166 = vmatprep.subr.mxu0 0.0
  %1167 = vmatpush1.msra.mxu0 0.0
  %1168 = vmatprep.subr.mxu0 0.0
  %1169 = vmatpush1.msra.mxu0 0.0
  %1170 = vmatprep.subr.mxu0 0.0
  %1171 = vmatpush1.msra.mxu0 0.0
  %1172 = vmatprep.subr.mxu0 0.0
  %1173 = vmatpush1.msra.mxu0 0.0
  %1174 = vmatprep.subr.mxu0 0.0
  %1175 = vmatpush1.msra.mxu0 0.0
  %1176 = vmatprep.subr.mxu0 0.0
  %1177 = vmatpush1.msra.mxu0 0.0
  %1178 = vmatprep.subr.mxu0 0.0
  %1179 = vmatpush1.msra.mxu0 0.0
  %1180 = vmatprep.subr.mxu0 0.0
  %1181 = vmatpush1.msra.mxu0 0.0
  %1182 = vmatprep.subr.mxu0 0.0
  %1183 = vmatpush1.msra.mxu0 0.0
  %1184 = vmatprep.subr.mxu0 0.0
  %1185 = vmatpush1.msra.mxu0 0.0
  %1186 = vmatprep.subr.mxu0 0.0
  %1187 = vmatpush1.msra.mxu0 0.0
  %1188 = vmatprep.subr.mxu0 0.0
  %1189 = vmatpush1.msra.mxu0 0.0
  %1190 = vmatprep.subr.mxu0 0.0
  %1191 = vmatpush1.msra.mxu0 0.0
  %1192 = vmatprep.subr.mxu0 0.0
  %1193 = vmatpush1.msra.mxu0 0.0
  %1194 = vmatprep.subr.mxu0 0.0
  %1195 = vmatpush1.msra.mxu0 0.0
  %1196 = vmatprep.subr.mxu0 0.0
  %1197 = vmatpush1.msra.mxu0 0.0
  %1198 = vmatprep.subr.mxu0 0.0
  %1199 = vmatpush1.msra.mxu0 0.0
  %1200 = vmatprep.subr.mxu0 0.0
  %1201 = vmatpush1.msra.mxu0 0.0
  %1202 = vmatprep.subr.mxu0 0.0
  %1203 = vmatpush1.msra.mxu0 0.0
  %1204 = vmatprep.subr.mxu0 0.0
  %1205 = vmatpush1.msra.mxu0 0.0
  %1206 = vmatprep.subr.mxu0 0.0
  %1207 = vmatpush1.msra.mxu0 0.0
  %1208 = vmatprep.subr.mxu0 0.0
  %1209 = vmatpush1.msra.mxu0 0.0
  %1210 = vmatprep.subr.mxu0 0.0
  %1211 = vmatpush1.msra.mxu0 0.0
  %1212 = vmatprep.subr.mxu0 0.0
  %1213 = vmatpush1.msra.mxu0 0.0
  %1214 = vmatprep.mubr.f32.mxu0 0.0
  %1215 = vmatmul.mubr.f32.gmra.mrb[0].mxu0 %v1103
  %v1216 = vpop.f32.mrb[0].mxu0
  %v1217 = vadd.f32 0.0, %v1216
  %v1218 = vpop.f32.mrb[0].mxu0
  %1219 = vmatprep.mubr.f32.mxu0 0.0
  %1220 = vmatmul.mubr.f32.gmra.mrb[0].mxu0 %v1106
  %v1221 = vpop.f32.mrb[0].mxu0
  %v1222 = vadd.f32 0.0, %v1221
  %v1223 = vpop.f32.mrb[0].mxu0
  %1224 = vmatprep.mubr.f32.mxu0 0.0
  %1225 = vmatmul.mubr.f32.gmra.mrb[0].mxu0 %v1109
  %v1226 = vpop.f32.mrb[0].mxu0
  %v1227 = vadd.f32 0.0, %v1226
  %v1228 = vpop.f32.mrb[0].mxu0
  %1229 = vmatprep.mubr.f32.mxu0 0.0
  %1230 = vmatmul.mubr.f32.gmra.mrb[0].mxu0 %v1112
  %v1231 = vpop.f32.mrb[0].mxu0
  %v1232 = vadd.f32 0.0, %v1231
  %v1233 = vpop.f32.mrb[0].mxu0
  %1234 = vmatprep.mubr.f32.mxu0 0.0
  %1235 = vmatmul.mubr.f32.gmra.mrb[0].mxu0 %v1115
  %v1236 = vpop.f32.mrb[0].mxu0
  %v1237 = vadd.f32 0.0, %v1236
  %v1238 = vpop.f32.mrb[0].mxu0
  %1239 = vmatprep.mubr.f32.mxu0 0.0
  %1240 = vmatmul.mubr.f32.gmra.mrb[0].mxu0 %v1118
  %v1241 = vpop.f32.mrb[0].mxu0
  %v1242 = vadd.f32 0.0, %v1241
  %v1243 = vpop.f32.mrb[0].mxu0
  %1244 = vmatprep.mubr.f32.mxu0 0.0
  %1245 = vmatmul.mubr.f32.gmra.mrb[0].mxu0 %v1121
  %v1246 = vpop.f32.mrb[0].mxu0
  %v1247 = vadd.f32 0.0, %v1246
  %v1248 = vpop.f32.mrb[0].mxu0
  %1249 = vmatprep.mubr.f32.mxu0 0.0
  %1250 = vmatmul.mubr.f32.gmra.mrb[0].mxu0 %v1124
  %v1251 = vpop.f32.mrb[0].mxu0
  %v1252 = vadd.f32 0.0, %v1251
  %v1253 = vpop.f32.mrb[0].mxu0
  %1254 = vmatprep.mubr.f32.mxu0 0.0
  %1255 = vmatmul.mubr.f32.gmra.mrb[0].mxu0 %v1127
  %v1256 = vpop.f32.mrb[0].mxu0
  %v1257 = vadd.f32 0.0, %v1256
  %v1258 = vpop.f32.mrb[0].mxu0
  %1259 = vmatprep.mubr.f32.mxu0 0.0
  %1260 = vmatmul.mubr.f32.gmra.mrb[0].mxu0 %v1130
  %v1261 = vpop.f32.mrb[0].mxu0
  %v1262 = vadd.f32 0.0, %v1261
  %v1263 = vpop.f32.mrb[0].mxu0
  %1264 = vmatprep.mubr.f32.mxu0 0.0
  %1265 = vmatmul.mubr.f32.gmra.mrb[0].mxu0 %v1133
  %v1266 = vpop.f32.mrb[0].mxu0
  %v1267 = vadd.f32 0.0, %v1266
  %v1268 = vpop.f32.mrb[0].mxu0
  %1269 = vmatprep.mubr.f32.mxu0 0.0
  %1270 = vmatmul.mubr.f32.gmra.mrb[0].mxu0 %v1136
  %v1271 = vpop.f32.mrb[0].mxu0
  %v1272 = vadd.f32 0.0, %v1271
  %v1273 = vpop.f32.mrb[0].mxu0
  %1274 = vmatprep.mubr.f32.mxu0 0.0
  %1275 = vmatmul.mubr.f32.gmra.mrb[0].mxu0 %v1139
  %v1276 = vpop.f32.mrb[0].mxu0
  %v1277 = vadd.f32 0.0, %v1276
  %v1278 = vpop.f32.mrb[0].mxu0
  %1279 = vmatprep.mubr.f32.mxu0 0.0
  %1280 = vmatmul.mubr.f32.gmra.mrb[0].mxu0 %v1142
  %v1281 = vpop.f32.mrb[0].mxu0
  %v1282 = vadd.f32 0.0, %v1281
  %v1283 = vpop.f32.mrb[0].mxu0
  %1284 = vmatprep.mubr.f32.mxu0 0.0
  %1285 = vmatmul.mubr.f32.gmra.mrb[0].mxu0 %v1145
  %v1286 = vpop.f32.mrb[0].mxu0
  %v1287 = vadd.f32 0.0, %v1286
  %v1288 = vpop.f32.mrb[0].mxu0
  %1289 = vmatprep.mubr.f32.mxu0 0.0
  %1290 = vmatmul.mubr.f32.gmra.mrb[0].mxu0 %v1148
  %v1291 = vpop.f32.mrb[0].mxu0
  %v1292 = vadd.f32 0.0, %v1291
  %v1293 = vpop.f32.mrb[0].mxu0
  %1294 = vdwg.mxu0
  %s1295 = scalar_lea.vmem [#allocation2], 384
  %1296 = vst [vmem:[%s1295] sm:$0xff] %v1217
  %1297 = vst [vmem:[%s1295 + $0x8] sm:$0xff] %v1222
  %1298 = vst [vmem:[%s1295 + $0x10] sm:$0xff] %v1227
  %1299 = vst [vmem:[%s1295 + $0x18] sm:$0xff] %v1232
  %1300 = vst [vmem:[%s1295 + $0x20] sm:$0xff] %v1237
  %1301 = vst [vmem:[%s1295 + $0x28] sm:$0xff] %v1242
  %1302 = vst [vmem:[%s1295 + $0x30] sm:$0xff] %v1247
  %1303 = vst [vmem:[%s1295 + $0x38] sm:$0xff] %v1252
  %1304 = vst [vmem:[%s1295 + $0x40] sm:$0xff] %v1257
  %1305 = vst [vmem:[%s1295 + $0x48] sm:$0xff] %v1262
  %1306 = vst [vmem:[%s1295 + $0x50] sm:$0xff] %v1267
  %1307 = vst [vmem:[%s1295 + $0x58] sm:$0xff] %v1272
  %1308 = vst [vmem:[%s1295 + $0x60] sm:$0xff] %v1277
  %1309 = vst [vmem:[%s1295 + $0x68] sm:$0xff] %v1282
  %1310 = vst [vmem:[%s1295 + $0x70] sm:$0xff] %v1287
  %1311 = vst [vmem:[%s1295 + $0x78] sm:$0xff] %v1292
  %v1312 = vld [vmem:[%s0] sm:$0xff]
  %v1313 = vld [vmem:[%s0 + $0x8] sm:$0xff]
  %v1314 = vld [vmem:[%s0 + $0x10] sm:$0xff]
  %v1315 = vld [vmem:[%s0 + $0x18] sm:$0xff]
  %v1316 = vld [vmem:[%s0 + $0x20] sm:$0xff]
  %v1317 = vld [vmem:[%s0 + $0x28] sm:$0xff]
  %v1318 = vld [vmem:[%s0 + $0x30] sm:$0xff]
  %v1319 = vld [vmem:[%s0 + $0x38] sm:$0xff]
  %v1320 = vld [vmem:[%s0 + $0x40] sm:$0xff]
  %v1321 = vld [vmem:[%s0 + $0x48] sm:$0xff]
  %v1322 = vld [vmem:[%s0 + $0x50] sm:$0xff]
  %v1323 = vld [vmem:[%s0 + $0x58] sm:$0xff]
  %v1324 = vld [vmem:[%s0 + $0x60] sm:$0xff]
  %v1325 = vld [vmem:[%s0 + $0x68] sm:$0xff]
  %v1326 = vld [vmem:[%s0 + $0x70] sm:$0xff]
  %v1327 = vld [vmem:[%s0 + $0x78] sm:$0xff]
  %1328 = vset.pattern.permute.xlu0 4
  %1329 = vperm.xlu0 %1328, %v1312
  %v1330 = vpop.permute.xlu0 %1329
  %1331 = vset.pattern.permute.xlu0 4
  %1332 = vperm.xlu0 %1331, %v1313
  %v1333 = vpop.permute.xlu0 %1332
  %1334 = vset.pattern.permute.xlu0 4
  %1335 = vperm.xlu0 %1334, %v1314
  %v1336 = vpop.permute.xlu0 %1335
  %1337 = vset.pattern.permute.xlu0 4
  %1338 = vperm.xlu0 %1337, %v1315
  %v1339 = vpop.permute.xlu0 %1338
  %1340 = vset.pattern.permute.xlu0 4
  %1341 = vperm.xlu0 %1340, %v1316
  %v1342 = vpop.permute.xlu0 %1341
  %1343 = vset.pattern.permute.xlu0 4
  %1344 = vperm.xlu0 %1343, %v1317
  %v1345 = vpop.permute.xlu0 %1344
  %1346 = vset.pattern.permute.xlu0 4
  %1347 = vperm.xlu0 %1346, %v1318
  %v1348 = vpop.permute.xlu0 %1347
  %1349 = vset.pattern.permute.xlu0 4
  %1350 = vperm.xlu0 %1349, %v1319
  %v1351 = vpop.permute.xlu0 %1350
  %1352 = vset.pattern.permute.xlu0 4
  %1353 = vperm.xlu0 %1352, %v1320
  %v1354 = vpop.permute.xlu0 %1353
  %1355 = vset.pattern.permute.xlu0 4
  %1356 = vperm.xlu0 %1355, %v1321
  %v1357 = vpop.permute.xlu0 %1356
  %1358 = vset.pattern.permute.xlu0 4
  %1359 = vperm.xlu0 %1358, %v1322
  %v1360 = vpop.permute.xlu0 %1359
  %1361 = vset.pattern.permute.xlu0 4
  %1362 = vperm.xlu0 %1361, %v1323
  %v1363 = vpop.permute.xlu0 %1362
  %1364 = vset.pattern.permute.xlu0 4
  %1365 = vperm.xlu0 %1364, %v1324
  %v1366 = vpop.permute.xlu0 %1365
  %1367 = vset.pattern.permute.xlu0 4
  %1368 = vperm.xlu0 %1367, %v1325
  %v1369 = vpop.permute.xlu0 %1368
  %1370 = vset.pattern.permute.xlu0 4
  %1371 = vperm.xlu0 %1370, %v1326
  %v1372 = vpop.permute.xlu0 %1371
  %1373 = vset.pattern.permute.xlu0 4
  %1374 = vperm.xlu0 %1373, %v1327
  %v1375 = vpop.permute.xlu0 %1374
  %vm1376 = vcmp.eq.s32.totalorder %v19, %v1330
  %vm1377 = vcmp.eq.s32.totalorder %v19, %v1333
  %vm1378 = vcmp.eq.s32.totalorder %v19, %v1336
  %vm1379 = vcmp.eq.s32.totalorder %v19, %v1339
  %vm1380 = vcmp.eq.s32.totalorder %v19, %v1342
  %vm1381 = vcmp.eq.s32.totalorder %v19, %v1345
  %vm1382 = vcmp.eq.s32.totalorder %v19, %v1348
  %vm1383 = vcmp.eq.s32.totalorder %v19, %v1351
  %vm1384 = vcmp.eq.s32.totalorder %v19, %v1354
  %vm1385 = vcmp.eq.s32.totalorder %v19, %v1357
  %vm1386 = vcmp.eq.s32.totalorder %v19, %v1360
  %vm1387 = vcmp.eq.s32.totalorder %v19, %v1363
  %vm1388 = vcmp.eq.s32.totalorder %v19, %v1366
  %vm1389 = vcmp.eq.s32.totalorder %v19, %v1369
  %vm1390 = vcmp.eq.s32.totalorder %v19, %v1372
  %vm1391 = vcmp.eq.s32.totalorder %v19, %v1375
  %v1392 = vsel %vm1376, 1, 0
  %v1393 = vsel %vm1377, 1, 0
  %v1394 = vsel %vm1378, 1, 0
  %v1395 = vsel %vm1379, 1, 0
  %v1396 = vsel %vm1380, 1, 0
  %v1397 = vsel %vm1381, 1, 0
  %v1398 = vsel %vm1382, 1, 0
  %v1399 = vsel %vm1383, 1, 0
  %v1400 = vsel %vm1384, 1, 0
  %v1401 = vsel %vm1385, 1, 0
  %v1402 = vsel %vm1386, 1, 0
  %v1403 = vsel %vm1387, 1, 0
  %v1404 = vsel %vm1388, 1, 0
  %v1405 = vsel %vm1389, 1, 0
  %v1406 = vsel %vm1390, 1, 0
  %v1407 = vsel %vm1391, 1, 0
  %v1408 = vcvt.s32.f32 %v1392
  %v1409 = vcvt.s32.f32 %v1393
  %v1410 = vcvt.s32.f32 %v1394
  %v1411 = vcvt.s32.f32 %v1395
  %v1412 = vcvt.s32.f32 %v1396
  %v1413 = vcvt.s32.f32 %v1397
  %v1414 = vcvt.s32.f32 %v1398
  %v1415 = vcvt.s32.f32 %v1399
  %v1416 = vcvt.s32.f32 %v1400
  %v1417 = vcvt.s32.f32 %v1401
  %v1418 = vcvt.s32.f32 %v1402
  %v1419 = vcvt.s32.f32 %v1403
  %v1420 = vcvt.s32.f32 %v1404
  %v1421 = vcvt.s32.f32 %v1405
  %v1422 = vcvt.s32.f32 %v1406
  %v1423 = vcvt.s32.f32 %v1407
  %v1425 = vsel %vm132, %v1408, 0
  %v1428 = vsel %vm132, %v1409, 0
  %v1431 = vsel %vm132, %v1410, 0
  %v1434 = vsel %vm132, %v1411, 0
  %v1437 = vsel %vm132, %v1412, 0
  %v1440 = vsel %vm132, %v1413, 0
  %v1443 = vsel %vm132, %v1414, 0
  %v1446 = vsel %vm132, %v1415, 0
  %v1449 = vsel %vm132, %v1416, 0
  %v1452 = vsel %vm132, %v1417, 0
  %v1455 = vsel %vm132, %v1418, 0
  %v1458 = vsel %vm132, %v1419, 0
  %v1461 = vsel %vm132, %v1420, 0
  %v1464 = vsel %vm132, %v1421, 0
  %v1467 = vsel %vm132, %v1422, 0
  %v1470 = vsel %vm132, %v1423, 0
  %1472 = vmatprep.subr.mxu0 0.0
  %1473 = vmatpush1.msra.mxu0 %v14
  %1474 = vmatprep.subr.mxu0 0.0
  %1475 = vmatpush1.msra.mxu0 %v15
  %1476 = vmatprep.subr.mxu0 0.0
  %1477 = vmatpush1.msra.mxu0 %v16
  %1478 = vmatprep.subr.mxu0 0.0
  %1479 = vmatpush1.msra.mxu0 %v183
  %1480 = vmatprep.subr.mxu0 0.0
  %1481 = vmatpush1.msra.mxu0 0.0
  %1482 = vmatprep.subr.mxu0 0.0
  %1483 = vmatpush1.msra.mxu0 0.0
  %1484 = vmatprep.subr.mxu0 0.0
  %1485 = vmatpush1.msra.mxu0 0.0
  %1486 = vmatprep.subr.mxu0 0.0
  %1487 = vmatpush1.msra.mxu0 0.0
  %1488 = vmatprep.subr.mxu0 0.0
  %1489 = vmatpush1.msra.mxu0 0.0
  %1490 = vmatprep.subr.mxu0 0.0
  %1491 = vmatpush1.msra.mxu0 0.0
  %1492 = vmatprep.subr.mxu0 0.0
  %1493 = vmatpush1.msra.mxu0 0.0
  %1494 = vmatprep.subr.mxu0 0.0
  %1495 = vmatpush1.msra.mxu0 0.0
  %1496 = vmatprep.subr.mxu0 0.0
  %1497 = vmatpush1.msra.mxu0 0.0
  %1498 = vmatprep.subr.mxu0 0.0
  %1499 = vmatpush1.msra.mxu0 0.0
  %1500 = vmatprep.subr.mxu0 0.0
  %1501 = vmatpush1.msra.mxu0 0.0
  %1502 = vmatprep.subr.mxu0 0.0
  %1503 = vmatpush1.msra.mxu0 0.0
  %1504 = vmatprep.subr.mxu0 0.0
  %1505 = vmatpush1.msra.mxu0 0.0
  %1506 = vmatprep.subr.mxu0 0.0
  %1507 = vmatpush1.msra.mxu0 0.0
  %1508 = vmatprep.subr.mxu0 0.0
  %1509 = vmatpush1.msra.mxu0 0.0
  %1510 = vmatprep.subr.mxu0 0.0
  %1511 = vmatpush1.msra.mxu0 0.0
  %1512 = vmatprep.subr.mxu0 0.0
  %1513 = vmatpush1.msra.mxu0 0.0
  %1514 = vmatprep.subr.mxu0 0.0
  %1515 = vmatpush1.msra.mxu0 0.0
  %1516 = vmatprep.subr.mxu0 0.0
  %1517 = vmatpush1.msra.mxu0 0.0
  %1518 = vmatprep.subr.mxu0 0.0
  %1519 = vmatpush1.msra.mxu0 0.0
  %1520 = vmatprep.subr.mxu0 0.0
  %1521 = vmatpush1.msra.mxu0 0.0
  %1522 = vmatprep.subr.mxu0 0.0
  %1523 = vmatpush1.msra.mxu0 0.0
  %1524 = vmatprep.subr.mxu0 0.0
  %1525 = vmatpush1.msra.mxu0 0.0
  %1526 = vmatprep.subr.mxu0 0.0
  %1527 = vmatpush1.msra.mxu0 0.0
  %1528 = vmatprep.subr.mxu0 0.0
  %1529 = vmatpush1.msra.mxu0 0.0
  %1530 = vmatprep.subr.mxu0 0.0
  %1531 = vmatpush1.msra.mxu0 0.0
  %1532 = vmatprep.subr.mxu0 0.0
  %1533 = vmatpush1.msra.mxu0 0.0
  %1534 = vmatprep.subr.mxu0 0.0
  %1535 = vmatpush1.msra.mxu0 0.0
  %1536 = vmatprep.mubr.f32.mxu0 0.0
  %1537 = vmatmul.mubr.f32.gmra.mrb[0].mxu0 %v1425
  %v1538 = vpop.f32.mrb[0].mxu0
  %v1539 = vadd.f32 0.0, %v1538
  %v1540 = vpop.f32.mrb[0].mxu0
  %1541 = vmatprep.mubr.f32.mxu0 0.0
  %1542 = vmatmul.mubr.f32.gmra.mrb[0].mxu0 %v1428
  %v1543 = vpop.f32.mrb[0].mxu0
  %v1544 = vadd.f32 0.0, %v1543
  %v1545 = vpop.f32.mrb[0].mxu0
  %1546 = vmatprep.mubr.f32.mxu0 0.0
  %1547 = vmatmul.mubr.f32.gmra.mrb[0].mxu0 %v1431
  %v1548 = vpop.f32.mrb[0].mxu0
  %v1549 = vadd.f32 0.0, %v1548
  %v1550 = vpop.f32.mrb[0].mxu0
  %1551 = vmatprep.mubr.f32.mxu0 0.0
  %1552 = vmatmul.mubr.f32.gmra.mrb[0].mxu0 %v1434
  %v1553 = vpop.f32.mrb[0].mxu0
  %v1554 = vadd.f32 0.0, %v1553
  %v1555 = vpop.f32.mrb[0].mxu0
  %1556 = vmatprep.mubr.f32.mxu0 0.0
  %1557 = vmatmul.mubr.f32.gmra.mrb[0].mxu0 %v1437
  %v1558 = vpop.f32.mrb[0].mxu0
  %v1559 = vadd.f32 0.0, %v1558
  %v1560 = vpop.f32.mrb[0].mxu0
  %1561 = vmatprep.mubr.f32.mxu0 0.0
  %1562 = vmatmul.mubr.f32.gmra.mrb[0].mxu0 %v1440
  %v1563 = vpop.f32.mrb[0].mxu0
  %v1564 = vadd.f32 0.0, %v1563
  %v1565 = vpop.f32.mrb[0].mxu0
  %1566 = vmatprep.mubr.f32.mxu0 0.0
  %1567 = vmatmul.mubr.f32.gmra.mrb[0].mxu0 %v1443
  %v1568 = vpop.f32.mrb[0].mxu0
  %v1569 = vadd.f32 0.0, %v1568
  %v1570 = vpop.f32.mrb[0].mxu0
  %1571 = vmatprep.mubr.f32.mxu0 0.0
  %1572 = vmatmul.mubr.f32.gmra.mrb[0].mxu0 %v1446
  %v1573 = vpop.f32.mrb[0].mxu0
  %v1574 = vadd.f32 0.0, %v1573
  %v1575 = vpop.f32.mrb[0].mxu0
  %1576 = vmatprep.mubr.f32.mxu0 0.0
  %1577 = vmatmul.mubr.f32.gmra.mrb[0].mxu0 %v1449
  %v1578 = vpop.f32.mrb[0].mxu0
  %v1579 = vadd.f32 0.0, %v1578
  %v1580 = vpop.f32.mrb[0].mxu0
  %1581 = vmatprep.mubr.f32.mxu0 0.0
  %1582 = vmatmul.mubr.f32.gmra.mrb[0].mxu0 %v1452
  %v1583 = vpop.f32.mrb[0].mxu0
  %v1584 = vadd.f32 0.0, %v1583
  %v1585 = vpop.f32.mrb[0].mxu0
  %1586 = vmatprep.mubr.f32.mxu0 0.0
  %1587 = vmatmul.mubr.f32.gmra.mrb[0].mxu0 %v1455
  %v1588 = vpop.f32.mrb[0].mxu0
  %v1589 = vadd.f32 0.0, %v1588
  %v1590 = vpop.f32.mrb[0].mxu0
  %1591 = vmatprep.mubr.f32.mxu0 0.0
  %1592 = vmatmul.mubr.f32.gmra.mrb[0].mxu0 %v1458
  %v1593 = vpop.f32.mrb[0].mxu0
  %v1594 = vadd.f32 0.0, %v1593
  %v1595 = vpop.f32.mrb[0].mxu0
  %1596 = vmatprep.mubr.f32.mxu0 0.0
  %1597 = vmatmul.mubr.f32.gmra.mrb[0].mxu0 %v1461
  %v1598 = vpop.f32.mrb[0].mxu0
  %v1599 = vadd.f32 0.0, %v1598
  %v1600 = vpop.f32.mrb[0].mxu0
  %1601 = vmatprep.mubr.f32.mxu0 0.0
  %1602 = vmatmul.mubr.f32.gmra.mrb[0].mxu0 %v1464
  %v1603 = vpop.f32.mrb[0].mxu0
  %v1604 = vadd.f32 0.0, %v1603
  %v1605 = vpop.f32.mrb[0].mxu0
  %1606 = vmatprep.mubr.f32.mxu0 0.0
  %1607 = vmatmul.mubr.f32.gmra.mrb[0].mxu0 %v1467
  %v1608 = vpop.f32.mrb[0].mxu0
  %v1609 = vadd.f32 0.0, %v1608
  %v1610 = vpop.f32.mrb[0].mxu0
  %1611 = vmatprep.mubr.f32.mxu0 0.0
  %1612 = vmatmul.mubr.f32.gmra.mrb[0].mxu0 %v1470
  %v1613 = vpop.f32.mrb[0].mxu0
  %v1614 = vadd.f32 0.0, %v1613
  %v1615 = vpop.f32.mrb[0].mxu0
  %1616 = vdwg.mxu0
  %s1617 = scalar_lea.vmem [#allocation2], 512
  %1618 = vst [vmem:[%s1617] sm:$0xff] %v1539
  %1619 = vst [vmem:[%s1617 + $0x8] sm:$0xff] %v1544
  %1620 = vst [vmem:[%s1617 + $0x10] sm:$0xff] %v1549
  %1621 = vst [vmem:[%s1617 + $0x18] sm:$0xff] %v1554
  %1622 = vst [vmem:[%s1617 + $0x20] sm:$0xff] %v1559
  %1623 = vst [vmem:[%s1617 + $0x28] sm:$0xff] %v1564
  %1624 = vst [vmem:[%s1617 + $0x30] sm:$0xff] %v1569
  %1625 = vst [vmem:[%s1617 + $0x38] sm:$0xff] %v1574
  %1626 = vst [vmem:[%s1617 + $0x40] sm:$0xff] %v1579
  %1627 = vst [vmem:[%s1617 + $0x48] sm:$0xff] %v1584
  %1628 = vst [vmem:[%s1617 + $0x50] sm:$0xff] %v1589
  %1629 = vst [vmem:[%s1617 + $0x58] sm:$0xff] %v1594
  %1630 = vst [vmem:[%s1617 + $0x60] sm:$0xff] %v1599
  %1631 = vst [vmem:[%s1617 + $0x68] sm:$0xff] %v1604
  %1632 = vst [vmem:[%s1617 + $0x70] sm:$0xff] %v1609
  %1633 = vst [vmem:[%s1617 + $0x78] sm:$0xff] %v1614
  %v1634 = vld [vmem:[%s0] sm:$0xff]
  %v1635 = vld [vmem:[%s0 + $0x8] sm:$0xff]
  %v1636 = vld [vmem:[%s0 + $0x10] sm:$0xff]
  %v1637 = vld [vmem:[%s0 + $0x18] sm:$0xff]
  %v1638 = vld [vmem:[%s0 + $0x20] sm:$0xff]
  %v1639 = vld [vmem:[%s0 + $0x28] sm:$0xff]
  %v1640 = vld [vmem:[%s0 + $0x30] sm:$0xff]
  %v1641 = vld [vmem:[%s0 + $0x38] sm:$0xff]
  %v1642 = vld [vmem:[%s0 + $0x40] sm:$0xff]
  %v1643 = vld [vmem:[%s0 + $0x48] sm:$0xff]
  %v1644 = vld [vmem:[%s0 + $0x50] sm:$0xff]
  %v1645 = vld [vmem:[%s0 + $0x58] sm:$0xff]
  %v1646 = vld [vmem:[%s0 + $0x60] sm:$0xff]
  %v1647 = vld [vmem:[%s0 + $0x68] sm:$0xff]
  %v1648 = vld [vmem:[%s0 + $0x70] sm:$0xff]
  %v1649 = vld [vmem:[%s0 + $0x78] sm:$0xff]
  %1650 = vset.pattern.permute.xlu0 5
  %1651 = vperm.xlu0 %1650, %v1634
  %v1652 = vpop.permute.xlu0 %1651
  %1653 = vset.pattern.permute.xlu0 5
  %1654 = vperm.xlu0 %1653, %v1635
  %v1655 = vpop.permute.xlu0 %1654
  %1656 = vset.pattern.permute.xlu0 5
  %1657 = vperm.xlu0 %1656, %v1636
  %v1658 = vpop.permute.xlu0 %1657
  %1659 = vset.pattern.permute.xlu0 5
  %1660 = vperm.xlu0 %1659, %v1637
  %v1661 = vpop.permute.xlu0 %1660
  %1662 = vset.pattern.permute.xlu0 5
  %1663 = vperm.xlu0 %1662, %v1638
  %v1664 = vpop.permute.xlu0 %1663
  %1665 = vset.pattern.permute.xlu0 5
  %1666 = vperm.xlu0 %1665, %v1639
  %v1667 = vpop.permute.xlu0 %1666
  %1668 = vset.pattern.permute.xlu0 5
  %1669 = vperm.xlu0 %1668, %v1640
  %v1670 = vpop.permute.xlu0 %1669
  %1671 = vset.pattern.permute.xlu0 5
  %1672 = vperm.xlu0 %1671, %v1641
  %v1673 = vpop.permute.xlu0 %1672
  %1674 = vset.pattern.permute.xlu0 5
  %1675 = vperm.xlu0 %1674, %v1642
  %v1676 = vpop.permute.xlu0 %1675
  %1677 = vset.pattern.permute.xlu0 5
  %1678 = vperm.xlu0 %1677, %v1643
  %v1679 = vpop.permute.xlu0 %1678
  %1680 = vset.pattern.permute.xlu0 5
  %1681 = vperm.xlu0 %1680, %v1644
  %v1682 = vpop.permute.xlu0 %1681
  %1683 = vset.pattern.permute.xlu0 5
  %1684 = vperm.xlu0 %1683, %v1645
  %v1685 = vpop.permute.xlu0 %1684
  %1686 = vset.pattern.permute.xlu0 5
  %1687 = vperm.xlu0 %1686, %v1646
  %v1688 = vpop.permute.xlu0 %1687
  %1689 = vset.pattern.permute.xlu0 5
  %1690 = vperm.xlu0 %1689, %v1647
  %v1691 = vpop.permute.xlu0 %1690
  %1692 = vset.pattern.permute.xlu0 5
  %1693 = vperm.xlu0 %1692, %v1648
  %v1694 = vpop.permute.xlu0 %1693
  %1695 = vset.pattern.permute.xlu0 5
  %1696 = vperm.xlu0 %1695, %v1649
  %v1697 = vpop.permute.xlu0 %1696
  %vm1698 = vcmp.eq.s32.totalorder %v19, %v1652
  %vm1699 = vcmp.eq.s32.totalorder %v19, %v1655
  %vm1700 = vcmp.eq.s32.totalorder %v19, %v1658
  %vm1701 = vcmp.eq.s32.totalorder %v19, %v1661
  %vm1702 = vcmp.eq.s32.totalorder %v19, %v1664
  %vm1703 = vcmp.eq.s32.totalorder %v19, %v1667
  %vm1704 = vcmp.eq.s32.totalorder %v19, %v1670
  %vm1705 = vcmp.eq.s32.totalorder %v19, %v1673
  %vm1706 = vcmp.eq.s32.totalorder %v19, %v1676
  %vm1707 = vcmp.eq.s32.totalorder %v19, %v1679
  %vm1708 = vcmp.eq.s32.totalorder %v19, %v1682
  %vm1709 = vcmp.eq.s32.totalorder %v19, %v1685
  %vm1710 = vcmp.eq.s32.totalorder %v19, %v1688
  %vm1711 = vcmp.eq.s32.totalorder %v19, %v1691
  %vm1712 = vcmp.eq.s32.totalorder %v19, %v1694
  %vm1713 = vcmp.eq.s32.totalorder %v19, %v1697
  %v1714 = vsel %vm1698, 1, 0
  %v1715 = vsel %vm1699, 1, 0
  %v1716 = vsel %vm1700, 1, 0
  %v1717 = vsel %vm1701, 1, 0
  %v1718 = vsel %vm1702, 1, 0
  %v1719 = vsel %vm1703, 1, 0
  %v1720 = vsel %vm1704, 1, 0
  %v1721 = vsel %vm1705, 1, 0
  %v1722 = vsel %vm1706, 1, 0
  %v1723 = vsel %vm1707, 1, 0
  %v1724 = vsel %vm1708, 1, 0
  %v1725 = vsel %vm1709, 1, 0
  %v1726 = vsel %vm1710, 1, 0
  %v1727 = vsel %vm1711, 1, 0
  %v1728 = vsel %vm1712, 1, 0
  %v1729 = vsel %vm1713, 1, 0
  %v1730 = vcvt.s32.f32 %v1714
  %v1731 = vcvt.s32.f32 %v1715
  %v1732 = vcvt.s32.f32 %v1716
  %v1733 = vcvt.s32.f32 %v1717
  %v1734 = vcvt.s32.f32 %v1718
  %v1735 = vcvt.s32.f32 %v1719
  %v1736 = vcvt.s32.f32 %v1720
  %v1737 = vcvt.s32.f32 %v1721
  %v1738 = vcvt.s32.f32 %v1722
  %v1739 = vcvt.s32.f32 %v1723
  %v1740 = vcvt.s32.f32 %v1724
  %v1741 = vcvt.s32.f32 %v1725
  %v1742 = vcvt.s32.f32 %v1726
  %v1743 = vcvt.s32.f32 %v1727
  %v1744 = vcvt.s32.f32 %v1728
  %v1745 = vcvt.s32.f32 %v1729
  %v1747 = vsel %vm132, %v1730, 0
  %v1750 = vsel %vm132, %v1731, 0
  %v1753 = vsel %vm132, %v1732, 0
  %v1756 = vsel %vm132, %v1733, 0
  %v1759 = vsel %vm132, %v1734, 0
  %v1762 = vsel %vm132, %v1735, 0
  %v1765 = vsel %vm132, %v1736, 0
  %v1768 = vsel %vm132, %v1737, 0
  %v1771 = vsel %vm132, %v1738, 0
  %v1774 = vsel %vm132, %v1739, 0
  %v1777 = vsel %vm132, %v1740, 0
  %v1780 = vsel %vm132, %v1741, 0
  %v1783 = vsel %vm132, %v1742, 0
  %v1786 = vsel %vm132, %v1743, 0
  %v1789 = vsel %vm132, %v1744, 0
  %v1792 = vsel %vm132, %v1745, 0
  %1794 = vmatprep.subr.mxu0 0.0
  %1795 = vmatpush1.msra.mxu0 %v14
  %1796 = vmatprep.subr.mxu0 0.0
  %1797 = vmatpush1.msra.mxu0 %v15
  %1798 = vmatprep.subr.mxu0 0.0
  %1799 = vmatpush1.msra.mxu0 %v16
  %1800 = vmatprep.subr.mxu0 0.0
  %1801 = vmatpush1.msra.mxu0 %v183
  %1802 = vmatprep.subr.mxu0 0.0
  %1803 = vmatpush1.msra.mxu0 0.0
  %1804 = vmatprep.subr.mxu0 0.0
  %1805 = vmatpush1.msra.mxu0 0.0
  %1806 = vmatprep.subr.mxu0 0.0
  %1807 = vmatpush1.msra.mxu0 0.0
  %1808 = vmatprep.subr.mxu0 0.0
  %1809 = vmatpush1.msra.mxu0 0.0
  %1810 = vmatprep.subr.mxu0 0.0
  %1811 = vmatpush1.msra.mxu0 0.0
  %1812 = vmatprep.subr.mxu0 0.0
  %1813 = vmatpush1.msra.mxu0 0.0
  %1814 = vmatprep.subr.mxu0 0.0
  %1815 = vmatpush1.msra.mxu0 0.0
  %1816 = vmatprep.subr.mxu0 0.0
  %1817 = vmatpush1.msra.mxu0 0.0
  %1818 = vmatprep.subr.mxu0 0.0
  %1819 = vmatpush1.msra.mxu0 0.0
  %1820 = vmatprep.subr.mxu0 0.0
  %1821 = vmatpush1.msra.mxu0 0.0
  %1822 = vmatprep.subr.mxu0 0.0
  %1823 = vmatpush1.msra.mxu0 0.0
  %1824 = vmatprep.subr.mxu0 0.0
  %1825 = vmatpush1.msra.mxu0 0.0
  %1826 = vmatprep.subr.mxu0 0.0
  %1827 = vmatpush1.msra.mxu0 0.0
  %1828 = vmatprep.subr.mxu0 0.0
  %1829 = vmatpush1.msra.mxu0 0.0
  %1830 = vmatprep.subr.mxu0 0.0
  %1831 = vmatpush1.msra.mxu0 0.0
  %1832 = vmatprep.subr.mxu0 0.0
  %1833 = vmatpush1.msra.mxu0 0.0
  %1834 = vmatprep.subr.mxu0 0.0
  %1835 = vmatpush1.msra.mxu0 0.0
  %1836 = vmatprep.subr.mxu0 0.0
  %1837 = vmatpush1.msra.mxu0 0.0
  %1838 = vmatprep.subr.mxu0 0.0
  %1839 = vmatpush1.msra.mxu0 0.0
  %1840 = vmatprep.subr.mxu0 0.0
  %1841 = vmatpush1.msra.mxu0 0.0
  %1842 = vmatprep.subr.mxu0 0.0
  %1843 = vmatpush1.msra.mxu0 0.0
  %1844 = vmatprep.subr.mxu0 0.0
  %1845 = vmatpush1.msra.mxu0 0.0
  %1846 = vmatprep.subr.mxu0 0.0
  %1847 = vmatpush1.msra.mxu0 0.0
  %1848 = vmatprep.subr.mxu0 0.0
  %1849 = vmatpush1.msra.mxu0 0.0
  %1850 = vmatprep.subr.mxu0 0.0
  %1851 = vmatpush1.msra.mxu0 0.0
  %1852 = vmatprep.subr.mxu0 0.0
  %1853 = vmatpush1.msra.mxu0 0.0
  %1854 = vmatprep.subr.mxu0 0.0
  %1855 = vmatpush1.msra.mxu0 0.0
  %1856 = vmatprep.subr.mxu0 0.0
  %1857 = vmatpush1.msra.mxu0 0.0
  %1858 = vmatprep.mubr.f32.mxu0 0.0
  %1859 = vmatmul.mubr.f32.gmra.mrb[0].mxu0 %v1747
  %v1860 = vpop.f32.mrb[0].mxu0
  %v1861 = vadd.f32 0.0, %v1860
  %v1862 = vpop.f32.mrb[0].mxu0
  %1863 = vmatprep.mubr.f32.mxu0 0.0
  %1864 = vmatmul.mubr.f32.gmra.mrb[0].mxu0 %v1750
  %v1865 = vpop.f32.mrb[0].mxu0
  %v1866 = vadd.f32 0.0, %v1865
  %v1867 = vpop.f32.mrb[0].mxu0
  %1868 = vmatprep.mubr.f32.mxu0 0.0
  %1869 = vmatmul.mubr.f32.gmra.mrb[0].mxu0 %v1753
  %v1870 = vpop.f32.mrb[0].mxu0
  %v1871 = vadd.f32 0.0, %v1870
  %v1872 = vpop.f32.mrb[0].mxu0
  %1873 = vmatprep.mubr.f32.mxu0 0.0
  %1874 = vmatmul.mubr.f32.gmra.mrb[0].mxu0 %v1756
  %v1875 = vpop.f32.mrb[0].mxu0
  %v1876 = vadd.f32 0.0, %v1875
  %v1877 = vpop.f32.mrb[0].mxu0
  %1878 = vmatprep.mubr.f32.mxu0 0.0
  %1879 = vmatmul.mubr.f32.gmra.mrb[0].mxu0 %v1759
  %v1880 = vpop.f32.mrb[0].mxu0
  %v1881 = vadd.f32 0.0, %v1880
  %v1882 = vpop.f32.mrb[0].mxu0
  %1883 = vmatprep.mubr.f32.mxu0 0.0
  %1884 = vmatmul.mubr.f32.gmra.mrb[0].mxu0 %v1762
  %v1885 = vpop.f32.mrb[0].mxu0
  %v1886 = vadd.f32 0.0, %v1885
  %v1887 = vpop.f32.mrb[0].mxu0
  %1888 = vmatprep.mubr.f32.mxu0 0.0
  %1889 = vmatmul.mubr.f32.gmra.mrb[0].mxu0 %v1765
  %v1890 = vpop.f32.mrb[0].mxu0
  %v1891 = vadd.f32 0.0, %v1890
  %v1892 = vpop.f32.mrb[0].mxu0
  %1893 = vmatprep.mubr.f32.mxu0 0.0
  %1894 = vmatmul.mubr.f32.gmra.mrb[0].mxu0 %v1768
  %v1895 = vpop.f32.mrb[0].mxu0
  %v1896 = vadd.f32 0.0, %v1895
  %v1897 = vpop.f32.mrb[0].mxu0
  %1898 = vmatprep.mubr.f32.mxu0 0.0
  %1899 = vmatmul.mubr.f32.gmra.mrb[0].mxu0 %v1771
  %v1900 = vpop.f32.mrb[0].mxu0
  %v1901 = vadd.f32 0.0, %v1900
  %v1902 = vpop.f32.mrb[0].mxu0
  %1903 = vmatprep.mubr.f32.mxu0 0.0
  %1904 = vmatmul.mubr.f32.gmra.mrb[0].mxu0 %v1774
  %v1905 = vpop.f32.mrb[0].mxu0
  %v1906 = vadd.f32 0.0, %v1905
  %v1907 = vpop.f32.mrb[0].mxu0
  %1908 = vmatprep.mubr.f32.mxu0 0.0
  %1909 = vmatmul.mubr.f32.gmra.mrb[0].mxu0 %v1777
  %v1910 = vpop.f32.mrb[0].mxu0
  %v1911 = vadd.f32 0.0, %v1910
  %v1912 = vpop.f32.mrb[0].mxu0
  %1913 = vmatprep.mubr.f32.mxu0 0.0
  %1914 = vmatmul.mubr.f32.gmra.mrb[0].mxu0 %v1780
  %v1915 = vpop.f32.mrb[0].mxu0
  %v1916 = vadd.f32 0.0, %v1915
  %v1917 = vpop.f32.mrb[0].mxu0
  %1918 = vmatprep.mubr.f32.mxu0 0.0
  %1919 = vmatmul.mubr.f32.gmra.mrb[0].mxu0 %v1783
  %v1920 = vpop.f32.mrb[0].mxu0
  %v1921 = vadd.f32 0.0, %v1920
  %v1922 = vpop.f32.mrb[0].mxu0
  %1923 = vmatprep.mubr.f32.mxu0 0.0
  %1924 = vmatmul.mubr.f32.gmra.mrb[0].mxu0 %v1786
  %v1925 = vpop.f32.mrb[0].mxu0
  %v1926 = vadd.f32 0.0, %v1925
  %v1927 = vpop.f32.mrb[0].mxu0
  %1928 = vmatprep.mubr.f32.mxu0 0.0
  %1929 = vmatmul.mubr.f32.gmra.mrb[0].mxu0 %v1789
  %v1930 = vpop.f32.mrb[0].mxu0
  %v1931 = vadd.f32 0.0, %v1930
  %v1932 = vpop.f32.mrb[0].mxu0
  %1933 = vmatprep.mubr.f32.mxu0 0.0
  %1934 = vmatmul.mubr.f32.gmra.mrb[0].mxu0 %v1792
  %v1935 = vpop.f32.mrb[0].mxu0
  %v1936 = vadd.f32 0.0, %v1935
  %v1937 = vpop.f32.mrb[0].mxu0
  %1938 = vdwg.mxu0
  %s1939 = scalar_lea.vmem [#allocation2], 640
  %1940 = vst [vmem:[%s1939] sm:$0xff] %v1861
  %1941 = vst [vmem:[%s1939 + $0x8] sm:$0xff] %v1866
  %1942 = vst [vmem:[%s1939 + $0x10] sm:$0xff] %v1871
  %1943 = vst [vmem:[%s1939 + $0x18] sm:$0xff] %v1876
  %1944 = vst [vmem:[%s1939 + $0x20] sm:$0xff] %v1881
  %1945 = vst [vmem:[%s1939 + $0x28] sm:$0xff] %v1886
  %1946 = vst [vmem:[%s1939 + $0x30] sm:$0xff] %v1891
  %1947 = vst [vmem:[%s1939 + $0x38] sm:$0xff] %v1896
  %1948 = vst [vmem:[%s1939 + $0x40] sm:$0xff] %v1901
  %1949 = vst [vmem:[%s1939 + $0x48] sm:$0xff] %v1906
  %1950 = vst [vmem:[%s1939 + $0x50] sm:$0xff] %v1911
  %1951 = vst [vmem:[%s1939 + $0x58] sm:$0xff] %v1916
  %1952 = vst [vmem:[%s1939 + $0x60] sm:$0xff] %v1921
  %1953 = vst [vmem:[%s1939 + $0x68] sm:$0xff] %v1926
  %1954 = vst [vmem:[%s1939 + $0x70] sm:$0xff] %v1931
  %1955 = vst [vmem:[%s1939 + $0x78] sm:$0xff] %v1936
  %v1956 = vld [vmem:[%s2] sm:$0xff]
  %v1957 = vld [vmem:[%s2 + $0x8] sm:$0xff]
  %v1958 = vld [vmem:[%s2 + $0x10] sm:$0xff]
  %v1959 = vld [vmem:[%s2 + $0x18] sm:$0xff]
  %v1960 = vld [vmem:[#allocation2] sm:$0xff]
  %v1961 = vld [vmem:[#allocation2 + $0x8] sm:$0xff]
  %v1962 = vld [vmem:[#allocation2 + $0x10] sm:$0xff]
  %v1963 = vld [vmem:[#allocation2 + $0x18] sm:$0xff]
  %v1964 = vld [vmem:[#allocation2 + $0x20] sm:$0xff]
  %v1965 = vld [vmem:[#allocation2 + $0x28] sm:$0xff]
  %v1966 = vld [vmem:[#allocation2 + $0x30] sm:$0xff]
  %v1967 = vld [vmem:[#allocation2 + $0x38] sm:$0xff]
  %v1968 = vld [vmem:[#allocation2 + $0x40] sm:$0xff]
  %v1969 = vld [vmem:[#allocation2 + $0x48] sm:$0xff]
  %v1970 = vld [vmem:[#allocation2 + $0x50] sm:$0xff]
  %v1971 = vld [vmem:[#allocation2 + $0x58] sm:$0xff]
  %v1972 = vld [vmem:[#allocation2 + $0x60] sm:$0xff]
  %v1973 = vld [vmem:[#allocation2 + $0x68] sm:$0xff]
  %v1974 = vld [vmem:[#allocation2 + $0x70] sm:$0xff]
  %v1975 = vld [vmem:[#allocation2 + $0x78] sm:$0xff]
  %vm1976 = vcmask 261120
  %v1978 = vsel %vm1976, 0.0, 0
  %1980 = vmatprep.subr.mxu0 0.0
  %1981 = vmatpush1.msra.mxu0 %v1956
  %1982 = vmatprep.subr.mxu0 0.0
  %1983 = vmatpush1.msra.mxu0 %v1957
  %1984 = vmatprep.subr.mxu0 0.0
  %1985 = vmatpush1.msra.mxu0 %v1958
  %1986 = vmatprep.subr.mxu0 0.0
  %1987 = vmatpush1.msra.mxu0 %v1959
  %1988 = vmatprep.subr.mxu0 0.0
  %1989 = vmatpush1.msra.mxu0 0.0
  %1990 = vmatprep.subr.mxu0 0.0
  %1991 = vmatpush1.msra.mxu0 0.0
  %1992 = vmatprep.subr.mxu0 0.0
  %1993 = vmatpush1.msra.mxu0 0.0
  %1994 = vmatprep.subr.mxu0 0.0
  %1995 = vmatpush1.msra.mxu0 0.0
  %1996 = vmatprep.subr.mxu0 0.0
  %1997 = vmatpush1.msra.mxu0 0.0
  %1998 = vmatprep.subr.mxu0 0.0
  %1999 = vmatpush1.msra.mxu0 0.0
  %2000 = vmatprep.subr.mxu0 0.0
  %2001 = vmatpush1.msra.mxu0 0.0
  %2002 = vmatprep.subr.mxu0 0.0
  %2003 = vmatpush1.msra.mxu0 0.0
  %2004 = vmatprep.subr.mxu0 0.0
  %2005 = vmatpush1.msra.mxu0 0.0
  %2006 = vmatprep.subr.mxu0 0.0
  %2007 = vmatpush1.msra.mxu0 0.0
  %2008 = vmatprep.subr.mxu0 0.0
  %2009 = vmatpush1.msra.mxu0 0.0
  %2010 = vmatprep.subr.mxu0 0.0
  %2011 = vmatpush1.msra.mxu0 0.0
  %2012 = vmatprep.subr.mxu0 0.0
  %2013 = vmatpush1.msra.mxu0 0.0
  %2014 = vmatprep.subr.mxu0 0.0
  %2015 = vmatpush1.msra.mxu0 0.0
  %2016 = vmatprep.subr.mxu0 0.0
  %2017 = vmatpush1.msra.mxu0 0.0
  %2018 = vmatprep.subr.mxu0 0.0
  %2019 = vmatpush1.msra.mxu0 0.0
  %2020 = vmatprep.subr.mxu0 0.0
  %2021 = vmatpush1.msra.mxu0 0.0
  %2022 = vmatprep.subr.mxu0 0.0
  %2023 = vmatpush1.msra.mxu0 0.0
  %2024 = vmatprep.subr.mxu0 0.0
  %2025 = vmatpush1.msra.mxu0 0.0
  %2026 = vmatprep.subr.mxu0 0.0
  %2027 = vmatpush1.msra.mxu0 0.0
  %2028 = vmatprep.subr.mxu0 0.0
  %2029 = vmatpush1.msra.mxu0 0.0
  %2030 = vmatprep.subr.mxu0 0.0
  %2031 = vmatpush1.msra.mxu0 0.0
  %2032 = vmatprep.subr.mxu0 0.0
  %2033 = vmatpush1.msra.mxu0 0.0
  %2034 = vmatprep.subr.mxu0 0.0
  %2035 = vmatpush1.msra.mxu0 0.0
  %2036 = vmatprep.subr.mxu0 0.0
  %2037 = vmatpush1.msra.mxu0 0.0
  %2038 = vmatprep.subr.mxu0 0.0
  %2039 = vmatpush1.msra.mxu0 0.0
  %2040 = vmatprep.subr.mxu0 0.0
  %2041 = vmatpush1.msra.mxu0 0.0
  %2042 = vmatprep.subr.mxu0 0.0
  %2043 = vmatpush1.msra.mxu0 0.0
  %2044 = vmatprep.mubr.f32.mxu0 0.0
  %2045 = vmatmul.mubr.f32.gmra.mrb[0].mxu0 %v1978
  %v2046 = vpop.f32.mrb[0].mxu0
  %v2047 = vadd.f32 0.0, %v2046
  %v2048 = vpop.f32.mrb[0].mxu0
  %2049 = vmatprep.mubr.f32.mxu0 0.0
  %2050 = vmatmul.mubr.f32.gmra.mrb[0].mxu0 %v1978
  %v2051 = vpop.f32.mrb[0].mxu0
  %v2052 = vadd.f32 0.0, %v2051
  %v2053 = vpop.f32.mrb[0].mxu0
  %2054 = vmatprep.mubr.f32.mxu0 0.0
  %2055 = vmatmul.mubr.f32.gmra.mrb[0].mxu0 %v1978
  %v2056 = vpop.f32.mrb[0].mxu0
  %v2057 = vadd.f32 0.0, %v2056
  %v2058 = vpop.f32.mrb[0].mxu0
  %2059 = vmatprep.mubr.f32.mxu0 0.0
  %2060 = vmatmul.mubr.f32.gmra.mrb[0].mxu0 %v1978
  %v2061 = vpop.f32.mrb[0].mxu0
  %v2062 = vadd.f32 0.0, %v2061
  %v2063 = vpop.f32.mrb[0].mxu0
  %2064 = vmatprep.mubr.f32.mxu0 0.0
  %2065 = vmatmul.mubr.f32.gmra.mrb[0].mxu0 %v1978
  %v2066 = vpop.f32.mrb[0].mxu0
  %v2067 = vadd.f32 0.0, %v2066
  %v2068 = vpop.f32.mrb[0].mxu0
  %2069 = vmatprep.mubr.f32.mxu0 0.0
  %2070 = vmatmul.mubr.f32.gmra.mrb[0].mxu0 %v1978
  %v2071 = vpop.f32.mrb[0].mxu0
  %v2072 = vadd.f32 0.0, %v2071
  %v2073 = vpop.f32.mrb[0].mxu0
  %2074 = vmatprep.mubr.f32.mxu0 0.0
  %2075 = vmatmul.mubr.f32.gmra.mrb[0].mxu0 %v1978
  %v2076 = vpop.f32.mrb[0].mxu0
  %v2077 = vadd.f32 0.0, %v2076
  %v2078 = vpop.f32.mrb[0].mxu0
  %2079 = vmatprep.mubr.f32.mxu0 0.0
  %2080 = vmatmul.mubr.f32.gmra.mrb[0].mxu0 %v1978
  %v2081 = vpop.f32.mrb[0].mxu0
  %v2082 = vadd.f32 0.0, %v2081
  %v2083 = vpop.f32.mrb[0].mxu0
  %2084 = vmatprep.mubr.f32.mxu0 0.0
  %2085 = vmatmul.mubr.f32.gmra.mrb[0].mxu0 %v1978
  %v2086 = vpop.f32.mrb[0].mxu0
  %v2087 = vadd.f32 0.0, %v2086
  %v2088 = vpop.f32.mrb[0].mxu0
  %2089 = vmatprep.mubr.f32.mxu0 0.0
  %2090 = vmatmul.mubr.f32.gmra.mrb[0].mxu0 %v1978
  %v2091 = vpop.f32.mrb[0].mxu0
  %v2092 = vadd.f32 0.0, %v2091
  %v2093 = vpop.f32.mrb[0].mxu0
  %2094 = vmatprep.mubr.f32.mxu0 0.0
  %2095 = vmatmul.mubr.f32.gmra.mrb[0].mxu0 %v1978
  %v2096 = vpop.f32.mrb[0].mxu0
  %v2097 = vadd.f32 0.0, %v2096
  %v2098 = vpop.f32.mrb[0].mxu0
  %2099 = vmatprep.mubr.f32.mxu0 0.0
  %2100 = vmatmul.mubr.f32.gmra.mrb[0].mxu0 %v1978
  %v2101 = vpop.f32.mrb[0].mxu0
  %v2102 = vadd.f32 0.0, %v2101
  %v2103 = vpop.f32.mrb[0].mxu0
  %2104 = vmatprep.mubr.f32.mxu0 0.0
  %2105 = vmatmul.mubr.f32.gmra.mrb[0].mxu0 %v1978
  %v2106 = vpop.f32.mrb[0].mxu0
  %v2107 = vadd.f32 0.0, %v2106
  %v2108 = vpop.f32.mrb[0].mxu0
  %2109 = vmatprep.mubr.f32.mxu0 0.0
  %2110 = vmatmul.mubr.f32.gmra.mrb[0].mxu0 %v1978
  %v2111 = vpop.f32.mrb[0].mxu0
  %v2112 = vadd.f32 0.0, %v2111
  %v2113 = vpop.f32.mrb[0].mxu0
  %2114 = vmatprep.mubr.f32.mxu0 0.0
  %2115 = vmatmul.mubr.f32.gmra.mrb[0].mxu0 %v1978
  %v2116 = vpop.f32.mrb[0].mxu0
  %v2117 = vadd.f32 0.0, %v2116
  %v2118 = vpop.f32.mrb[0].mxu0
  %2119 = vmatprep.mubr.f32.mxu0 0.0
  %2120 = vmatmul.mubr.f32.gmra.mrb[0].mxu0 %v1978
  %v2121 = vpop.f32.mrb[0].mxu0
  %v2122 = vadd.f32 0.0, %v2121
  %v2123 = vpop.f32.mrb[0].mxu0
  %2124 = vdwg.mxu0
  %v2125 = vadd.f32 %v1960, %v2047
  %v2126 = vadd.f32 %v1961, %v2052
  %v2127 = vadd.f32 %v1962, %v2057
  %v2128 = vadd.f32 %v1963, %v2062
  %v2129 = vadd.f32 %v1964, %v2067
  %v2130 = vadd.f32 %v1965, %v2072
  %v2131 = vadd.f32 %v1966, %v2077
  %v2132 = vadd.f32 %v1967, %v2082
  %v2133 = vadd.f32 %v1968, %v2087
  %v2134 = vadd.f32 %v1969, %v2092
  %v2135 = vadd.f32 %v1970, %v2097
  %v2136 = vadd.f32 %v1971, %v2102
  %v2137 = vadd.f32 %v1972, %v2107
  %v2138 = vadd.f32 %v1973, %v2112
  %v2139 = vadd.f32 %v1974, %v2117
  %v2140 = vadd.f32 %v1975, %v2122
  %v2141 = vxor.u32 %v2125, 2147483648
  %v2142 = vxor.u32 %v2126, 2147483648
  %v2143 = vxor.u32 %v2127, 2147483648
  %v2144 = vxor.u32 %v2128, 2147483648
  %v2145 = vxor.u32 %v2129, 2147483648
  %v2146 = vxor.u32 %v2130, 2147483648
  %v2147 = vxor.u32 %v2131, 2147483648
  %v2148 = vxor.u32 %v2132, 2147483648
  %v2149 = vxor.u32 %v2133, 2147483648
  %v2150 = vxor.u32 %v2134, 2147483648
  %v2151 = vxor.u32 %v2135, 2147483648
  %v2152 = vxor.u32 %v2136, 2147483648
  %v2153 = vxor.u32 %v2137, 2147483648
  %v2154 = vxor.u32 %v2138, 2147483648
  %v2155 = vxor.u32 %v2139, 2147483648
  %v2156 = vxor.u32 %v2140, 2147483648
  %v2157 = vmul.f32 %v2141, 1.442695
  %v2158 = vpow.pop %v2157
  %v2159 = vmul.f32 %v2142, 1.442695
  %v2160 = vpow.pop %v2159
  %v2161 = vmul.f32 %v2143, 1.442695
  %v2162 = vpow.pop %v2161
  %v2163 = vmul.f32 %v2144, 1.442695
  %v2164 = vpow.pop %v2163
  %v2165 = vmul.f32 %v2145, 1.442695
  %v2166 = vpow.pop %v2165
  %v2167 = vmul.f32 %v2146, 1.442695
  %v2168 = vpow.pop %v2167
  %v2169 = vmul.f32 %v2147, 1.442695
  %v2170 = vpow.pop %v2169
  %v2171 = vmul.f32 %v2148, 1.442695
  %v2172 = vpow.pop %v2171
  %v2173 = vmul.f32 %v2149, 1.442695
  %v2174 = vpow.pop %v2173
  %v2175 = vmul.f32 %v2150, 1.442695
  %v2176 = vpow.pop %v2175
  %v2177 = vmul.f32 %v2151, 1.442695
  %v2178 = vpow.pop %v2177
  %v2179 = vmul.f32 %v2152, 1.442695
  %v2180 = vpow.pop %v2179
  %v2181 = vmul.f32 %v2153, 1.442695
  %v2182 = vpow.pop %v2181
  %v2183 = vmul.f32 %v2154, 1.442695
  %v2184 = vpow.pop %v2183
  %v2185 = vmul.f32 %v2155, 1.442695
  %v2186 = vpow.pop %v2185
  %v2187 = vmul.f32 %v2156, 1.442695
  %v2188 = vpow.pop %v2187
  %v2189 = vadd.f32 %v2158, 1.0
  %v2190 = vadd.f32 %v2160, 1.0
  %v2191 = vadd.f32 %v2162, 1.0
  %v2192 = vadd.f32 %v2164, 1.0
  %v2193 = vadd.f32 %v2166, 1.0
  %v2194 = vadd.f32 %v2168, 1.0
  %v2195 = vadd.f32 %v2170, 1.0
  %v2196 = vadd.f32 %v2172, 1.0
  %v2197 = vadd.f32 %v2174, 1.0
  %v2198 = vadd.f32 %v2176, 1.0
  %v2199 = vadd.f32 %v2178, 1.0
  %v2200 = vadd.f32 %v2180, 1.0
  %v2201 = vadd.f32 %v2182, 1.0
  %v2202 = vadd.f32 %v2184, 1.0
  %v2203 = vadd.f32 %v2186, 1.0
  %v2204 = vadd.f32 %v2188, 1.0
  %v2205 = vrcp.pop %v2189
  %v2206 = vmul.f32 1.0, %v2205
  %v2207 = vrcp.pop %v2190
  %v2208 = vmul.f32 1.0, %v2207
  %v2209 = vrcp.pop %v2191
  %v2210 = vmul.f32 1.0, %v2209
  %v2211 = vrcp.pop %v2192
  %v2212 = vmul.f32 1.0, %v2211
  %v2213 = vrcp.pop %v2193
  %v2214 = vmul.f32 1.0, %v2213
  %v2215 = vrcp.pop %v2194
  %v2216 = vmul.f32 1.0, %v2215
  %v2217 = vrcp.pop %v2195
  %v2218 = vmul.f32 1.0, %v2217
  %v2219 = vrcp.pop %v2196
  %v2220 = vmul.f32 1.0, %v2219
  %v2221 = vrcp.pop %v2197
  %v2222 = vmul.f32 1.0, %v2221
  %v2223 = vrcp.pop %v2198
  %v2224 = vmul.f32 1.0, %v2223
  %v2225 = vrcp.pop %v2199
  %v2226 = vmul.f32 1.0, %v2225
  %v2227 = vrcp.pop %v2200
  %v2228 = vmul.f32 1.0, %v2227
  %v2229 = vrcp.pop %v2201
  %v2230 = vmul.f32 1.0, %v2229
  %v2231 = vrcp.pop %v2202
  %v2232 = vmul.f32 1.0, %v2231
  %v2233 = vrcp.pop %v2203
  %v2234 = vmul.f32 1.0, %v2233
  %v2235 = vrcp.pop %v2204
  %v2236 = vmul.f32 1.0, %v2235
  %v2237 = vtanh.pop %v2125
  %v2238 = vtanh.pop %v2126
  %v2239 = vtanh.pop %v2127
  %v2240 = vtanh.pop %v2128
  %v2241 = vtanh.pop %v2129
  %v2242 = vtanh.pop %v2130
  %v2243 = vtanh.pop %v2131
  %v2244 = vtanh.pop %v2132
  %v2245 = vtanh.pop %v2133
  %v2246 = vtanh.pop %v2134
  %v2247 = vtanh.pop %v2135
  %v2248 = vtanh.pop %v2136
  %v2249 = vtanh.pop %v2137
  %v2250 = vtanh.pop %v2138
  %v2251 = vtanh.pop %v2139
  %v2252 = vtanh.pop %v2140
  %v2253 = vmul.f32 %v2206, 0.0
  %v2254 = vmul.f32 %v2208, 0.0
  %v2255 = vmul.f32 %v2210, 0.0
  %v2256 = vmul.f32 %v2212, 0.0
  %v2257 = vmul.f32 %v2214, 0.0
  %v2258 = vmul.f32 %v2216, 0.0
  %v2259 = vmul.f32 %v2218, 0.0
  %v2260 = vmul.f32 %v2220, 0.0
  %v2261 = vmul.f32 %v2222, 0.0
  %v2262 = vmul.f32 %v2224, 0.0
  %v2263 = vmul.f32 %v2226, 0.0
  %v2264 = vmul.f32 %v2228, 0.0
  %v2265 = vmul.f32 %v2230, 0.0
  %v2266 = vmul.f32 %v2232, 0.0
  %v2267 = vmul.f32 %v2234, 0.0
  %v2268 = vmul.f32 %v2236, 0.0
  %2285 = vrot.lane.b32.xlu0 %v2237, 64
  %v2286 = vpop.permute.xlu0 %2285
  %2287 = vrot.lane.b32.xlu0 %v2238, 64
  %v2288 = vpop.permute.xlu0 %2287
  %2289 = vrot.lane.b32.xlu0 %v2239, 64
  %v2290 = vpop.permute.xlu0 %2289
  %2291 = vrot.lane.b32.xlu0 %v2240, 64
  %v2292 = vpop.permute.xlu0 %2291
  %2293 = vrot.lane.b32.xlu0 %v2241, 64
  %v2294 = vpop.permute.xlu0 %2293
  %2295 = vrot.lane.b32.xlu0 %v2242, 64
  %v2296 = vpop.permute.xlu0 %2295
  %2297 = vrot.lane.b32.xlu0 %v2243, 64
  %v2298 = vpop.permute.xlu0 %2297
  %2299 = vrot.lane.b32.xlu0 %v2244, 64
  %v2300 = vpop.permute.xlu0 %2299
  %2301 = vrot.lane.b32.xlu0 %v2245, 64
  %v2302 = vpop.permute.xlu0 %2301
  %2303 = vrot.lane.b32.xlu0 %v2246, 64
  %v2304 = vpop.permute.xlu0 %2303
  %2305 = vrot.lane.b32.xlu0 %v2247, 64
  %v2306 = vpop.permute.xlu0 %2305
  %2307 = vrot.lane.b32.xlu0 %v2248, 64
  %v2308 = vpop.permute.xlu0 %2307
  %2309 = vrot.lane.b32.xlu0 %v2249, 64
  %v2310 = vpop.permute.xlu0 %2309
  %2311 = vrot.lane.b32.xlu0 %v2250, 64
  %v2312 = vpop.permute.xlu0 %2311
  %2313 = vrot.lane.b32.xlu0 %v2251, 64
  %v2314 = vpop.permute.xlu0 %2313
  %2315 = vrot.lane.b32.xlu0 %v2252, 64
  %v2316 = vpop.permute.xlu0 %2315
  %v2333 = vmul.f32 %v2206, %v2286
  %v2334 = vmul.f32 %v2208, %v2288
  %v2335 = vmul.f32 %v2210, %v2290
  %v2336 = vmul.f32 %v2212, %v2292
  %v2337 = vmul.f32 %v2214, %v2294
  %v2338 = vmul.f32 %v2216, %v2296
  %v2339 = vmul.f32 %v2218, %v2298
  %v2340 = vmul.f32 %v2220, %v2300
  %v2341 = vmul.f32 %v2222, %v2302
  %v2342 = vmul.f32 %v2224, %v2304
  %v2343 = vmul.f32 %v2226, %v2306
  %v2344 = vmul.f32 %v2228, %v2308
  %v2345 = vmul.f32 %v2230, %v2310
  %v2346 = vmul.f32 %v2232, %v2312
  %v2347 = vmul.f32 %v2234, %v2314
  %v2348 = vmul.f32 %v2236, %v2316
  %2365 = vrot.lane.b32.xlu0 %v2333, 32
  %v2366 = vpop.permute.xlu0 %2365
  %2367 = vrot.lane.b32.xlu0 %v2334, 32
  %v2368 = vpop.permute.xlu0 %2367
  %2369 = vrot.lane.b32.xlu0 %v2335, 32
  %v2370 = vpop.permute.xlu0 %2369
  %2371 = vrot.lane.b32.xlu0 %v2336, 32
  %v2372 = vpop.permute.xlu0 %2371
  %2373 = vrot.lane.b32.xlu0 %v2337, 32
  %v2374 = vpop.permute.xlu0 %2373
  %2375 = vrot.lane.b32.xlu0 %v2338, 32
  %v2376 = vpop.permute.xlu0 %2375
  %2377 = vrot.lane.b32.xlu0 %v2339, 32
  %v2378 = vpop.permute.xlu0 %2377
  %2379 = vrot.lane.b32.xlu0 %v2340, 32
  %v2380 = vpop.permute.xlu0 %2379
  %2381 = vrot.lane.b32.xlu0 %v2341, 32
  %v2382 = vpop.permute.xlu0 %2381
  %2383 = vrot.lane.b32.xlu0 %v2342, 32
  %v2384 = vpop.permute.xlu0 %2383
  %2385 = vrot.lane.b32.xlu0 %v2343, 32
  %v2386 = vpop.permute.xlu0 %2385
  %2387 = vrot.lane.b32.xlu0 %v2344, 32
  %v2388 = vpop.permute.xlu0 %2387
  %2389 = vrot.lane.b32.xlu0 %v2345, 32
  %v2390 = vpop.permute.xlu0 %2389
  %2391 = vrot.lane.b32.xlu0 %v2346, 32
  %v2392 = vpop.permute.xlu0 %2391
  %2393 = vrot.lane.b32.xlu0 %v2347, 32
  %v2394 = vpop.permute.xlu0 %2393
  %2395 = vrot.lane.b32.xlu0 %v2348, 32
  %v2396 = vpop.permute.xlu0 %2395
  %v2413 = vadd.f32 %v2253, %v2366
  %v2414 = vadd.f32 %v2254, %v2368
  %v2415 = vadd.f32 %v2255, %v2370
  %v2416 = vadd.f32 %v2256, %v2372
  %v2417 = vadd.f32 %v2257, %v2374
  %v2418 = vadd.f32 %v2258, %v2376
  %v2419 = vadd.f32 %v2259, %v2378
  %v2420 = vadd.f32 %v2260, %v2380
  %v2421 = vadd.f32 %v2261, %v2382
  %v2422 = vadd.f32 %v2262, %v2384
  %v2423 = vadd.f32 %v2263, %v2386
  %v2424 = vadd.f32 %v2264, %v2388
  %v2425 = vadd.f32 %v2265, %v2390
  %v2426 = vadd.f32 %v2266, %v2392
  %v2427 = vadd.f32 %v2267, %v2394
  %v2428 = vadd.f32 %v2268, %v2396
  %v2429 = vtanh.pop %v2413
  %v2430 = vtanh.pop %v2414
  %v2431 = vtanh.pop %v2415
  %v2432 = vtanh.pop %v2416
  %v2433 = vtanh.pop %v2417
  %v2434 = vtanh.pop %v2418
  %v2435 = vtanh.pop %v2419
  %v2436 = vtanh.pop %v2420
  %v2437 = vtanh.pop %v2421
  %v2438 = vtanh.pop %v2422
  %v2439 = vtanh.pop %v2423
  %v2440 = vtanh.pop %v2424
  %v2441 = vtanh.pop %v2425
  %v2442 = vtanh.pop %v2426
  %v2443 = vtanh.pop %v2427
  %v2444 = vtanh.pop %v2428
  %2461 = vrot.lane.b32.xlu0 %v2429, 64
  %v2462 = vpop.permute.xlu0 %2461
  %2463 = vrot.lane.b32.xlu0 %v2430, 64
  %v2464 = vpop.permute.xlu0 %2463
  %2465 = vrot.lane.b32.xlu0 %v2431, 64
  %v2466 = vpop.permute.xlu0 %2465
  %2467 = vrot.lane.b32.xlu0 %v2432, 64
  %v2468 = vpop.permute.xlu0 %2467
  %2469 = vrot.lane.b32.xlu0 %v2433, 64
  %v2470 = vpop.permute.xlu0 %2469
  %2471 = vrot.lane.b32.xlu0 %v2434, 64
  %v2472 = vpop.permute.xlu0 %2471
  %2473 = vrot.lane.b32.xlu0 %v2435, 64
  %v2474 = vpop.permute.xlu0 %2473
  %2475 = vrot.lane.b32.xlu0 %v2436, 64
  %v2476 = vpop.permute.xlu0 %2475
  %2477 = vrot.lane.b32.xlu0 %v2437, 64
  %v2478 = vpop.permute.xlu0 %2477
  %2479 = vrot.lane.b32.xlu0 %v2438, 64
  %v2480 = vpop.permute.xlu0 %2479
  %2481 = vrot.lane.b32.xlu0 %v2439, 64
  %v2482 = vpop.permute.xlu0 %2481
  %2483 = vrot.lane.b32.xlu0 %v2440, 64
  %v2484 = vpop.permute.xlu0 %2483
  %2485 = vrot.lane.b32.xlu0 %v2441, 64
  %v2486 = vpop.permute.xlu0 %2485
  %2487 = vrot.lane.b32.xlu0 %v2442, 64
  %v2488 = vpop.permute.xlu0 %2487
  %2489 = vrot.lane.b32.xlu0 %v2443, 64
  %v2490 = vpop.permute.xlu0 %2489
  %2491 = vrot.lane.b32.xlu0 %v2444, 64
  %v2492 = vpop.permute.xlu0 %2491
  %v2509 = vmul.f32 %v2206, %v2462
  %v2510 = vmul.f32 %v2208, %v2464
  %v2511 = vmul.f32 %v2210, %v2466
  %v2512 = vmul.f32 %v2212, %v2468
  %v2513 = vmul.f32 %v2214, %v2470
  %v2514 = vmul.f32 %v2216, %v2472
  %v2515 = vmul.f32 %v2218, %v2474
  %v2516 = vmul.f32 %v2220, %v2476
  %v2517 = vmul.f32 %v2222, %v2478
  %v2518 = vmul.f32 %v2224, %v2480
  %v2519 = vmul.f32 %v2226, %v2482
  %v2520 = vmul.f32 %v2228, %v2484
  %v2521 = vmul.f32 %v2230, %v2486
  %v2522 = vmul.f32 %v2232, %v2488
  %v2523 = vmul.f32 %v2234, %v2490
  %v2524 = vmul.f32 %v2236, %v2492
  %v2525 = vld [vmem:[%s651] sm:$0xff]
  %v2526 = vld [vmem:[%s651 + $0x8] sm:$0xff]
  %v2527 = vld [vmem:[%s651 + $0x10] sm:$0xff]
  %v2528 = vld [vmem:[%s651 + $0x18] sm:$0xff]
  %v2529 = vld [vmem:[%s651 + $0x20] sm:$0xff]
  %v2530 = vld [vmem:[%s651 + $0x28] sm:$0xff]
  %v2531 = vld [vmem:[%s651 + $0x30] sm:$0xff]
  %v2532 = vld [vmem:[%s651 + $0x38] sm:$0xff]
  %v2533 = vld [vmem:[%s651 + $0x40] sm:$0xff]
  %v2534 = vld [vmem:[%s651 + $0x48] sm:$0xff]
  %v2535 = vld [vmem:[%s651 + $0x50] sm:$0xff]
  %v2536 = vld [vmem:[%s651 + $0x58] sm:$0xff]
  %v2537 = vld [vmem:[%s651 + $0x60] sm:$0xff]
  %v2538 = vld [vmem:[%s651 + $0x68] sm:$0xff]
  %v2539 = vld [vmem:[%s651 + $0x70] sm:$0xff]
  %v2540 = vld [vmem:[%s651 + $0x78] sm:$0xff]
  %2557 = vrot.lane.b32.xlu0 %v2509, 32
  %v2558 = vpop.permute.xlu0 %2557
  %2559 = vrot.lane.b32.xlu0 %v2510, 32
  %v2560 = vpop.permute.xlu0 %2559
  %2561 = vrot.lane.b32.xlu0 %v2511, 32
  %v2562 = vpop.permute.xlu0 %2561
  %2563 = vrot.lane.b32.xlu0 %v2512, 32
  %v2564 = vpop.permute.xlu0 %2563
  %2565 = vrot.lane.b32.xlu0 %v2513, 32
  %v2566 = vpop.permute.xlu0 %2565
  %2567 = vrot.lane.b32.xlu0 %v2514, 32
  %v2568 = vpop.permute.xlu0 %2567
  %2569 = vrot.lane.b32.xlu0 %v2515, 32
  %v2570 = vpop.permute.xlu0 %2569
  %2571 = vrot.lane.b32.xlu0 %v2516, 32
  %v2572 = vpop.permute.xlu0 %2571
  %2573 = vrot.lane.b32.xlu0 %v2517, 32
  %v2574 = vpop.permute.xlu0 %2573
  %2575 = vrot.lane.b32.xlu0 %v2518, 32
  %v2576 = vpop.permute.xlu0 %2575
  %2577 = vrot.lane.b32.xlu0 %v2519, 32
  %v2578 = vpop.permute.xlu0 %2577
  %2579 = vrot.lane.b32.xlu0 %v2520, 32
  %v2580 = vpop.permute.xlu0 %2579
  %2581 = vrot.lane.b32.xlu0 %v2521, 32
  %v2582 = vpop.permute.xlu0 %2581
  %2583 = vrot.lane.b32.xlu0 %v2522, 32
  %v2584 = vpop.permute.xlu0 %2583
  %2585 = vrot.lane.b32.xlu0 %v2523, 32
  %v2586 = vpop.permute.xlu0 %2585
  %2587 = vrot.lane.b32.xlu0 %v2524, 32
  %v2588 = vpop.permute.xlu0 %2587
  %v2589 = vsel %vm1976, %v2558, 0
  %v2591 = vsel %vm1976, %v2560, 0
  %v2593 = vsel %vm1976, %v2562, 0
  %v2595 = vsel %vm1976, %v2564, 0
  %v2597 = vsel %vm1976, %v2566, 0
  %v2599 = vsel %vm1976, %v2568, 0
  %v2601 = vsel %vm1976, %v2570, 0
  %v2603 = vsel %vm1976, %v2572, 0
  %v2605 = vsel %vm1976, %v2574, 0
  %v2607 = vsel %vm1976, %v2576, 0
  %v2609 = vsel %vm1976, %v2578, 0
  %v2611 = vsel %vm1976, %v2580, 0
  %v2613 = vsel %vm1976, %v2582, 0
  %v2615 = vsel %vm1976, %v2584, 0
  %v2617 = vsel %vm1976, %v2586, 0
  %v2619 = vsel %vm1976, %v2588, 0
  %2621 = vmatprep.subr.mxu0 0.0
  %2622 = vmatpush1.msra.mxu0 %v1956
  %2623 = vmatprep.subr.mxu0 0.0
  %2624 = vmatpush1.msra.mxu0 %v1957
  %2625 = vmatprep.subr.mxu0 0.0
  %2626 = vmatpush1.msra.mxu0 %v1958
  %2627 = vmatprep.subr.mxu0 0.0
  %2628 = vmatpush1.msra.mxu0 %v1959
  %2629 = vmatprep.subr.mxu0 0.0
  %2630 = vmatpush1.msra.mxu0 0.0
  %2631 = vmatprep.subr.mxu0 0.0
  %2632 = vmatpush1.msra.mxu0 0.0
  %2633 = vmatprep.subr.mxu0 0.0
  %2634 = vmatpush1.msra.mxu0 0.0
  %2635 = vmatprep.subr.mxu0 0.0
  %2636 = vmatpush1.msra.mxu0 0.0
  %2637 = vmatprep.subr.mxu0 0.0
  %2638 = vmatpush1.msra.mxu0 0.0
  %2639 = vmatprep.subr.mxu0 0.0
  %2640 = vmatpush1.msra.mxu0 0.0
  %2641 = vmatprep.subr.mxu0 0.0
  %2642 = vmatpush1.msra.mxu0 0.0
  %2643 = vmatprep.subr.mxu0 0.0
  %2644 = vmatpush1.msra.mxu0 0.0
  %2645 = vmatprep.subr.mxu0 0.0
  %2646 = vmatpush1.msra.mxu0 0.0
  %2647 = vmatprep.subr.mxu0 0.0
  %2648 = vmatpush1.msra.mxu0 0.0
  %2649 = vmatprep.subr.mxu0 0.0
  %2650 = vmatpush1.msra.mxu0 0.0
  %2651 = vmatprep.subr.mxu0 0.0
  %2652 = vmatpush1.msra.mxu0 0.0
  %2653 = vmatprep.subr.mxu0 0.0
  %2654 = vmatpush1.msra.mxu0 0.0
  %2655 = vmatprep.subr.mxu0 0.0
  %2656 = vmatpush1.msra.mxu0 0.0
  %2657 = vmatprep.subr.mxu0 0.0
  %2658 = vmatpush1.msra.mxu0 0.0
  %2659 = vmatprep.subr.mxu0 0.0
  %2660 = vmatpush1.msra.mxu0 0.0
  %2661 = vmatprep.subr.mxu0 0.0
  %2662 = vmatpush1.msra.mxu0 0.0
  %2663 = vmatprep.subr.mxu0 0.0
  %2664 = vmatpush1.msra.mxu0 0.0
  %2665 = vmatprep.subr.mxu0 0.0
  %2666 = vmatpush1.msra.mxu0 0.0
  %2667 = vmatprep.subr.mxu0 0.0
  %2668 = vmatpush1.msra.mxu0 0.0
  %2669 = vmatprep.subr.mxu0 0.0
  %2670 = vmatpush1.msra.mxu0 0.0
  %2671 = vmatprep.subr.mxu0 0.0
  %2672 = vmatpush1.msra.mxu0 0.0
  %2673 = vmatprep.subr.mxu0 0.0
  %2674 = vmatpush1.msra.mxu0 0.0
  %2675 = vmatprep.subr.mxu0 0.0
  %2676 = vmatpush1.msra.mxu0 0.0
  %2677 = vmatprep.subr.mxu0 0.0
  %2678 = vmatpush1.msra.mxu0 0.0
  %2679 = vmatprep.subr.mxu0 0.0
  %2680 = vmatpush1.msra.mxu0 0.0
  %2681 = vmatprep.subr.mxu0 0.0
  %2682 = vmatpush1.msra.mxu0 0.0
  %2683 = vmatprep.subr.mxu0 0.0
  %2684 = vmatpush1.msra.mxu0 0.0
  %2685 = vmatprep.mubr.f32.mxu0 0.0
  %2686 = vmatmul.mubr.f32.gmra.mrb[0].mxu0 %v2589
  %v2687 = vpop.f32.mrb[0].mxu0
  %v2688 = vadd.f32 0.0, %v2687
  %v2689 = vpop.f32.mrb[0].mxu0
  %2690 = vmatprep.mubr.f32.mxu0 0.0
  %2691 = vmatmul.mubr.f32.gmra.mrb[0].mxu0 %v2591
  %v2692 = vpop.f32.mrb[0].mxu0
  %v2693 = vadd.f32 0.0, %v2692
  %v2694 = vpop.f32.mrb[0].mxu0
  %2695 = vmatprep.mubr.f32.mxu0 0.0
  %2696 = vmatmul.mubr.f32.gmra.mrb[0].mxu0 %v2593
  %v2697 = vpop.f32.mrb[0].mxu0
  %v2698 = vadd.f32 0.0, %v2697
  %v2699 = vpop.f32.mrb[0].mxu0
  %2700 = vmatprep.mubr.f32.mxu0 0.0
  %2701 = vmatmul.mubr.f32.gmra.mrb[0].mxu0 %v2595
  %v2702 = vpop.f32.mrb[0].mxu0
  %v2703 = vadd.f32 0.0, %v2702
  %v2704 = vpop.f32.mrb[0].mxu0
  %2705 = vmatprep.mubr.f32.mxu0 0.0
  %2706 = vmatmul.mubr.f32.gmra.mrb[0].mxu0 %v2597
  %v2707 = vpop.f32.mrb[0].mxu0
  %v2708 = vadd.f32 0.0, %v2707
  %v2709 = vpop.f32.mrb[0].mxu0
  %2710 = vmatprep.mubr.f32.mxu0 0.0
  %2711 = vmatmul.mubr.f32.gmra.mrb[0].mxu0 %v2599
  %v2712 = vpop.f32.mrb[0].mxu0
  %v2713 = vadd.f32 0.0, %v2712
  %v2714 = vpop.f32.mrb[0].mxu0
  %2715 = vmatprep.mubr.f32.mxu0 0.0
  %2716 = vmatmul.mubr.f32.gmra.mrb[0].mxu0 %v2601
  %v2717 = vpop.f32.mrb[0].mxu0
  %v2718 = vadd.f32 0.0, %v2717
  %v2719 = vpop.f32.mrb[0].mxu0
  %2720 = vmatprep.mubr.f32.mxu0 0.0
  %2721 = vmatmul.mubr.f32.gmra.mrb[0].mxu0 %v2603
  %v2722 = vpop.f32.mrb[0].mxu0
  %v2723 = vadd.f32 0.0, %v2722
  %v2724 = vpop.f32.mrb[0].mxu0
  %2725 = vmatprep.mubr.f32.mxu0 0.0
  %2726 = vmatmul.mubr.f32.gmra.mrb[0].mxu0 %v2605
  %v2727 = vpop.f32.mrb[0].mxu0
  %v2728 = vadd.f32 0.0, %v2727
  %v2729 = vpop.f32.mrb[0].mxu0
  %2730 = vmatprep.mubr.f32.mxu0 0.0
  %2731 = vmatmul.mubr.f32.gmra.mrb[0].mxu0 %v2607
  %v2732 = vpop.f32.mrb[0].mxu0
  %v2733 = vadd.f32 0.0, %v2732
  %v2734 = vpop.f32.mrb[0].mxu0
  %2735 = vmatprep.mubr.f32.mxu0 0.0
  %2736 = vmatmul.mubr.f32.gmra.mrb[0].mxu0 %v2609
  %v2737 = vpop.f32.mrb[0].mxu0
  %v2738 = vadd.f32 0.0, %v2737
  %v2739 = vpop.f32.mrb[0].mxu0
  %2740 = vmatprep.mubr.f32.mxu0 0.0
  %2741 = vmatmul.mubr.f32.gmra.mrb[0].mxu0 %v2611
  %v2742 = vpop.f32.mrb[0].mxu0
  %v2743 = vadd.f32 0.0, %v2742
  %v2744 = vpop.f32.mrb[0].mxu0
  %2745 = vmatprep.mubr.f32.mxu0 0.0
  %2746 = vmatmul.mubr.f32.gmra.mrb[0].mxu0 %v2613
  %v2747 = vpop.f32.mrb[0].mxu0
  %v2748 = vadd.f32 0.0, %v2747
  %v2749 = vpop.f32.mrb[0].mxu0
  %2750 = vmatprep.mubr.f32.mxu0 0.0
  %2751 = vmatmul.mubr.f32.gmra.mrb[0].mxu0 %v2615
  %v2752 = vpop.f32.mrb[0].mxu0
  %v2753 = vadd.f32 0.0, %v2752
  %v2754 = vpop.f32.mrb[0].mxu0
  %2755 = vmatprep.mubr.f32.mxu0 0.0
  %2756 = vmatmul.mubr.f32.gmra.mrb[0].mxu0 %v2617
  %v2757 = vpop.f32.mrb[0].mxu0
  %v2758 = vadd.f32 0.0, %v2757
  %v2759 = vpop.f32.mrb[0].mxu0
  %2760 = vmatprep.mubr.f32.mxu0 0.0
  %2761 = vmatmul.mubr.f32.gmra.mrb[0].mxu0 %v2619
  %v2762 = vpop.f32.mrb[0].mxu0
  %v2763 = vadd.f32 0.0, %v2762
  %v2764 = vpop.f32.mrb[0].mxu0
  %2765 = vdwg.mxu0
  %v2766 = vadd.f32 %v2525, %v2688
  %v2767 = vadd.f32 %v2526, %v2693
  %v2768 = vadd.f32 %v2527, %v2698
  %v2769 = vadd.f32 %v2528, %v2703
  %v2770 = vadd.f32 %v2529, %v2708
  %v2771 = vadd.f32 %v2530, %v2713
  %v2772 = vadd.f32 %v2531, %v2718
  %v2773 = vadd.f32 %v2532, %v2723
  %v2774 = vadd.f32 %v2533, %v2728
  %v2775 = vadd.f32 %v2534, %v2733
  %v2776 = vadd.f32 %v2535, %v2738
  %v2777 = vadd.f32 %v2536, %v2743
  %v2778 = vadd.f32 %v2537, %v2748
  %v2779 = vadd.f32 %v2538, %v2753
  %v2780 = vadd.f32 %v2539, %v2758
  %v2781 = vadd.f32 %v2540, %v2763
  %v2782 = vxor.u32 %v2766, 2147483648
  %v2783 = vxor.u32 %v2767, 2147483648
  %v2784 = vxor.u32 %v2768, 2147483648
  %v2785 = vxor.u32 %v2769, 2147483648
  %v2786 = vxor.u32 %v2770, 2147483648
  %v2787 = vxor.u32 %v2771, 2147483648
  %v2788 = vxor.u32 %v2772, 2147483648
  %v2789 = vxor.u32 %v2773, 2147483648
  %v2790 = vxor.u32 %v2774, 2147483648
  %v2791 = vxor.u32 %v2775, 2147483648
  %v2792 = vxor.u32 %v2776, 2147483648
  %v2793 = vxor.u32 %v2777, 2147483648
  %v2794 = vxor.u32 %v2778, 2147483648
  %v2795 = vxor.u32 %v2779, 2147483648
  %v2796 = vxor.u32 %v2780, 2147483648
  %v2797 = vxor.u32 %v2781, 2147483648
  %v2798 = vmul.f32 %v2782, 1.442695
  %v2799 = vpow.pop %v2798
  %v2800 = vmul.f32 %v2783, 1.442695
  %v2801 = vpow.pop %v2800
  %v2802 = vmul.f32 %v2784, 1.442695
  %v2803 = vpow.pop %v2802
  %v2804 = vmul.f32 %v2785, 1.442695
  %v2805 = vpow.pop %v2804
  %v2806 = vmul.f32 %v2786, 1.442695
  %v2807 = vpow.pop %v2806
  %v2808 = vmul.f32 %v2787, 1.442695
  %v2809 = vpow.pop %v2808
  %v2810 = vmul.f32 %v2788, 1.442695
  %v2811 = vpow.pop %v2810
  %v2812 = vmul.f32 %v2789, 1.442695
  %v2813 = vpow.pop %v2812
  %v2814 = vmul.f32 %v2790, 1.442695
  %v2815 = vpow.pop %v2814
  %v2816 = vmul.f32 %v2791, 1.442695
  %v2817 = vpow.pop %v2816
  %v2818 = vmul.f32 %v2792, 1.442695
  %v2819 = vpow.pop %v2818
  %v2820 = vmul.f32 %v2793, 1.442695
  %v2821 = vpow.pop %v2820
  %v2822 = vmul.f32 %v2794, 1.442695
  %v2823 = vpow.pop %v2822
  %v2824 = vmul.f32 %v2795, 1.442695
  %v2825 = vpow.pop %v2824
  %v2826 = vmul.f32 %v2796, 1.442695
  %v2827 = vpow.pop %v2826
  %v2828 = vmul.f32 %v2797, 1.442695
  %v2829 = vpow.pop %v2828
  %v2830 = vadd.f32 %v2799, 1.0
  %v2831 = vadd.f32 %v2801, 1.0
  %v2832 = vadd.f32 %v2803, 1.0
  %v2833 = vadd.f32 %v2805, 1.0
  %v2834 = vadd.f32 %v2807, 1.0
  %v2835 = vadd.f32 %v2809, 1.0
  %v2836 = vadd.f32 %v2811, 1.0
  %v2837 = vadd.f32 %v2813, 1.0
  %v2838 = vadd.f32 %v2815, 1.0
  %v2839 = vadd.f32 %v2817, 1.0
  %v2840 = vadd.f32 %v2819, 1.0
  %v2841 = vadd.f32 %v2821, 1.0
  %v2842 = vadd.f32 %v2823, 1.0
  %v2843 = vadd.f32 %v2825, 1.0
  %v2844 = vadd.f32 %v2827, 1.0
  %v2845 = vadd.f32 %v2829, 1.0
  %v2846 = vrcp.pop %v2830
  %v2847 = vmul.f32 1.0, %v2846
  %v2848 = vrcp.pop %v2831
  %v2849 = vmul.f32 1.0, %v2848
  %v2850 = vrcp.pop %v2832
  %v2851 = vmul.f32 1.0, %v2850
  %v2852 = vrcp.pop %v2833
  %v2853 = vmul.f32 1.0, %v2852
  %v2854 = vrcp.pop %v2834
  %v2855 = vmul.f32 1.0, %v2854
  %v2856 = vrcp.pop %v2835
  %v2857 = vmul.f32 1.0, %v2856
  %v2858 = vrcp.pop %v2836
  %v2859 = vmul.f32 1.0, %v2858
  %v2860 = vrcp.pop %v2837
  %v2861 = vmul.f32 1.0, %v2860
  %v2862 = vrcp.pop %v2838
  %v2863 = vmul.f32 1.0, %v2862
  %v2864 = vrcp.pop %v2839
  %v2865 = vmul.f32 1.0, %v2864
  %v2866 = vrcp.pop %v2840
  %v2867 = vmul.f32 1.0, %v2866
  %v2868 = vrcp.pop %v2841
  %v2869 = vmul.f32 1.0, %v2868
  %v2870 = vrcp.pop %v2842
  %v2871 = vmul.f32 1.0, %v2870
  %v2872 = vrcp.pop %v2843
  %v2873 = vmul.f32 1.0, %v2872
  %v2874 = vrcp.pop %v2844
  %v2875 = vmul.f32 1.0, %v2874
  %v2876 = vrcp.pop %v2845
  %v2877 = vmul.f32 1.0, %v2876
  %v2878 = vtanh.pop %v2766
  %v2879 = vtanh.pop %v2767
  %v2880 = vtanh.pop %v2768
  %v2881 = vtanh.pop %v2769
  %v2882 = vtanh.pop %v2770
  %v2883 = vtanh.pop %v2771
  %v2884 = vtanh.pop %v2772
  %v2885 = vtanh.pop %v2773
  %v2886 = vtanh.pop %v2774
  %v2887 = vtanh.pop %v2775
  %v2888 = vtanh.pop %v2776
  %v2889 = vtanh.pop %v2777
  %v2890 = vtanh.pop %v2778
  %v2891 = vtanh.pop %v2779
  %v2892 = vtanh.pop %v2780
  %v2893 = vtanh.pop %v2781
  %v2894 = vmul.f32 %v2847, %v2413
  %v2895 = vmul.f32 %v2849, %v2414
  %v2896 = vmul.f32 %v2851, %v2415
  %v2897 = vmul.f32 %v2853, %v2416
  %v2898 = vmul.f32 %v2855, %v2417
  %v2899 = vmul.f32 %v2857, %v2418
  %v2900 = vmul.f32 %v2859, %v2419
  %v2901 = vmul.f32 %v2861, %v2420
  %v2902 = vmul.f32 %v2863, %v2421
  %v2903 = vmul.f32 %v2865, %v2422
  %v2904 = vmul.f32 %v2867, %v2423
  %v2905 = vmul.f32 %v2869, %v2424
  %v2906 = vmul.f32 %v2871, %v2425
  %v2907 = vmul.f32 %v2873, %v2426
  %v2908 = vmul.f32 %v2875, %v2427
  %v2909 = vmul.f32 %v2877, %v2428
  %2926 = vrot.lane.b32.xlu0 %v2878, 64
  %v2927 = vpop.permute.xlu0 %2926
  %2928 = vrot.lane.b32.xlu0 %v2879, 64
  %v2929 = vpop.permute.xlu0 %2928
  %2930 = vrot.lane.b32.xlu0 %v2880, 64
  %v2931 = vpop.permute.xlu0 %2930
  %2932 = vrot.lane.b32.xlu0 %v2881, 64
  %v2933 = vpop.permute.xlu0 %2932
  %2934 = vrot.lane.b32.xlu0 %v2882, 64
  %v2935 = vpop.permute.xlu0 %2934
  %2936 = vrot.lane.b32.xlu0 %v2883, 64
  %v2937 = vpop.permute.xlu0 %2936
  %2938 = vrot.lane.b32.xlu0 %v2884, 64
  %v2939 = vpop.permute.xlu0 %2938
  %2940 = vrot.lane.b32.xlu0 %v2885, 64
  %v2941 = vpop.permute.xlu0 %2940
  %2942 = vrot.lane.b32.xlu0 %v2886, 64
  %v2943 = vpop.permute.xlu0 %2942
  %2944 = vrot.lane.b32.xlu0 %v2887, 64
  %v2945 = vpop.permute.xlu0 %2944
  %2946 = vrot.lane.b32.xlu0 %v2888, 64
  %v2947 = vpop.permute.xlu0 %2946
  %2948 = vrot.lane.b32.xlu0 %v2889, 64
  %v2949 = vpop.permute.xlu0 %2948
  %2950 = vrot.lane.b32.xlu0 %v2890, 64
  %v2951 = vpop.permute.xlu0 %2950
  %2952 = vrot.lane.b32.xlu0 %v2891, 64
  %v2953 = vpop.permute.xlu0 %2952
  %2954 = vrot.lane.b32.xlu0 %v2892, 64
  %v2955 = vpop.permute.xlu0 %2954
  %2956 = vrot.lane.b32.xlu0 %v2893, 64
  %v2957 = vpop.permute.xlu0 %2956
  %v2974 = vmul.f32 %v2847, %v2927
  %v2975 = vmul.f32 %v2849, %v2929
  %v2976 = vmul.f32 %v2851, %v2931
  %v2977 = vmul.f32 %v2853, %v2933
  %v2978 = vmul.f32 %v2855, %v2935
  %v2979 = vmul.f32 %v2857, %v2937
  %v2980 = vmul.f32 %v2859, %v2939
  %v2981 = vmul.f32 %v2861, %v2941
  %v2982 = vmul.f32 %v2863, %v2943
  %v2983 = vmul.f32 %v2865, %v2945
  %v2984 = vmul.f32 %v2867, %v2947
  %v2985 = vmul.f32 %v2869, %v2949
  %v2986 = vmul.f32 %v2871, %v2951
  %v2987 = vmul.f32 %v2873, %v2953
  %v2988 = vmul.f32 %v2875, %v2955
  %v2989 = vmul.f32 %v2877, %v2957
  %3006 = vrot.lane.b32.xlu0 %v2974, 32
  %v3007 = vpop.permute.xlu0 %3006
  %3008 = vrot.lane.b32.xlu0 %v2975, 32
  %v3009 = vpop.permute.xlu0 %3008
  %3010 = vrot.lane.b32.xlu0 %v2976, 32
  %v3011 = vpop.permute.xlu0 %3010
  %3012 = vrot.lane.b32.xlu0 %v2977, 32
  %v3013 = vpop.permute.xlu0 %3012
  %3014 = vrot.lane.b32.xlu0 %v2978, 32
  %v3015 = vpop.permute.xlu0 %3014
  %3016 = vrot.lane.b32.xlu0 %v2979, 32
  %v3017 = vpop.permute.xlu0 %3016
  %3018 = vrot.lane.b32.xlu0 %v2980, 32
  %v3019 = vpop.permute.xlu0 %3018
  %3020 = vrot.lane.b32.xlu0 %v2981, 32
  %v3021 = vpop.permute.xlu0 %3020
  %3022 = vrot.lane.b32.xlu0 %v2982, 32
  %v3023 = vpop.permute.xlu0 %3022
  %3024 = vrot.lane.b32.xlu0 %v2983, 32
  %v3025 = vpop.permute.xlu0 %3024
  %3026 = vrot.lane.b32.xlu0 %v2984, 32
  %v3027 = vpop.permute.xlu0 %3026
  %3028 = vrot.lane.b32.xlu0 %v2985, 32
  %v3029 = vpop.permute.xlu0 %3028
  %3030 = vrot.lane.b32.xlu0 %v2986, 32
  %v3031 = vpop.permute.xlu0 %3030
  %3032 = vrot.lane.b32.xlu0 %v2987, 32
  %v3033 = vpop.permute.xlu0 %3032
  %3034 = vrot.lane.b32.xlu0 %v2988, 32
  %v3035 = vpop.permute.xlu0 %3034
  %3036 = vrot.lane.b32.xlu0 %v2989, 32
  %v3037 = vpop.permute.xlu0 %3036
  %v3054 = vadd.f32 %v2894, %v3007
  %v3055 = vadd.f32 %v2895, %v3009
  %v3056 = vadd.f32 %v2896, %v3011
  %v3057 = vadd.f32 %v2897, %v3013
  %v3058 = vadd.f32 %v2898, %v3015
  %v3059 = vadd.f32 %v2899, %v3017
  %v3060 = vadd.f32 %v2900, %v3019
  %v3061 = vadd.f32 %v2901, %v3021
  %v3062 = vadd.f32 %v2902, %v3023
  %v3063 = vadd.f32 %v2903, %v3025
  %v3064 = vadd.f32 %v2904, %v3027
  %v3065 = vadd.f32 %v2905, %v3029
  %v3066 = vadd.f32 %v2906, %v3031
  %v3067 = vadd.f32 %v2907, %v3033
  %v3068 = vadd.f32 %v2908, %v3035
  %v3069 = vadd.f32 %v2909, %v3037
  %v3070 = vtanh.pop %v3054
  %v3071 = vtanh.pop %v3055
  %v3072 = vtanh.pop %v3056
  %v3073 = vtanh.pop %v3057
  %v3074 = vtanh.pop %v3058
  %v3075 = vtanh.pop %v3059
  %v3076 = vtanh.pop %v3060
  %v3077 = vtanh.pop %v3061
  %v3078 = vtanh.pop %v3062
  %v3079 = vtanh.pop %v3063
  %v3080 = vtanh.pop %v3064
  %v3081 = vtanh.pop %v3065
  %v3082 = vtanh.pop %v3066
  %v3083 = vtanh.pop %v3067
  %v3084 = vtanh.pop %v3068
  %v3085 = vtanh.pop %v3069
  %3102 = vrot.lane.b32.xlu0 %v3070, 64
  %v3103 = vpop.permute.xlu0 %3102
  %3104 = vrot.lane.b32.xlu0 %v3071, 64
  %v3105 = vpop.permute.xlu0 %3104
  %3106 = vrot.lane.b32.xlu0 %v3072, 64
  %v3107 = vpop.permute.xlu0 %3106
  %3108 = vrot.lane.b32.xlu0 %v3073, 64
  %v3109 = vpop.permute.xlu0 %3108
  %3110 = vrot.lane.b32.xlu0 %v3074, 64
  %v3111 = vpop.permute.xlu0 %3110
  %3112 = vrot.lane.b32.xlu0 %v3075, 64
  %v3113 = vpop.permute.xlu0 %3112
  %3114 = vrot.lane.b32.xlu0 %v3076, 64
  %v3115 = vpop.permute.xlu0 %3114
  %3116 = vrot.lane.b32.xlu0 %v3077, 64
  %v3117 = vpop.permute.xlu0 %3116
  %3118 = vrot.lane.b32.xlu0 %v3078, 64
  %v3119 = vpop.permute.xlu0 %3118
  %3120 = vrot.lane.b32.xlu0 %v3079, 64
  %v3121 = vpop.permute.xlu0 %3120
  %3122 = vrot.lane.b32.xlu0 %v3080, 64
  %v3123 = vpop.permute.xlu0 %3122
  %3124 = vrot.lane.b32.xlu0 %v3081, 64
  %v3125 = vpop.permute.xlu0 %3124
  %3126 = vrot.lane.b32.xlu0 %v3082, 64
  %v3127 = vpop.permute.xlu0 %3126
  %3128 = vrot.lane.b32.xlu0 %v3083, 64
  %v3129 = vpop.permute.xlu0 %3128
  %3130 = vrot.lane.b32.xlu0 %v3084, 64
  %v3131 = vpop.permute.xlu0 %3130
  %3132 = vrot.lane.b32.xlu0 %v3085, 64
  %v3133 = vpop.permute.xlu0 %3132
  %v3150 = vmul.f32 %v2847, %v3103
  %v3151 = vmul.f32 %v2849, %v3105
  %v3152 = vmul.f32 %v2851, %v3107
  %v3153 = vmul.f32 %v2853, %v3109
  %v3154 = vmul.f32 %v2855, %v3111
  %v3155 = vmul.f32 %v2857, %v3113
  %v3156 = vmul.f32 %v2859, %v3115
  %v3157 = vmul.f32 %v2861, %v3117
  %v3158 = vmul.f32 %v2863, %v3119
  %v3159 = vmul.f32 %v2865, %v3121
  %v3160 = vmul.f32 %v2867, %v3123
  %v3161 = vmul.f32 %v2869, %v3125
  %v3162 = vmul.f32 %v2871, %v3127
  %v3163 = vmul.f32 %v2873, %v3129
  %v3164 = vmul.f32 %v2875, %v3131
  %v3165 = vmul.f32 %v2877, %v3133
  %v3166 = vld [vmem:[%s973] sm:$0xff]
  %v3167 = vld [vmem:[%s973 + $0x8] sm:$0xff]
  %v3168 = vld [vmem:[%s973 + $0x10] sm:$0xff]
  %v3169 = vld [vmem:[%s973 + $0x18] sm:$0xff]
  %v3170 = vld [vmem:[%s973 + $0x20] sm:$0xff]
  %v3171 = vld [vmem:[%s973 + $0x28] sm:$0xff]
  %v3172 = vld [vmem:[%s973 + $0x30] sm:$0xff]
  %v3173 = vld [vmem:[%s973 + $0x38] sm:$0xff]
  %v3174 = vld [vmem:[%s973 + $0x40] sm:$0xff]
  %v3175 = vld [vmem:[%s973 + $0x48] sm:$0xff]
  %v3176 = vld [vmem:[%s973 + $0x50] sm:$0xff]
  %v3177 = vld [vmem:[%s973 + $0x58] sm:$0xff]
  %v3178 = vld [vmem:[%s973 + $0x60] sm:$0xff]
  %v3179 = vld [vmem:[%s973 + $0x68] sm:$0xff]
  %v3180 = vld [vmem:[%s973 + $0x70] sm:$0xff]
  %v3181 = vld [vmem:[%s973 + $0x78] sm:$0xff]
  %3198 = vrot.lane.b32.xlu0 %v3150, 32
  %v3199 = vpop.permute.xlu0 %3198
  %3200 = vrot.lane.b32.xlu0 %v3151, 32
  %v3201 = vpop.permute.xlu0 %3200
  %3202 = vrot.lane.b32.xlu0 %v3152, 32
  %v3203 = vpop.permute.xlu0 %3202
  %3204 = vrot.lane.b32.xlu0 %v3153, 32
  %v3205 = vpop.permute.xlu0 %3204
  %3206 = vrot.lane.b32.xlu0 %v3154, 32
  %v3207 = vpop.permute.xlu0 %3206
  %3208 = vrot.lane.b32.xlu0 %v3155, 32
  %v3209 = vpop.permute.xlu0 %3208
  %3210 = vrot.lane.b32.xlu0 %v3156, 32
  %v3211 = vpop.permute.xlu0 %3210
  %3212 = vrot.lane.b32.xlu0 %v3157, 32
  %v3213 = vpop.permute.xlu0 %3212
  %3214 = vrot.lane.b32.xlu0 %v3158, 32
  %v3215 = vpop.permute.xlu0 %3214
  %3216 = vrot.lane.b32.xlu0 %v3159, 32
  %v3217 = vpop.permute.xlu0 %3216
  %3218 = vrot.lane.b32.xlu0 %v3160, 32
  %v3219 = vpop.permute.xlu0 %3218
  %3220 = vrot.lane.b32.xlu0 %v3161, 32
  %v3221 = vpop.permute.xlu0 %3220
  %3222 = vrot.lane.b32.xlu0 %v3162, 32
  %v3223 = vpop.permute.xlu0 %3222
  %3224 = vrot.lane.b32.xlu0 %v3163, 32
  %v3225 = vpop.permute.xlu0 %3224
  %3226 = vrot.lane.b32.xlu0 %v3164, 32
  %v3227 = vpop.permute.xlu0 %3226
  %3228 = vrot.lane.b32.xlu0 %v3165, 32
  %v3229 = vpop.permute.xlu0 %3228
  %v3230 = vsel %vm1976, %v3199, 0
  %v3232 = vsel %vm1976, %v3201, 0
  %v3234 = vsel %vm1976, %v3203, 0
  %v3236 = vsel %vm1976, %v3205, 0
  %v3238 = vsel %vm1976, %v3207, 0
  %v3240 = vsel %vm1976, %v3209, 0
  %v3242 = vsel %vm1976, %v3211, 0
  %v3244 = vsel %vm1976, %v3213, 0
  %v3246 = vsel %vm1976, %v3215, 0
  %v3248 = vsel %vm1976, %v3217, 0
  %v3250 = vsel %vm1976, %v3219, 0
  %v3252 = vsel %vm1976, %v3221, 0
  %v3254 = vsel %vm1976, %v3223, 0
  %v3256 = vsel %vm1976, %v3225, 0
  %v3258 = vsel %vm1976, %v3227, 0
  %v3260 = vsel %vm1976, %v3229, 0
  %3262 = vmatprep.subr.mxu0 0.0
  %3263 = vmatpush1.msra.mxu0 %v1956
  %3264 = vmatprep.subr.mxu0 0.0
  %3265 = vmatpush1.msra.mxu0 %v1957
  %3266 = vmatprep.subr.mxu0 0.0
  %3267 = vmatpush1.msra.mxu0 %v1958
  %3268 = vmatprep.subr.mxu0 0.0
  %3269 = vmatpush1.msra.mxu0 %v1959
  %3270 = vmatprep.subr.mxu0 0.0
  %3271 = vmatpush1.msra.mxu0 0.0
  %3272 = vmatprep.subr.mxu0 0.0
  %3273 = vmatpush1.msra.mxu0 0.0
  %3274 = vmatprep.subr.mxu0 0.0
  %3275 = vmatpush1.msra.mxu0 0.0
  %3276 = vmatprep.subr.mxu0 0.0
  %3277 = vmatpush1.msra.mxu0 0.0
  %3278 = vmatprep.subr.mxu0 0.0
  %3279 = vmatpush1.msra.mxu0 0.0
  %3280 = vmatprep.subr.mxu0 0.0
  %3281 = vmatpush1.msra.mxu0 0.0
  %3282 = vmatprep.subr.mxu0 0.0
  %3283 = vmatpush1.msra.mxu0 0.0
  %3284 = vmatprep.subr.mxu0 0.0
  %3285 = vmatpush1.msra.mxu0 0.0
  %3286 = vmatprep.subr.mxu0 0.0
  %3287 = vmatpush1.msra.mxu0 0.0
  %3288 = vmatprep.subr.mxu0 0.0
  %3289 = vmatpush1.msra.mxu0 0.0
  %3290 = vmatprep.subr.mxu0 0.0
  %3291 = vmatpush1.msra.mxu0 0.0
  %3292 = vmatprep.subr.mxu0 0.0
  %3293 = vmatpush1.msra.mxu0 0.0
  %3294 = vmatprep.subr.mxu0 0.0
  %3295 = vmatpush1.msra.mxu0 0.0
  %3296 = vmatprep.subr.mxu0 0.0
  %3297 = vmatpush1.msra.mxu0 0.0
  %3298 = vmatprep.subr.mxu0 0.0
  %3299 = vmatpush1.msra.mxu0 0.0
  %3300 = vmatprep.subr.mxu0 0.0
  %3301 = vmatpush1.msra.mxu0 0.0
  %3302 = vmatprep.subr.mxu0 0.0
  %3303 = vmatpush1.msra.mxu0 0.0
  %3304 = vmatprep.subr.mxu0 0.0
  %3305 = vmatpush1.msra.mxu0 0.0
  %3306 = vmatprep.subr.mxu0 0.0
  %3307 = vmatpush1.msra.mxu0 0.0
  %3308 = vmatprep.subr.mxu0 0.0
  %3309 = vmatpush1.msra.mxu0 0.0
  %3310 = vmatprep.subr.mxu0 0.0
  %3311 = vmatpush1.msra.mxu0 0.0
  %3312 = vmatprep.subr.mxu0 0.0
  %3313 = vmatpush1.msra.mxu0 0.0
  %3314 = vmatprep.subr.mxu0 0.0
  %3315 = vmatpush1.msra.mxu0 0.0
  %3316 = vmatprep.subr.mxu0 0.0
  %3317 = vmatpush1.msra.mxu0 0.0
  %3318 = vmatprep.subr.mxu0 0.0
  %3319 = vmatpush1.msra.mxu0 0.0
  %3320 = vmatprep.subr.mxu0 0.0
  %3321 = vmatpush1.msra.mxu0 0.0
  %3322 = vmatprep.subr.mxu0 0.0
  %3323 = vmatpush1.msra.mxu0 0.0
  %3324 = vmatprep.subr.mxu0 0.0
  %3325 = vmatpush1.msra.mxu0 0.0
  %3326 = vmatprep.mubr.f32.mxu0 0.0
  %3327 = vmatmul.mubr.f32.gmra.mrb[0].mxu0 %v3230
  %v3328 = vpop.f32.mrb[0].mxu0
  %v3329 = vadd.f32 0.0, %v3328
  %v3330 = vpop.f32.mrb[0].mxu0
  %3331 = vmatprep.mubr.f32.mxu0 0.0
  %3332 = vmatmul.mubr.f32.gmra.mrb[0].mxu0 %v3232
  %v3333 = vpop.f32.mrb[0].mxu0
  %v3334 = vadd.f32 0.0, %v3333
  %v3335 = vpop.f32.mrb[0].mxu0
  %3336 = vmatprep.mubr.f32.mxu0 0.0
  %3337 = vmatmul.mubr.f32.gmra.mrb[0].mxu0 %v3234
  %v3338 = vpop.f32.mrb[0].mxu0
  %v3339 = vadd.f32 0.0, %v3338
  %v3340 = vpop.f32.mrb[0].mxu0
  %3341 = vmatprep.mubr.f32.mxu0 0.0
  %3342 = vmatmul.mubr.f32.gmra.mrb[0].mxu0 %v3236
  %v3343 = vpop.f32.mrb[0].mxu0
  %v3344 = vadd.f32 0.0, %v3343
  %v3345 = vpop.f32.mrb[0].mxu0
  %3346 = vmatprep.mubr.f32.mxu0 0.0
  %3347 = vmatmul.mubr.f32.gmra.mrb[0].mxu0 %v3238
  %v3348 = vpop.f32.mrb[0].mxu0
  %v3349 = vadd.f32 0.0, %v3348
  %v3350 = vpop.f32.mrb[0].mxu0
  %3351 = vmatprep.mubr.f32.mxu0 0.0
  %3352 = vmatmul.mubr.f32.gmra.mrb[0].mxu0 %v3240
  %v3353 = vpop.f32.mrb[0].mxu0
  %v3354 = vadd.f32 0.0, %v3353
  %v3355 = vpop.f32.mrb[0].mxu0
  %3356 = vmatprep.mubr.f32.mxu0 0.0
  %3357 = vmatmul.mubr.f32.gmra.mrb[0].mxu0 %v3242
  %v3358 = vpop.f32.mrb[0].mxu0
  %v3359 = vadd.f32 0.0, %v3358
  %v3360 = vpop.f32.mrb[0].mxu0
  %3361 = vmatprep.mubr.f32.mxu0 0.0
  %3362 = vmatmul.mubr.f32.gmra.mrb[0].mxu0 %v3244
  %v3363 = vpop.f32.mrb[0].mxu0
  %v3364 = vadd.f32 0.0, %v3363
  %v3365 = vpop.f32.mrb[0].mxu0
  %3366 = vmatprep.mubr.f32.mxu0 0.0
  %3367 = vmatmul.mubr.f32.gmra.mrb[0].mxu0 %v3246
  %v3368 = vpop.f32.mrb[0].mxu0
  %v3369 = vadd.f32 0.0, %v3368
  %v3370 = vpop.f32.mrb[0].mxu0
  %3371 = vmatprep.mubr.f32.mxu0 0.0
  %3372 = vmatmul.mubr.f32.gmra.mrb[0].mxu0 %v3248
  %v3373 = vpop.f32.mrb[0].mxu0
  %v3374 = vadd.f32 0.0, %v3373
  %v3375 = vpop.f32.mrb[0].mxu0
  %3376 = vmatprep.mubr.f32.mxu0 0.0
  %3377 = vmatmul.mubr.f32.gmra.mrb[0].mxu0 %v3250
  %v3378 = vpop.f32.mrb[0].mxu0
  %v3379 = vadd.f32 0.0, %v3378
  %v3380 = vpop.f32.mrb[0].mxu0
  %3381 = vmatprep.mubr.f32.mxu0 0.0
  %3382 = vmatmul.mubr.f32.gmra.mrb[0].mxu0 %v3252
  %v3383 = vpop.f32.mrb[0].mxu0
  %v3384 = vadd.f32 0.0, %v3383
  %v3385 = vpop.f32.mrb[0].mxu0
  %3386 = vmatprep.mubr.f32.mxu0 0.0
  %3387 = vmatmul.mubr.f32.gmra.mrb[0].mxu0 %v3254
  %v3388 = vpop.f32.mrb[0].mxu0
  %v3389 = vadd.f32 0.0, %v3388
  %v3390 = vpop.f32.mrb[0].mxu0
  %3391 = vmatprep.mubr.f32.mxu0 0.0
  %3392 = vmatmul.mubr.f32.gmra.mrb[0].mxu0 %v3256
  %v3393 = vpop.f32.mrb[0].mxu0
  %v3394 = vadd.f32 0.0, %v3393
  %v3395 = vpop.f32.mrb[0].mxu0
  %3396 = vmatprep.mubr.f32.mxu0 0.0
  %3397 = vmatmul.mubr.f32.gmra.mrb[0].mxu0 %v3258
  %v3398 = vpop.f32.mrb[0].mxu0
  %v3399 = vadd.f32 0.0, %v3398
  %v3400 = vpop.f32.mrb[0].mxu0
  %3401 = vmatprep.mubr.f32.mxu0 0.0
  %3402 = vmatmul.mubr.f32.gmra.mrb[0].mxu0 %v3260
  %v3403 = vpop.f32.mrb[0].mxu0
  %v3404 = vadd.f32 0.0, %v3403
  %v3405 = vpop.f32.mrb[0].mxu0
  %3406 = vdwg.mxu0
  %v3407 = vadd.f32 %v3166, %v3329
  %v3408 = vadd.f32 %v3167, %v3334
  %v3409 = vadd.f32 %v3168, %v3339
  %v3410 = vadd.f32 %v3169, %v3344
  %v3411 = vadd.f32 %v3170, %v3349
  %v3412 = vadd.f32 %v3171, %v3354
  %v3413 = vadd.f32 %v3172, %v3359
  %v3414 = vadd.f32 %v3173, %v3364
  %v3415 = vadd.f32 %v3174, %v3369
  %v3416 = vadd.f32 %v3175, %v3374
  %v3417 = vadd.f32 %v3176, %v3379
  %v3418 = vadd.f32 %v3177, %v3384
  %v3419 = vadd.f32 %v3178, %v3389
  %v3420 = vadd.f32 %v3179, %v3394
  %v3421 = vadd.f32 %v3180, %v3399
  %v3422 = vadd.f32 %v3181, %v3404
  %v3423 = vxor.u32 %v3407, 2147483648
  %v3424 = vxor.u32 %v3408, 2147483648
  %v3425 = vxor.u32 %v3409, 2147483648
  %v3426 = vxor.u32 %v3410, 2147483648
  %v3427 = vxor.u32 %v3411, 2147483648
  %v3428 = vxor.u32 %v3412, 2147483648
  %v3429 = vxor.u32 %v3413, 2147483648
  %v3430 = vxor.u32 %v3414, 2147483648
  %v3431 = vxor.u32 %v3415, 2147483648
  %v3432 = vxor.u32 %v3416, 2147483648
  %v3433 = vxor.u32 %v3417, 2147483648
  %v3434 = vxor.u32 %v3418, 2147483648
  %v3435 = vxor.u32 %v3419, 2147483648
  %v3436 = vxor.u32 %v3420, 2147483648
  %v3437 = vxor.u32 %v3421, 2147483648
  %v3438 = vxor.u32 %v3422, 2147483648
  %v3439 = vmul.f32 %v3423, 1.442695
  %v3440 = vpow.pop %v3439
  %v3441 = vmul.f32 %v3424, 1.442695
  %v3442 = vpow.pop %v3441
  %v3443 = vmul.f32 %v3425, 1.442695
  %v3444 = vpow.pop %v3443
  %v3445 = vmul.f32 %v3426, 1.442695
  %v3446 = vpow.pop %v3445
  %v3447 = vmul.f32 %v3427, 1.442695
  %v3448 = vpow.pop %v3447
  %v3449 = vmul.f32 %v3428, 1.442695
  %v3450 = vpow.pop %v3449
  %v3451 = vmul.f32 %v3429, 1.442695
  %v3452 = vpow.pop %v3451
  %v3453 = vmul.f32 %v3430, 1.442695
  %v3454 = vpow.pop %v3453
  %v3455 = vmul.f32 %v3431, 1.442695
  %v3456 = vpow.pop %v3455
  %v3457 = vmul.f32 %v3432, 1.442695
  %v3458 = vpow.pop %v3457
  %v3459 = vmul.f32 %v3433, 1.442695
  %v3460 = vpow.pop %v3459
  %v3461 = vmul.f32 %v3434, 1.442695
  %v3462 = vpow.pop %v3461
  %v3463 = vmul.f32 %v3435, 1.442695
  %v3464 = vpow.pop %v3463
  %v3465 = vmul.f32 %v3436, 1.442695
  %v3466 = vpow.pop %v3465
  %v3467 = vmul.f32 %v3437, 1.442695
  %v3468 = vpow.pop %v3467
  %v3469 = vmul.f32 %v3438, 1.442695
  %v3470 = vpow.pop %v3469
  %v3471 = vadd.f32 %v3440, 1.0
  %v3472 = vadd.f32 %v3442, 1.0
  %v3473 = vadd.f32 %v3444, 1.0
  %v3474 = vadd.f32 %v3446, 1.0
  %v3475 = vadd.f32 %v3448, 1.0
  %v3476 = vadd.f32 %v3450, 1.0
  %v3477 = vadd.f32 %v3452, 1.0
  %v3478 = vadd.f32 %v3454, 1.0
  %v3479 = vadd.f32 %v3456, 1.0
  %v3480 = vadd.f32 %v3458, 1.0
  %v3481 = vadd.f32 %v3460, 1.0
  %v3482 = vadd.f32 %v3462, 1.0
  %v3483 = vadd.f32 %v3464, 1.0
  %v3484 = vadd.f32 %v3466, 1.0
  %v3485 = vadd.f32 %v3468, 1.0
  %v3486 = vadd.f32 %v3470, 1.0
  %v3487 = vrcp.pop %v3471
  %v3488 = vmul.f32 1.0, %v3487
  %v3489 = vrcp.pop %v3472
  %v3490 = vmul.f32 1.0, %v3489
  %v3491 = vrcp.pop %v3473
  %v3492 = vmul.f32 1.0, %v3491
  %v3493 = vrcp.pop %v3474
  %v3494 = vmul.f32 1.0, %v3493
  %v3495 = vrcp.pop %v3475
  %v3496 = vmul.f32 1.0, %v3495
  %v3497 = vrcp.pop %v3476
  %v3498 = vmul.f32 1.0, %v3497
  %v3499 = vrcp.pop %v3477
  %v3500 = vmul.f32 1.0, %v3499
  %v3501 = vrcp.pop %v3478
  %v3502 = vmul.f32 1.0, %v3501
  %v3503 = vrcp.pop %v3479
  %v3504 = vmul.f32 1.0, %v3503
  %v3505 = vrcp.pop %v3480
  %v3506 = vmul.f32 1.0, %v3505
  %v3507 = vrcp.pop %v3481
  %v3508 = vmul.f32 1.0, %v3507
  %v3509 = vrcp.pop %v3482
  %v3510 = vmul.f32 1.0, %v3509
  %v3511 = vrcp.pop %v3483
  %v3512 = vmul.f32 1.0, %v3511
  %v3513 = vrcp.pop %v3484
  %v3514 = vmul.f32 1.0, %v3513
  %v3515 = vrcp.pop %v3485
  %v3516 = vmul.f32 1.0, %v3515
  %v3517 = vrcp.pop %v3486
  %v3518 = vmul.f32 1.0, %v3517
  %v3519 = vtanh.pop %v3407
  %v3520 = vtanh.pop %v3408
  %v3521 = vtanh.pop %v3409
  %v3522 = vtanh.pop %v3410
  %v3523 = vtanh.pop %v3411
  %v3524 = vtanh.pop %v3412
  %v3525 = vtanh.pop %v3413
  %v3526 = vtanh.pop %v3414
  %v3527 = vtanh.pop %v3415
  %v3528 = vtanh.pop %v3416
  %v3529 = vtanh.pop %v3417
  %v3530 = vtanh.pop %v3418
  %v3531 = vtanh.pop %v3419
  %v3532 = vtanh.pop %v3420
  %v3533 = vtanh.pop %v3421
  %v3534 = vtanh.pop %v3422
  %v3535 = vmul.f32 %v3488, %v3054
  %v3536 = vmul.f32 %v3490, %v3055
  %v3537 = vmul.f32 %v3492, %v3056
  %v3538 = vmul.f32 %v3494, %v3057
  %v3539 = vmul.f32 %v3496, %v3058
  %v3540 = vmul.f32 %v3498, %v3059
  %v3541 = vmul.f32 %v3500, %v3060
  %v3542 = vmul.f32 %v3502, %v3061
  %v3543 = vmul.f32 %v3504, %v3062
  %v3544 = vmul.f32 %v3506, %v3063
  %v3545 = vmul.f32 %v3508, %v3064
  %v3546 = vmul.f32 %v3510, %v3065
  %v3547 = vmul.f32 %v3512, %v3066
  %v3548 = vmul.f32 %v3514, %v3067
  %v3549 = vmul.f32 %v3516, %v3068
  %v3550 = vmul.f32 %v3518, %v3069
  %3567 = vrot.lane.b32.xlu0 %v3519, 64
  %v3568 = vpop.permute.xlu0 %3567
  %3569 = vrot.lane.b32.xlu0 %v3520, 64
  %v3570 = vpop.permute.xlu0 %3569
  %3571 = vrot.lane.b32.xlu0 %v3521, 64
  %v3572 = vpop.permute.xlu0 %3571
  %3573 = vrot.lane.b32.xlu0 %v3522, 64
  %v3574 = vpop.permute.xlu0 %3573
  %3575 = vrot.lane.b32.xlu0 %v3523, 64
  %v3576 = vpop.permute.xlu0 %3575
  %3577 = vrot.lane.b32.xlu0 %v3524, 64
  %v3578 = vpop.permute.xlu0 %3577
  %3579 = vrot.lane.b32.xlu0 %v3525, 64
  %v3580 = vpop.permute.xlu0 %3579
  %3581 = vrot.lane.b32.xlu0 %v3526, 64
  %v3582 = vpop.permute.xlu0 %3581
  %3583 = vrot.lane.b32.xlu0 %v3527, 64
  %v3584 = vpop.permute.xlu0 %3583
  %3585 = vrot.lane.b32.xlu0 %v3528, 64
  %v3586 = vpop.permute.xlu0 %3585
  %3587 = vrot.lane.b32.xlu0 %v3529, 64
  %v3588 = vpop.permute.xlu0 %3587
  %3589 = vrot.lane.b32.xlu0 %v3530, 64
  %v3590 = vpop.permute.xlu0 %3589
  %3591 = vrot.lane.b32.xlu0 %v3531, 64
  %v3592 = vpop.permute.xlu0 %3591
  %3593 = vrot.lane.b32.xlu0 %v3532, 64
  %v3594 = vpop.permute.xlu0 %3593
  %3595 = vrot.lane.b32.xlu0 %v3533, 64
  %v3596 = vpop.permute.xlu0 %3595
  %3597 = vrot.lane.b32.xlu0 %v3534, 64
  %v3598 = vpop.permute.xlu0 %3597
  %v3615 = vmul.f32 %v3488, %v3568
  %v3616 = vmul.f32 %v3490, %v3570
  %v3617 = vmul.f32 %v3492, %v3572
  %v3618 = vmul.f32 %v3494, %v3574
  %v3619 = vmul.f32 %v3496, %v3576
  %v3620 = vmul.f32 %v3498, %v3578
  %v3621 = vmul.f32 %v3500, %v3580
  %v3622 = vmul.f32 %v3502, %v3582
  %v3623 = vmul.f32 %v3504, %v3584
  %v3624 = vmul.f32 %v3506, %v3586
  %v3625 = vmul.f32 %v3508, %v3588
  %v3626 = vmul.f32 %v3510, %v3590
  %v3627 = vmul.f32 %v3512, %v3592
  %v3628 = vmul.f32 %v3514, %v3594
  %v3629 = vmul.f32 %v3516, %v3596
  %v3630 = vmul.f32 %v3518, %v3598
  %3647 = vrot.lane.b32.xlu0 %v3615, 32
  %v3648 = vpop.permute.xlu0 %3647
  %3649 = vrot.lane.b32.xlu0 %v3616, 32
  %v3650 = vpop.permute.xlu0 %3649
  %3651 = vrot.lane.b32.xlu0 %v3617, 32
  %v3652 = vpop.permute.xlu0 %3651
  %3653 = vrot.lane.b32.xlu0 %v3618, 32
  %v3654 = vpop.permute.xlu0 %3653
  %3655 = vrot.lane.b32.xlu0 %v3619, 32
  %v3656 = vpop.permute.xlu0 %3655
  %3657 = vrot.lane.b32.xlu0 %v3620, 32
  %v3658 = vpop.permute.xlu0 %3657
  %3659 = vrot.lane.b32.xlu0 %v3621, 32
  %v3660 = vpop.permute.xlu0 %3659
  %3661 = vrot.lane.b32.xlu0 %v3622, 32
  %v3662 = vpop.permute.xlu0 %3661
  %3663 = vrot.lane.b32.xlu0 %v3623, 32
  %v3664 = vpop.permute.xlu0 %3663
  %3665 = vrot.lane.b32.xlu0 %v3624, 32
  %v3666 = vpop.permute.xlu0 %3665
  %3667 = vrot.lane.b32.xlu0 %v3625, 32
  %v3668 = vpop.permute.xlu0 %3667
  %3669 = vrot.lane.b32.xlu0 %v3626, 32
  %v3670 = vpop.permute.xlu0 %3669
  %3671 = vrot.lane.b32.xlu0 %v3627, 32
  %v3672 = vpop.permute.xlu0 %3671
  %3673 = vrot.lane.b32.xlu0 %v3628, 32
  %v3674 = vpop.permute.xlu0 %3673
  %3675 = vrot.lane.b32.xlu0 %v3629, 32
  %v3676 = vpop.permute.xlu0 %3675
  %3677 = vrot.lane.b32.xlu0 %v3630, 32
  %v3678 = vpop.permute.xlu0 %3677
  %v3695 = vadd.f32 %v3535, %v3648
  %v3696 = vadd.f32 %v3536, %v3650
  %v3697 = vadd.f32 %v3537, %v3652
  %v3698 = vadd.f32 %v3538, %v3654
  %v3699 = vadd.f32 %v3539, %v3656
  %v3700 = vadd.f32 %v3540, %v3658
  %v3701 = vadd.f32 %v3541, %v3660
  %v3702 = vadd.f32 %v3542, %v3662
  %v3703 = vadd.f32 %v3543, %v3664
  %v3704 = vadd.f32 %v3544, %v3666
  %v3705 = vadd.f32 %v3545, %v3668
  %v3706 = vadd.f32 %v3546, %v3670
  %v3707 = vadd.f32 %v3547, %v3672
  %v3708 = vadd.f32 %v3548, %v3674
  %v3709 = vadd.f32 %v3549, %v3676
  %v3710 = vadd.f32 %v3550, %v3678
  %v3711 = vtanh.pop %v3695
  %v3712 = vtanh.pop %v3696
  %v3713 = vtanh.pop %v3697
  %v3714 = vtanh.pop %v3698
  %v3715 = vtanh.pop %v3699
  %v3716 = vtanh.pop %v3700
  %v3717 = vtanh.pop %v3701
  %v3718 = vtanh.pop %v3702
  %v3719 = vtanh.pop %v3703
  %v3720 = vtanh.pop %v3704
  %v3721 = vtanh.pop %v3705
  %v3722 = vtanh.pop %v3706
  %v3723 = vtanh.pop %v3707
  %v3724 = vtanh.pop %v3708
  %v3725 = vtanh.pop %v3709
  %v3726 = vtanh.pop %v3710
  %3743 = vrot.lane.b32.xlu0 %v3711, 64
  %v3744 = vpop.permute.xlu0 %3743
  %3745 = vrot.lane.b32.xlu0 %v3712, 64
  %v3746 = vpop.permute.xlu0 %3745
  %3747 = vrot.lane.b32.xlu0 %v3713, 64
  %v3748 = vpop.permute.xlu0 %3747
  %3749 = vrot.lane.b32.xlu0 %v3714, 64
  %v3750 = vpop.permute.xlu0 %3749
  %3751 = vrot.lane.b32.xlu0 %v3715, 64
  %v3752 = vpop.permute.xlu0 %3751
  %3753 = vrot.lane.b32.xlu0 %v3716, 64
  %v3754 = vpop.permute.xlu0 %3753
  %3755 = vrot.lane.b32.xlu0 %v3717, 64
  %v3756 = vpop.permute.xlu0 %3755
  %3757 = vrot.lane.b32.xlu0 %v3718, 64
  %v3758 = vpop.permute.xlu0 %3757
  %3759 = vrot.lane.b32.xlu0 %v3719, 64
  %v3760 = vpop.permute.xlu0 %3759
  %3761 = vrot.lane.b32.xlu0 %v3720, 64
  %v3762 = vpop.permute.xlu0 %3761
  %3763 = vrot.lane.b32.xlu0 %v3721, 64
  %v3764 = vpop.permute.xlu0 %3763
  %3765 = vrot.lane.b32.xlu0 %v3722, 64
  %v3766 = vpop.permute.xlu0 %3765
  %3767 = vrot.lane.b32.xlu0 %v3723, 64
  %v3768 = vpop.permute.xlu0 %3767
  %3769 = vrot.lane.b32.xlu0 %v3724, 64
  %v3770 = vpop.permute.xlu0 %3769
  %3771 = vrot.lane.b32.xlu0 %v3725, 64
  %v3772 = vpop.permute.xlu0 %3771
  %3773 = vrot.lane.b32.xlu0 %v3726, 64
  %v3774 = vpop.permute.xlu0 %3773
  %v3791 = vmul.f32 %v3488, %v3744
  %v3792 = vmul.f32 %v3490, %v3746
  %v3793 = vmul.f32 %v3492, %v3748
  %v3794 = vmul.f32 %v3494, %v3750
  %v3795 = vmul.f32 %v3496, %v3752
  %v3796 = vmul.f32 %v3498, %v3754
  %v3797 = vmul.f32 %v3500, %v3756
  %v3798 = vmul.f32 %v3502, %v3758
  %v3799 = vmul.f32 %v3504, %v3760
  %v3800 = vmul.f32 %v3506, %v3762
  %v3801 = vmul.f32 %v3508, %v3764
  %v3802 = vmul.f32 %v3510, %v3766
  %v3803 = vmul.f32 %v3512, %v3768
  %v3804 = vmul.f32 %v3514, %v3770
  %v3805 = vmul.f32 %v3516, %v3772
  %v3806 = vmul.f32 %v3518, %v3774
  %v3807 = vld [vmem:[%s1295] sm:$0xff]
  %v3808 = vld [vmem:[%s1295 + $0x8] sm:$0xff]
  %v3809 = vld [vmem:[%s1295 + $0x10] sm:$0xff]
  %v3810 = vld [vmem:[%s1295 + $0x18] sm:$0xff]
  %v3811 = vld [vmem:[%s1295 + $0x20] sm:$0xff]
  %v3812 = vld [vmem:[%s1295 + $0x28] sm:$0xff]
  %v3813 = vld [vmem:[%s1295 + $0x30] sm:$0xff]
  %v3814 = vld [vmem:[%s1295 + $0x38] sm:$0xff]
  %v3815 = vld [vmem:[%s1295 + $0x40] sm:$0xff]
  %v3816 = vld [vmem:[%s1295 + $0x48] sm:$0xff]
  %v3817 = vld [vmem:[%s1295 + $0x50] sm:$0xff]
  %v3818 = vld [vmem:[%s1295 + $0x58] sm:$0xff]
  %v3819 = vld [vmem:[%s1295 + $0x60] sm:$0xff]
  %v3820 = vld [vmem:[%s1295 + $0x68] sm:$0xff]
  %v3821 = vld [vmem:[%s1295 + $0x70] sm:$0xff]
  %v3822 = vld [vmem:[%s1295 + $0x78] sm:$0xff]
  %3839 = vrot.lane.b32.xlu0 %v3791, 32
  %v3840 = vpop.permute.xlu0 %3839
  %3841 = vrot.lane.b32.xlu0 %v3792, 32
  %v3842 = vpop.permute.xlu0 %3841
  %3843 = vrot.lane.b32.xlu0 %v3793, 32
  %v3844 = vpop.permute.xlu0 %3843
  %3845 = vrot.lane.b32.xlu0 %v3794, 32
  %v3846 = vpop.permute.xlu0 %3845
  %3847 = vrot.lane.b32.xlu0 %v3795, 32
  %v3848 = vpop.permute.xlu0 %3847
  %3849 = vrot.lane.b32.xlu0 %v3796, 32
  %v3850 = vpop.permute.xlu0 %3849
  %3851 = vrot.lane.b32.xlu0 %v3797, 32
  %v3852 = vpop.permute.xlu0 %3851
  %3853 = vrot.lane.b32.xlu0 %v3798, 32
  %v3854 = vpop.permute.xlu0 %3853
  %3855 = vrot.lane.b32.xlu0 %v3799, 32
  %v3856 = vpop.permute.xlu0 %3855
  %3857 = vrot.lane.b32.xlu0 %v3800, 32
  %v3858 = vpop.permute.xlu0 %3857
  %3859 = vrot.lane.b32.xlu0 %v3801, 32
  %v3860 = vpop.permute.xlu0 %3859
  %3861 = vrot.lane.b32.xlu0 %v3802, 32
  %v3862 = vpop.permute.xlu0 %3861
  %3863 = vrot.lane.b32.xlu0 %v3803, 32
  %v3864 = vpop.permute.xlu0 %3863
  %3865 = vrot.lane.b32.xlu0 %v3804, 32
  %v3866 = vpop.permute.xlu0 %3865
  %3867 = vrot.lane.b32.xlu0 %v3805, 32
  %v3868 = vpop.permute.xlu0 %3867
  %3869 = vrot.lane.b32.xlu0 %v3806, 32
  %v3870 = vpop.permute.xlu0 %3869
  %v3871 = vsel %vm1976, %v3840, 0
  %v3873 = vsel %vm1976, %v3842, 0
  %v3875 = vsel %vm1976, %v3844, 0
  %v3877 = vsel %vm1976, %v3846, 0
  %v3879 = vsel %vm1976, %v3848, 0
  %v3881 = vsel %vm1976, %v3850, 0
  %v3883 = vsel %vm1976, %v3852, 0
  %v3885 = vsel %vm1976, %v3854, 0
  %v3887 = vsel %vm1976, %v3856, 0
  %v3889 = vsel %vm1976, %v3858, 0
  %v3891 = vsel %vm1976, %v3860, 0
  %v3893 = vsel %vm1976, %v3862, 0
  %v3895 = vsel %vm1976, %v3864, 0
  %v3897 = vsel %vm1976, %v3866, 0
  %v3899 = vsel %vm1976, %v3868, 0
  %v3901 = vsel %vm1976, %v3870, 0
  %3903 = vmatprep.subr.mxu0 0.0
  %3904 = vmatpush1.msra.mxu0 %v1956
  %3905 = vmatprep.subr.mxu0 0.0
  %3906 = vmatpush1.msra.mxu0 %v1957
  %3907 = vmatprep.subr.mxu0 0.0
  %3908 = vmatpush1.msra.mxu0 %v1958
  %3909 = vmatprep.subr.mxu0 0.0
  %3910 = vmatpush1.msra.mxu0 %v1959
  %3911 = vmatprep.subr.mxu0 0.0
  %3912 = vmatpush1.msra.mxu0 0.0
  %3913 = vmatprep.subr.mxu0 0.0
  %3914 = vmatpush1.msra.mxu0 0.0
  %3915 = vmatprep.subr.mxu0 0.0
  %3916 = vmatpush1.msra.mxu0 0.0
  %3917 = vmatprep.subr.mxu0 0.0
  %3918 = vmatpush1.msra.mxu0 0.0
  %3919 = vmatprep.subr.mxu0 0.0
  %3920 = vmatpush1.msra.mxu0 0.0
  %3921 = vmatprep.subr.mxu0 0.0
  %3922 = vmatpush1.msra.mxu0 0.0
  %3923 = vmatprep.subr.mxu0 0.0
  %3924 = vmatpush1.msra.mxu0 0.0
  %3925 = vmatprep.subr.mxu0 0.0
  %3926 = vmatpush1.msra.mxu0 0.0
  %3927 = vmatprep.subr.mxu0 0.0
  %3928 = vmatpush1.msra.mxu0 0.0
  %3929 = vmatprep.subr.mxu0 0.0
  %3930 = vmatpush1.msra.mxu0 0.0
  %3931 = vmatprep.subr.mxu0 0.0
  %3932 = vmatpush1.msra.mxu0 0.0
  %3933 = vmatprep.subr.mxu0 0.0
  %3934 = vmatpush1.msra.mxu0 0.0
  %3935 = vmatprep.subr.mxu0 0.0
  %3936 = vmatpush1.msra.mxu0 0.0
  %3937 = vmatprep.subr.mxu0 0.0
  %3938 = vmatpush1.msra.mxu0 0.0
  %3939 = vmatprep.subr.mxu0 0.0
  %3940 = vmatpush1.msra.mxu0 0.0
  %3941 = vmatprep.subr.mxu0 0.0
  %3942 = vmatpush1.msra.mxu0 0.0
  %3943 = vmatprep.subr.mxu0 0.0
  %3944 = vmatpush1.msra.mxu0 0.0
  %3945 = vmatprep.subr.mxu0 0.0
  %3946 = vmatpush1.msra.mxu0 0.0
  %3947 = vmatprep.subr.mxu0 0.0
  %3948 = vmatpush1.msra.mxu0 0.0
  %3949 = vmatprep.subr.mxu0 0.0
  %3950 = vmatpush1.msra.mxu0 0.0
  %3951 = vmatprep.subr.mxu0 0.0
  %3952 = vmatpush1.msra.mxu0 0.0
  %3953 = vmatprep.subr.mxu0 0.0
  %3954 = vmatpush1.msra.mxu0 0.0
  %3955 = vmatprep.subr.mxu0 0.0
  %3956 = vmatpush1.msra.mxu0 0.0
  %3957 = vmatprep.subr.mxu0 0.0
  %3958 = vmatpush1.msra.mxu0 0.0
  %3959 = vmatprep.subr.mxu0 0.0
  %3960 = vmatpush1.msra.mxu0 0.0
  %3961 = vmatprep.subr.mxu0 0.0
  %3962 = vmatpush1.msra.mxu0 0.0
  %3963 = vmatprep.subr.mxu0 0.0
  %3964 = vmatpush1.msra.mxu0 0.0
  %3965 = vmatprep.subr.mxu0 0.0
  %3966 = vmatpush1.msra.mxu0 0.0
  %3967 = vmatprep.mubr.f32.mxu0 0.0
  %3968 = vmatmul.mubr.f32.gmra.mrb[0].mxu0 %v3871
  %v3969 = vpop.f32.mrb[0].mxu0
  %v3970 = vadd.f32 0.0, %v3969
  %v3971 = vpop.f32.mrb[0].mxu0
  %3972 = vmatprep.mubr.f32.mxu0 0.0
  %3973 = vmatmul.mubr.f32.gmra.mrb[0].mxu0 %v3873
  %v3974 = vpop.f32.mrb[0].mxu0
  %v3975 = vadd.f32 0.0, %v3974
  %v3976 = vpop.f32.mrb[0].mxu0
  %3977 = vmatprep.mubr.f32.mxu0 0.0
  %3978 = vmatmul.mubr.f32.gmra.mrb[0].mxu0 %v3875
  %v3979 = vpop.f32.mrb[0].mxu0
  %v3980 = vadd.f32 0.0, %v3979
  %v3981 = vpop.f32.mrb[0].mxu0
  %3982 = vmatprep.mubr.f32.mxu0 0.0
  %3983 = vmatmul.mubr.f32.gmra.mrb[0].mxu0 %v3877
  %v3984 = vpop.f32.mrb[0].mxu0
  %v3985 = vadd.f32 0.0, %v3984
  %v3986 = vpop.f32.mrb[0].mxu0
  %3987 = vmatprep.mubr.f32.mxu0 0.0
  %3988 = vmatmul.mubr.f32.gmra.mrb[0].mxu0 %v3879
  %v3989 = vpop.f32.mrb[0].mxu0
  %v3990 = vadd.f32 0.0, %v3989
  %v3991 = vpop.f32.mrb[0].mxu0
  %3992 = vmatprep.mubr.f32.mxu0 0.0
  %3993 = vmatmul.mubr.f32.gmra.mrb[0].mxu0 %v3881
  %v3994 = vpop.f32.mrb[0].mxu0
  %v3995 = vadd.f32 0.0, %v3994
  %v3996 = vpop.f32.mrb[0].mxu0
  %3997 = vmatprep.mubr.f32.mxu0 0.0
  %3998 = vmatmul.mubr.f32.gmra.mrb[0].mxu0 %v3883
  %v3999 = vpop.f32.mrb[0].mxu0
  %v4000 = vadd.f32 0.0, %v3999
  %v4001 = vpop.f32.mrb[0].mxu0
  %4002 = vmatprep.mubr.f32.mxu0 0.0
  %4003 = vmatmul.mubr.f32.gmra.mrb[0].mxu0 %v3885
  %v4004 = vpop.f32.mrb[0].mxu0
  %v4005 = vadd.f32 0.0, %v4004
  %v4006 = vpop.f32.mrb[0].mxu0
  %4007 = vmatprep.mubr.f32.mxu0 0.0
  %4008 = vmatmul.mubr.f32.gmra.mrb[0].mxu0 %v3887
  %v4009 = vpop.f32.mrb[0].mxu0
  %v4010 = vadd.f32 0.0, %v4009
  %v4011 = vpop.f32.mrb[0].mxu0
  %4012 = vmatprep.mubr.f32.mxu0 0.0
  %4013 = vmatmul.mubr.f32.gmra.mrb[0].mxu0 %v3889
  %v4014 = vpop.f32.mrb[0].mxu0
  %v4015 = vadd.f32 0.0, %v4014
  %v4016 = vpop.f32.mrb[0].mxu0
  %4017 = vmatprep.mubr.f32.mxu0 0.0
  %4018 = vmatmul.mubr.f32.gmra.mrb[0].mxu0 %v3891
  %v4019 = vpop.f32.mrb[0].mxu0
  %v4020 = vadd.f32 0.0, %v4019
  %v4021 = vpop.f32.mrb[0].mxu0
  %4022 = vmatprep.mubr.f32.mxu0 0.0
  %4023 = vmatmul.mubr.f32.gmra.mrb[0].mxu0 %v3893
  %v4024 = vpop.f32.mrb[0].mxu0
  %v4025 = vadd.f32 0.0, %v4024
  %v4026 = vpop.f32.mrb[0].mxu0
  %4027 = vmatprep.mubr.f32.mxu0 0.0
  %4028 = vmatmul.mubr.f32.gmra.mrb[0].mxu0 %v3895
  %v4029 = vpop.f32.mrb[0].mxu0
  %v4030 = vadd.f32 0.0, %v4029
  %v4031 = vpop.f32.mrb[0].mxu0
  %4032 = vmatprep.mubr.f32.mxu0 0.0
  %4033 = vmatmul.mubr.f32.gmra.mrb[0].mxu0 %v3897
  %v4034 = vpop.f32.mrb[0].mxu0
  %v4035 = vadd.f32 0.0, %v4034
  %v4036 = vpop.f32.mrb[0].mxu0
  %4037 = vmatprep.mubr.f32.mxu0 0.0
  %4038 = vmatmul.mubr.f32.gmra.mrb[0].mxu0 %v3899
  %v4039 = vpop.f32.mrb[0].mxu0
  %v4040 = vadd.f32 0.0, %v4039
  %v4041 = vpop.f32.mrb[0].mxu0
  %4042 = vmatprep.mubr.f32.mxu0 0.0
  %4043 = vmatmul.mubr.f32.gmra.mrb[0].mxu0 %v3901
  %v4044 = vpop.f32.mrb[0].mxu0
  %v4045 = vadd.f32 0.0, %v4044
  %v4046 = vpop.f32.mrb[0].mxu0
  %4047 = vdwg.mxu0
  %v4048 = vadd.f32 %v3807, %v3970
  %v4049 = vadd.f32 %v3808, %v3975
  %v4050 = vadd.f32 %v3809, %v3980
  %v4051 = vadd.f32 %v3810, %v3985
  %v4052 = vadd.f32 %v3811, %v3990
  %v4053 = vadd.f32 %v3812, %v3995
  %v4054 = vadd.f32 %v3813, %v4000
  %v4055 = vadd.f32 %v3814, %v4005
  %v4056 = vadd.f32 %v3815, %v4010
  %v4057 = vadd.f32 %v3816, %v4015
  %v4058 = vadd.f32 %v3817, %v4020
  %v4059 = vadd.f32 %v3818, %v4025
  %v4060 = vadd.f32 %v3819, %v4030
  %v4061 = vadd.f32 %v3820, %v4035
  %v4062 = vadd.f32 %v3821, %v4040
  %v4063 = vadd.f32 %v3822, %v4045
  %v4064 = vxor.u32 %v4048, 2147483648
  %v4065 = vxor.u32 %v4049, 2147483648
  %v4066 = vxor.u32 %v4050, 2147483648
  %v4067 = vxor.u32 %v4051, 2147483648
  %v4068 = vxor.u32 %v4052, 2147483648
  %v4069 = vxor.u32 %v4053, 2147483648
  %v4070 = vxor.u32 %v4054, 2147483648
  %v4071 = vxor.u32 %v4055, 2147483648
  %v4072 = vxor.u32 %v4056, 2147483648
  %v4073 = vxor.u32 %v4057, 2147483648
  %v4074 = vxor.u32 %v4058, 2147483648
  %v4075 = vxor.u32 %v4059, 2147483648
  %v4076 = vxor.u32 %v4060, 2147483648
  %v4077 = vxor.u32 %v4061, 2147483648
  %v4078 = vxor.u32 %v4062, 2147483648
  %v4079 = vxor.u32 %v4063, 2147483648
  %v4080 = vmul.f32 %v4064, 1.442695
  %v4081 = vpow.pop %v4080
  %v4082 = vmul.f32 %v4065, 1.442695
  %v4083 = vpow.pop %v4082
  %v4084 = vmul.f32 %v4066, 1.442695
  %v4085 = vpow.pop %v4084
  %v4086 = vmul.f32 %v4067, 1.442695
  %v4087 = vpow.pop %v4086
  %v4088 = vmul.f32 %v4068, 1.442695
  %v4089 = vpow.pop %v4088
  %v4090 = vmul.f32 %v4069, 1.442695
  %v4091 = vpow.pop %v4090
  %v4092 = vmul.f32 %v4070, 1.442695
  %v4093 = vpow.pop %v4092
  %v4094 = vmul.f32 %v4071, 1.442695
  %v4095 = vpow.pop %v4094
  %v4096 = vmul.f32 %v4072, 1.442695
  %v4097 = vpow.pop %v4096
  %v4098 = vmul.f32 %v4073, 1.442695
  %v4099 = vpow.pop %v4098
  %v4100 = vmul.f32 %v4074, 1.442695
  %v4101 = vpow.pop %v4100
  %v4102 = vmul.f32 %v4075, 1.442695
  %v4103 = vpow.pop %v4102
  %v4104 = vmul.f32 %v4076, 1.442695
  %v4105 = vpow.pop %v4104
  %v4106 = vmul.f32 %v4077, 1.442695
  %v4107 = vpow.pop %v4106
  %v4108 = vmul.f32 %v4078, 1.442695
  %v4109 = vpow.pop %v4108
  %v4110 = vmul.f32 %v4079, 1.442695
  %v4111 = vpow.pop %v4110
  %v4112 = vadd.f32 %v4081, 1.0
  %v4113 = vadd.f32 %v4083, 1.0
  %v4114 = vadd.f32 %v4085, 1.0
  %v4115 = vadd.f32 %v4087, 1.0
  %v4116 = vadd.f32 %v4089, 1.0
  %v4117 = vadd.f32 %v4091, 1.0
  %v4118 = vadd.f32 %v4093, 1.0
  %v4119 = vadd.f32 %v4095, 1.0
  %v4120 = vadd.f32 %v4097, 1.0
  %v4121 = vadd.f32 %v4099, 1.0
  %v4122 = vadd.f32 %v4101, 1.0
  %v4123 = vadd.f32 %v4103, 1.0
  %v4124 = vadd.f32 %v4105, 1.0
  %v4125 = vadd.f32 %v4107, 1.0
  %v4126 = vadd.f32 %v4109, 1.0
  %v4127 = vadd.f32 %v4111, 1.0
  %v4128 = vrcp.pop %v4112
  %v4129 = vmul.f32 1.0, %v4128
  %v4130 = vrcp.pop %v4113
  %v4131 = vmul.f32 1.0, %v4130
  %v4132 = vrcp.pop %v4114
  %v4133 = vmul.f32 1.0, %v4132
  %v4134 = vrcp.pop %v4115
  %v4135 = vmul.f32 1.0, %v4134
  %v4136 = vrcp.pop %v4116
  %v4137 = vmul.f32 1.0, %v4136
  %v4138 = vrcp.pop %v4117
  %v4139 = vmul.f32 1.0, %v4138
  %v4140 = vrcp.pop %v4118
  %v4141 = vmul.f32 1.0, %v4140
  %v4142 = vrcp.pop %v4119
  %v4143 = vmul.f32 1.0, %v4142
  %v4144 = vrcp.pop %v4120
  %v4145 = vmul.f32 1.0, %v4144
  %v4146 = vrcp.pop %v4121
  %v4147 = vmul.f32 1.0, %v4146
  %v4148 = vrcp.pop %v4122
  %v4149 = vmul.f32 1.0, %v4148
  %v4150 = vrcp.pop %v4123
  %v4151 = vmul.f32 1.0, %v4150
  %v4152 = vrcp.pop %v4124
  %v4153 = vmul.f32 1.0, %v4152
  %v4154 = vrcp.pop %v4125
  %v4155 = vmul.f32 1.0, %v4154
  %v4156 = vrcp.pop %v4126
  %v4157 = vmul.f32 1.0, %v4156
  %v4158 = vrcp.pop %v4127
  %v4159 = vmul.f32 1.0, %v4158
  %v4160 = vtanh.pop %v4048
  %v4161 = vtanh.pop %v4049
  %v4162 = vtanh.pop %v4050
  %v4163 = vtanh.pop %v4051
  %v4164 = vtanh.pop %v4052
  %v4165 = vtanh.pop %v4053
  %v4166 = vtanh.pop %v4054
  %v4167 = vtanh.pop %v4055
  %v4168 = vtanh.pop %v4056
  %v4169 = vtanh.pop %v4057
  %v4170 = vtanh.pop %v4058
  %v4171 = vtanh.pop %v4059
  %v4172 = vtanh.pop %v4060
  %v4173 = vtanh.pop %v4061
  %v4174 = vtanh.pop %v4062
  %v4175 = vtanh.pop %v4063
  %v4176 = vmul.f32 %v4129, %v3695
  %v4177 = vmul.f32 %v4131, %v3696
  %v4178 = vmul.f32 %v4133, %v3697
  %v4179 = vmul.f32 %v4135, %v3698
  %v4180 = vmul.f32 %v4137, %v3699
  %v4181 = vmul.f32 %v4139, %v3700
  %v4182 = vmul.f32 %v4141, %v3701
  %v4183 = vmul.f32 %v4143, %v3702
  %v4184 = vmul.f32 %v4145, %v3703
  %v4185 = vmul.f32 %v4147, %v3704
  %v4186 = vmul.f32 %v4149, %v3705
  %v4187 = vmul.f32 %v4151, %v3706
  %v4188 = vmul.f32 %v4153, %v3707
  %v4189 = vmul.f32 %v4155, %v3708
  %v4190 = vmul.f32 %v4157, %v3709
  %v4191 = vmul.f32 %v4159, %v3710
  %4208 = vrot.lane.b32.xlu0 %v4160, 64
  %v4209 = vpop.permute.xlu0 %4208
  %4210 = vrot.lane.b32.xlu0 %v4161, 64
  %v4211 = vpop.permute.xlu0 %4210
  %4212 = vrot.lane.b32.xlu0 %v4162, 64
  %v4213 = vpop.permute.xlu0 %4212
  %4214 = vrot.lane.b32.xlu0 %v4163, 64
  %v4215 = vpop.permute.xlu0 %4214
  %4216 = vrot.lane.b32.xlu0 %v4164, 64
  %v4217 = vpop.permute.xlu0 %4216
  %4218 = vrot.lane.b32.xlu0 %v4165, 64
  %v4219 = vpop.permute.xlu0 %4218
  %4220 = vrot.lane.b32.xlu0 %v4166, 64
  %v4221 = vpop.permute.xlu0 %4220
  %4222 = vrot.lane.b32.xlu0 %v4167, 64
  %v4223 = vpop.permute.xlu0 %4222
  %4224 = vrot.lane.b32.xlu0 %v4168, 64
  %v4225 = vpop.permute.xlu0 %4224
  %4226 = vrot.lane.b32.xlu0 %v4169, 64
  %v4227 = vpop.permute.xlu0 %4226
  %4228 = vrot.lane.b32.xlu0 %v4170, 64
  %v4229 = vpop.permute.xlu0 %4228
  %4230 = vrot.lane.b32.xlu0 %v4171, 64
  %v4231 = vpop.permute.xlu0 %4230
  %4232 = vrot.lane.b32.xlu0 %v4172, 64
  %v4233 = vpop.permute.xlu0 %4232
  %4234 = vrot.lane.b32.xlu0 %v4173, 64
  %v4235 = vpop.permute.xlu0 %4234
  %4236 = vrot.lane.b32.xlu0 %v4174, 64
  %v4237 = vpop.permute.xlu0 %4236
  %4238 = vrot.lane.b32.xlu0 %v4175, 64
  %v4239 = vpop.permute.xlu0 %4238
  %v4256 = vmul.f32 %v4129, %v4209
  %v4257 = vmul.f32 %v4131, %v4211
  %v4258 = vmul.f32 %v4133, %v4213
  %v4259 = vmul.f32 %v4135, %v4215
  %v4260 = vmul.f32 %v4137, %v4217
  %v4261 = vmul.f32 %v4139, %v4219
  %v4262 = vmul.f32 %v4141, %v4221
  %v4263 = vmul.f32 %v4143, %v4223
  %v4264 = vmul.f32 %v4145, %v4225
  %v4265 = vmul.f32 %v4147, %v4227
  %v4266 = vmul.f32 %v4149, %v4229
  %v4267 = vmul.f32 %v4151, %v4231
  %v4268 = vmul.f32 %v4153, %v4233
  %v4269 = vmul.f32 %v4155, %v4235
  %v4270 = vmul.f32 %v4157, %v4237
  %v4271 = vmul.f32 %v4159, %v4239
  %4288 = vrot.lane.b32.xlu0 %v4256, 32
  %v4289 = vpop.permute.xlu0 %4288
  %4290 = vrot.lane.b32.xlu0 %v4257, 32
  %v4291 = vpop.permute.xlu0 %4290
  %4292 = vrot.lane.b32.xlu0 %v4258, 32
  %v4293 = vpop.permute.xlu0 %4292
  %4294 = vrot.lane.b32.xlu0 %v4259, 32
  %v4295 = vpop.permute.xlu0 %4294
  %4296 = vrot.lane.b32.xlu0 %v4260, 32
  %v4297 = vpop.permute.xlu0 %4296
  %4298 = vrot.lane.b32.xlu0 %v4261, 32
  %v4299 = vpop.permute.xlu0 %4298
  %4300 = vrot.lane.b32.xlu0 %v4262, 32
  %v4301 = vpop.permute.xlu0 %4300
  %4302 = vrot.lane.b32.xlu0 %v4263, 32
  %v4303 = vpop.permute.xlu0 %4302
  %4304 = vrot.lane.b32.xlu0 %v4264, 32
  %v4305 = vpop.permute.xlu0 %4304
  %4306 = vrot.lane.b32.xlu0 %v4265, 32
  %v4307 = vpop.permute.xlu0 %4306
  %4308 = vrot.lane.b32.xlu0 %v4266, 32
  %v4309 = vpop.permute.xlu0 %4308
  %4310 = vrot.lane.b32.xlu0 %v4267, 32
  %v4311 = vpop.permute.xlu0 %4310
  %4312 = vrot.lane.b32.xlu0 %v4268, 32
  %v4313 = vpop.permute.xlu0 %4312
  %4314 = vrot.lane.b32.xlu0 %v4269, 32
  %v4315 = vpop.permute.xlu0 %4314
  %4316 = vrot.lane.b32.xlu0 %v4270, 32
  %v4317 = vpop.permute.xlu0 %4316
  %4318 = vrot.lane.b32.xlu0 %v4271, 32
  %v4319 = vpop.permute.xlu0 %4318
  %v4336 = vadd.f32 %v4176, %v4289
  %v4337 = vadd.f32 %v4177, %v4291
  %v4338 = vadd.f32 %v4178, %v4293
  %v4339 = vadd.f32 %v4179, %v4295
  %v4340 = vadd.f32 %v4180, %v4297
  %v4341 = vadd.f32 %v4181, %v4299
  %v4342 = vadd.f32 %v4182, %v4301
  %v4343 = vadd.f32 %v4183, %v4303
  %v4344 = vadd.f32 %v4184, %v4305
  %v4345 = vadd.f32 %v4185, %v4307
  %v4346 = vadd.f32 %v4186, %v4309
  %v4347 = vadd.f32 %v4187, %v4311
  %v4348 = vadd.f32 %v4188, %v4313
  %v4349 = vadd.f32 %v4189, %v4315
  %v4350 = vadd.f32 %v4190, %v4317
  %v4351 = vadd.f32 %v4191, %v4319
  %v4352 = vtanh.pop %v4336
  %v4353 = vtanh.pop %v4337
  %v4354 = vtanh.pop %v4338
  %v4355 = vtanh.pop %v4339
  %v4356 = vtanh.pop %v4340
  %v4357 = vtanh.pop %v4341
  %v4358 = vtanh.pop %v4342
  %v4359 = vtanh.pop %v4343
  %v4360 = vtanh.pop %v4344
  %v4361 = vtanh.pop %v4345
  %v4362 = vtanh.pop %v4346
  %v4363 = vtanh.pop %v4347
  %v4364 = vtanh.pop %v4348
  %v4365 = vtanh.pop %v4349
  %v4366 = vtanh.pop %v4350
  %v4367 = vtanh.pop %v4351
  %4384 = vrot.lane.b32.xlu0 %v4352, 64
  %v4385 = vpop.permute.xlu0 %4384
  %4386 = vrot.lane.b32.xlu0 %v4353, 64
  %v4387 = vpop.permute.xlu0 %4386
  %4388 = vrot.lane.b32.xlu0 %v4354, 64
  %v4389 = vpop.permute.xlu0 %4388
  %4390 = vrot.lane.b32.xlu0 %v4355, 64
  %v4391 = vpop.permute.xlu0 %4390
  %4392 = vrot.lane.b32.xlu0 %v4356, 64
  %v4393 = vpop.permute.xlu0 %4392
  %4394 = vrot.lane.b32.xlu0 %v4357, 64
  %v4395 = vpop.permute.xlu0 %4394
  %4396 = vrot.lane.b32.xlu0 %v4358, 64
  %v4397 = vpop.permute.xlu0 %4396
  %4398 = vrot.lane.b32.xlu0 %v4359, 64
  %v4399 = vpop.permute.xlu0 %4398
  %4400 = vrot.lane.b32.xlu0 %v4360, 64
  %v4401 = vpop.permute.xlu0 %4400
  %4402 = vrot.lane.b32.xlu0 %v4361, 64
  %v4403 = vpop.permute.xlu0 %4402
  %4404 = vrot.lane.b32.xlu0 %v4362, 64
  %v4405 = vpop.permute.xlu0 %4404
  %4406 = vrot.lane.b32.xlu0 %v4363, 64
  %v4407 = vpop.permute.xlu0 %4406
  %4408 = vrot.lane.b32.xlu0 %v4364, 64
  %v4409 = vpop.permute.xlu0 %4408
  %4410 = vrot.lane.b32.xlu0 %v4365, 64
  %v4411 = vpop.permute.xlu0 %4410
  %4412 = vrot.lane.b32.xlu0 %v4366, 64
  %v4413 = vpop.permute.xlu0 %4412
  %4414 = vrot.lane.b32.xlu0 %v4367, 64
  %v4415 = vpop.permute.xlu0 %4414
  %v4432 = vmul.f32 %v4129, %v4385
  %v4433 = vmul.f32 %v4131, %v4387
  %v4434 = vmul.f32 %v4133, %v4389
  %v4435 = vmul.f32 %v4135, %v4391
  %v4436 = vmul.f32 %v4137, %v4393
  %v4437 = vmul.f32 %v4139, %v4395
  %v4438 = vmul.f32 %v4141, %v4397
  %v4439 = vmul.f32 %v4143, %v4399
  %v4440 = vmul.f32 %v4145, %v4401
  %v4441 = vmul.f32 %v4147, %v4403
  %v4442 = vmul.f32 %v4149, %v4405
  %v4443 = vmul.f32 %v4151, %v4407
  %v4444 = vmul.f32 %v4153, %v4409
  %v4445 = vmul.f32 %v4155, %v4411
  %v4446 = vmul.f32 %v4157, %v4413
  %v4447 = vmul.f32 %v4159, %v4415
  %v4448 = vld [vmem:[%s1617] sm:$0xff]
  %v4449 = vld [vmem:[%s1617 + $0x8] sm:$0xff]
  %v4450 = vld [vmem:[%s1617 + $0x10] sm:$0xff]
  %v4451 = vld [vmem:[%s1617 + $0x18] sm:$0xff]
  %v4452 = vld [vmem:[%s1617 + $0x20] sm:$0xff]
  %v4453 = vld [vmem:[%s1617 + $0x28] sm:$0xff]
  %v4454 = vld [vmem:[%s1617 + $0x30] sm:$0xff]
  %v4455 = vld [vmem:[%s1617 + $0x38] sm:$0xff]
  %v4456 = vld [vmem:[%s1617 + $0x40] sm:$0xff]
  %v4457 = vld [vmem:[%s1617 + $0x48] sm:$0xff]
  %v4458 = vld [vmem:[%s1617 + $0x50] sm:$0xff]
  %v4459 = vld [vmem:[%s1617 + $0x58] sm:$0xff]
  %v4460 = vld [vmem:[%s1617 + $0x60] sm:$0xff]
  %v4461 = vld [vmem:[%s1617 + $0x68] sm:$0xff]
  %v4462 = vld [vmem:[%s1617 + $0x70] sm:$0xff]
  %v4463 = vld [vmem:[%s1617 + $0x78] sm:$0xff]
  %4480 = vrot.lane.b32.xlu0 %v4432, 32
  %v4481 = vpop.permute.xlu0 %4480
  %4482 = vrot.lane.b32.xlu0 %v4433, 32
  %v4483 = vpop.permute.xlu0 %4482
  %4484 = vrot.lane.b32.xlu0 %v4434, 32
  %v4485 = vpop.permute.xlu0 %4484
  %4486 = vrot.lane.b32.xlu0 %v4435, 32
  %v4487 = vpop.permute.xlu0 %4486
  %4488 = vrot.lane.b32.xlu0 %v4436, 32
  %v4489 = vpop.permute.xlu0 %4488
  %4490 = vrot.lane.b32.xlu0 %v4437, 32
  %v4491 = vpop.permute.xlu0 %4490
  %4492 = vrot.lane.b32.xlu0 %v4438, 32
  %v4493 = vpop.permute.xlu0 %4492
  %4494 = vrot.lane.b32.xlu0 %v4439, 32
  %v4495 = vpop.permute.xlu0 %4494
  %4496 = vrot.lane.b32.xlu0 %v4440, 32
  %v4497 = vpop.permute.xlu0 %4496
  %4498 = vrot.lane.b32.xlu0 %v4441, 32
  %v4499 = vpop.permute.xlu0 %4498
  %4500 = vrot.lane.b32.xlu0 %v4442, 32
  %v4501 = vpop.permute.xlu0 %4500
  %4502 = vrot.lane.b32.xlu0 %v4443, 32
  %v4503 = vpop.permute.xlu0 %4502
  %4504 = vrot.lane.b32.xlu0 %v4444, 32
  %v4505 = vpop.permute.xlu0 %4504
  %4506 = vrot.lane.b32.xlu0 %v4445, 32
  %v4507 = vpop.permute.xlu0 %4506
  %4508 = vrot.lane.b32.xlu0 %v4446, 32
  %v4509 = vpop.permute.xlu0 %4508
  %4510 = vrot.lane.b32.xlu0 %v4447, 32
  %v4511 = vpop.permute.xlu0 %4510
  %v4512 = vsel %vm1976, %v4481, 0
  %v4514 = vsel %vm1976, %v4483, 0
  %v4516 = vsel %vm1976, %v4485, 0
  %v4518 = vsel %vm1976, %v4487, 0
  %v4520 = vsel %vm1976, %v4489, 0
  %v4522 = vsel %vm1976, %v4491, 0
  %v4524 = vsel %vm1976, %v4493, 0
  %v4526 = vsel %vm1976, %v4495, 0
  %v4528 = vsel %vm1976, %v4497, 0
  %v4530 = vsel %vm1976, %v4499, 0
  %v4532 = vsel %vm1976, %v4501, 0
  %v4534 = vsel %vm1976, %v4503, 0
  %v4536 = vsel %vm1976, %v4505, 0
  %v4538 = vsel %vm1976, %v4507, 0
  %v4540 = vsel %vm1976, %v4509, 0
  %v4542 = vsel %vm1976, %v4511, 0
  %4544 = vmatprep.subr.mxu0 0.0
  %4545 = vmatpush1.msra.mxu0 %v1956
  %4546 = vmatprep.subr.mxu0 0.0
  %4547 = vmatpush1.msra.mxu0 %v1957
  %4548 = vmatprep.subr.mxu0 0.0
  %4549 = vmatpush1.msra.mxu0 %v1958
  %4550 = vmatprep.subr.mxu0 0.0
  %4551 = vmatpush1.msra.mxu0 %v1959
  %4552 = vmatprep.subr.mxu0 0.0
  %4553 = vmatpush1.msra.mxu0 0.0
  %4554 = vmatprep.subr.mxu0 0.0
  %4555 = vmatpush1.msra.mxu0 0.0
  %4556 = vmatprep.subr.mxu0 0.0
  %4557 = vmatpush1.msra.mxu0 0.0
  %4558 = vmatprep.subr.mxu0 0.0
  %4559 = vmatpush1.msra.mxu0 0.0
  %4560 = vmatprep.subr.mxu0 0.0
  %4561 = vmatpush1.msra.mxu0 0.0
  %4562 = vmatprep.subr.mxu0 0.0
  %4563 = vmatpush1.msra.mxu0 0.0
  %4564 = vmatprep.subr.mxu0 0.0
  %4565 = vmatpush1.msra.mxu0 0.0
  %4566 = vmatprep.subr.mxu0 0.0
  %4567 = vmatpush1.msra.mxu0 0.0
  %4568 = vmatprep.subr.mxu0 0.0
  %4569 = vmatpush1.msra.mxu0 0.0
  %4570 = vmatprep.subr.mxu0 0.0
  %4571 = vmatpush1.msra.mxu0 0.0
  %4572 = vmatprep.subr.mxu0 0.0
  %4573 = vmatpush1.msra.mxu0 0.0
  %4574 = vmatprep.subr.mxu0 0.0
  %4575 = vmatpush1.msra.mxu0 0.0
  %4576 = vmatprep.subr.mxu0 0.0
  %4577 = vmatpush1.msra.mxu0 0.0
  %4578 = vmatprep.subr.mxu0 0.0
  %4579 = vmatpush1.msra.mxu0 0.0
  %4580 = vmatprep.subr.mxu0 0.0
  %4581 = vmatpush1.msra.mxu0 0.0
  %4582 = vmatprep.subr.mxu0 0.0
  %4583 = vmatpush1.msra.mxu0 0.0
  %4584 = vmatprep.subr.mxu0 0.0
  %4585 = vmatpush1.msra.mxu0 0.0
  %4586 = vmatprep.subr.mxu0 0.0
  %4587 = vmatpush1.msra.mxu0 0.0
  %4588 = vmatprep.subr.mxu0 0.0
  %4589 = vmatpush1.msra.mxu0 0.0
  %4590 = vmatprep.subr.mxu0 0.0
  %4591 = vmatpush1.msra.mxu0 0.0
  %4592 = vmatprep.subr.mxu0 0.0
  %4593 = vmatpush1.msra.mxu0 0.0
  %4594 = vmatprep.subr.mxu0 0.0
  %4595 = vmatpush1.msra.mxu0 0.0
  %4596 = vmatprep.subr.mxu0 0.0
  %4597 = vmatpush1.msra.mxu0 0.0
  %4598 = vmatprep.subr.mxu0 0.0
  %4599 = vmatpush1.msra.mxu0 0.0
  %4600 = vmatprep.subr.mxu0 0.0
  %4601 = vmatpush1.msra.mxu0 0.0
  %4602 = vmatprep.subr.mxu0 0.0
  %4603 = vmatpush1.msra.mxu0 0.0
  %4604 = vmatprep.subr.mxu0 0.0
  %4605 = vmatpush1.msra.mxu0 0.0
  %4606 = vmatprep.subr.mxu0 0.0
  %4607 = vmatpush1.msra.mxu0 0.0
  %4608 = vmatprep.mubr.f32.mxu0 0.0
  %4609 = vmatmul.mubr.f32.gmra.mrb[0].mxu0 %v4512
  %v4610 = vpop.f32.mrb[0].mxu0
  %v4611 = vadd.f32 0.0, %v4610
  %v4612 = vpop.f32.mrb[0].mxu0
  %4613 = vmatprep.mubr.f32.mxu0 0.0
  %4614 = vmatmul.mubr.f32.gmra.mrb[0].mxu0 %v4514
  %v4615 = vpop.f32.mrb[0].mxu0
  %v4616 = vadd.f32 0.0, %v4615
  %v4617 = vpop.f32.mrb[0].mxu0
  %4618 = vmatprep.mubr.f32.mxu0 0.0
  %4619 = vmatmul.mubr.f32.gmra.mrb[0].mxu0 %v4516
  %v4620 = vpop.f32.mrb[0].mxu0
  %v4621 = vadd.f32 0.0, %v4620
  %v4622 = vpop.f32.mrb[0].mxu0
  %4623 = vmatprep.mubr.f32.mxu0 0.0
  %4624 = vmatmul.mubr.f32.gmra.mrb[0].mxu0 %v4518
  %v4625 = vpop.f32.mrb[0].mxu0
  %v4626 = vadd.f32 0.0, %v4625
  %v4627 = vpop.f32.mrb[0].mxu0
  %4628 = vmatprep.mubr.f32.mxu0 0.0
  %4629 = vmatmul.mubr.f32.gmra.mrb[0].mxu0 %v4520
  %v4630 = vpop.f32.mrb[0].mxu0
  %v4631 = vadd.f32 0.0, %v4630
  %v4632 = vpop.f32.mrb[0].mxu0
  %4633 = vmatprep.mubr.f32.mxu0 0.0
  %4634 = vmatmul.mubr.f32.gmra.mrb[0].mxu0 %v4522
  %v4635 = vpop.f32.mrb[0].mxu0
  %v4636 = vadd.f32 0.0, %v4635
  %v4637 = vpop.f32.mrb[0].mxu0
  %4638 = vmatprep.mubr.f32.mxu0 0.0
  %4639 = vmatmul.mubr.f32.gmra.mrb[0].mxu0 %v4524
  %v4640 = vpop.f32.mrb[0].mxu0
  %v4641 = vadd.f32 0.0, %v4640
  %v4642 = vpop.f32.mrb[0].mxu0
  %4643 = vmatprep.mubr.f32.mxu0 0.0
  %4644 = vmatmul.mubr.f32.gmra.mrb[0].mxu0 %v4526
  %v4645 = vpop.f32.mrb[0].mxu0
  %v4646 = vadd.f32 0.0, %v4645
  %v4647 = vpop.f32.mrb[0].mxu0
  %4648 = vmatprep.mubr.f32.mxu0 0.0
  %4649 = vmatmul.mubr.f32.gmra.mrb[0].mxu0 %v4528
  %v4650 = vpop.f32.mrb[0].mxu0
  %v4651 = vadd.f32 0.0, %v4650
  %v4652 = vpop.f32.mrb[0].mxu0
  %4653 = vmatprep.mubr.f32.mxu0 0.0
  %4654 = vmatmul.mubr.f32.gmra.mrb[0].mxu0 %v4530
  %v4655 = vpop.f32.mrb[0].mxu0
  %v4656 = vadd.f32 0.0, %v4655
  %v4657 = vpop.f32.mrb[0].mxu0
  %4658 = vmatprep.mubr.f32.mxu0 0.0
  %4659 = vmatmul.mubr.f32.gmra.mrb[0].mxu0 %v4532
  %v4660 = vpop.f32.mrb[0].mxu0
  %v4661 = vadd.f32 0.0, %v4660
  %v4662 = vpop.f32.mrb[0].mxu0
  %4663 = vmatprep.mubr.f32.mxu0 0.0
  %4664 = vmatmul.mubr.f32.gmra.mrb[0].mxu0 %v4534
  %v4665 = vpop.f32.mrb[0].mxu0
  %v4666 = vadd.f32 0.0, %v4665
  %v4667 = vpop.f32.mrb[0].mxu0
  %4668 = vmatprep.mubr.f32.mxu0 0.0
  %4669 = vmatmul.mubr.f32.gmra.mrb[0].mxu0 %v4536
  %v4670 = vpop.f32.mrb[0].mxu0
  %v4671 = vadd.f32 0.0, %v4670
  %v4672 = vpop.f32.mrb[0].mxu0
  %4673 = vmatprep.mubr.f32.mxu0 0.0
  %4674 = vmatmul.mubr.f32.gmra.mrb[0].mxu0 %v4538
  %v4675 = vpop.f32.mrb[0].mxu0
  %v4676 = vadd.f32 0.0, %v4675
  %v4677 = vpop.f32.mrb[0].mxu0
  %4678 = vmatprep.mubr.f32.mxu0 0.0
  %4679 = vmatmul.mubr.f32.gmra.mrb[0].mxu0 %v4540
  %v4680 = vpop.f32.mrb[0].mxu0
  %v4681 = vadd.f32 0.0, %v4680
  %v4682 = vpop.f32.mrb[0].mxu0
  %4683 = vmatprep.mubr.f32.mxu0 0.0
  %4684 = vmatmul.mubr.f32.gmra.mrb[0].mxu0 %v4542
  %v4685 = vpop.f32.mrb[0].mxu0
  %v4686 = vadd.f32 0.0, %v4685
  %v4687 = vpop.f32.mrb[0].mxu0
  %4688 = vdwg.mxu0
  %v4689 = vadd.f32 %v4448, %v4611
  %v4690 = vadd.f32 %v4449, %v4616
  %v4691 = vadd.f32 %v4450, %v4621
  %v4692 = vadd.f32 %v4451, %v4626
  %v4693 = vadd.f32 %v4452, %v4631
  %v4694 = vadd.f32 %v4453, %v4636
  %v4695 = vadd.f32 %v4454, %v4641
  %v4696 = vadd.f32 %v4455, %v4646
  %v4697 = vadd.f32 %v4456, %v4651
  %v4698 = vadd.f32 %v4457, %v4656
  %v4699 = vadd.f32 %v4458, %v4661
  %v4700 = vadd.f32 %v4459, %v4666
  %v4701 = vadd.f32 %v4460, %v4671
  %v4702 = vadd.f32 %v4461, %v4676
  %v4703 = vadd.f32 %v4462, %v4681
  %v4704 = vadd.f32 %v4463, %v4686
  %v4705 = vxor.u32 %v4689, 2147483648
  %v4706 = vxor.u32 %v4690, 2147483648
  %v4707 = vxor.u32 %v4691, 2147483648
  %v4708 = vxor.u32 %v4692, 2147483648
  %v4709 = vxor.u32 %v4693, 2147483648
  %v4710 = vxor.u32 %v4694, 2147483648
  %v4711 = vxor.u32 %v4695, 2147483648
  %v4712 = vxor.u32 %v4696, 2147483648
  %v4713 = vxor.u32 %v4697, 2147483648
  %v4714 = vxor.u32 %v4698, 2147483648
  %v4715 = vxor.u32 %v4699, 2147483648
  %v4716 = vxor.u32 %v4700, 2147483648
  %v4717 = vxor.u32 %v4701, 2147483648
  %v4718 = vxor.u32 %v4702, 2147483648
  %v4719 = vxor.u32 %v4703, 2147483648
  %v4720 = vxor.u32 %v4704, 2147483648
  %v4721 = vmul.f32 %v4705, 1.442695
  %v4722 = vpow.pop %v4721
  %v4723 = vmul.f32 %v4706, 1.442695
  %v4724 = vpow.pop %v4723
  %v4725 = vmul.f32 %v4707, 1.442695
  %v4726 = vpow.pop %v4725
  %v4727 = vmul.f32 %v4708, 1.442695
  %v4728 = vpow.pop %v4727
  %v4729 = vmul.f32 %v4709, 1.442695
  %v4730 = vpow.pop %v4729
  %v4731 = vmul.f32 %v4710, 1.442695
  %v4732 = vpow.pop %v4731
  %v4733 = vmul.f32 %v4711, 1.442695
  %v4734 = vpow.pop %v4733
  %v4735 = vmul.f32 %v4712, 1.442695
  %v4736 = vpow.pop %v4735
  %v4737 = vmul.f32 %v4713, 1.442695
  %v4738 = vpow.pop %v4737
  %v4739 = vmul.f32 %v4714, 1.442695
  %v4740 = vpow.pop %v4739
  %v4741 = vmul.f32 %v4715, 1.442695
  %v4742 = vpow.pop %v4741
  %v4743 = vmul.f32 %v4716, 1.442695
  %v4744 = vpow.pop %v4743
  %v4745 = vmul.f32 %v4717, 1.442695
  %v4746 = vpow.pop %v4745
  %v4747 = vmul.f32 %v4718, 1.442695
  %v4748 = vpow.pop %v4747
  %v4749 = vmul.f32 %v4719, 1.442695
  %v4750 = vpow.pop %v4749
  %v4751 = vmul.f32 %v4720, 1.442695
  %v4752 = vpow.pop %v4751
  %v4753 = vadd.f32 %v4722, 1.0
  %v4754 = vadd.f32 %v4724, 1.0
  %v4755 = vadd.f32 %v4726, 1.0
  %v4756 = vadd.f32 %v4728, 1.0
  %v4757 = vadd.f32 %v4730, 1.0
  %v4758 = vadd.f32 %v4732, 1.0
  %v4759 = vadd.f32 %v4734, 1.0
  %v4760 = vadd.f32 %v4736, 1.0
  %v4761 = vadd.f32 %v4738, 1.0
  %v4762 = vadd.f32 %v4740, 1.0
  %v4763 = vadd.f32 %v4742, 1.0
  %v4764 = vadd.f32 %v4744, 1.0
  %v4765 = vadd.f32 %v4746, 1.0
  %v4766 = vadd.f32 %v4748, 1.0
  %v4767 = vadd.f32 %v4750, 1.0
  %v4768 = vadd.f32 %v4752, 1.0
  %v4769 = vrcp.pop %v4753
  %v4770 = vmul.f32 1.0, %v4769
  %v4771 = vrcp.pop %v4754
  %v4772 = vmul.f32 1.0, %v4771
  %v4773 = vrcp.pop %v4755
  %v4774 = vmul.f32 1.0, %v4773
  %v4775 = vrcp.pop %v4756
  %v4776 = vmul.f32 1.0, %v4775
  %v4777 = vrcp.pop %v4757
  %v4778 = vmul.f32 1.0, %v4777
  %v4779 = vrcp.pop %v4758
  %v4780 = vmul.f32 1.0, %v4779
  %v4781 = vrcp.pop %v4759
  %v4782 = vmul.f32 1.0, %v4781
  %v4783 = vrcp.pop %v4760
  %v4784 = vmul.f32 1.0, %v4783
  %v4785 = vrcp.pop %v4761
  %v4786 = vmul.f32 1.0, %v4785
  %v4787 = vrcp.pop %v4762
  %v4788 = vmul.f32 1.0, %v4787
  %v4789 = vrcp.pop %v4763
  %v4790 = vmul.f32 1.0, %v4789
  %v4791 = vrcp.pop %v4764
  %v4792 = vmul.f32 1.0, %v4791
  %v4793 = vrcp.pop %v4765
  %v4794 = vmul.f32 1.0, %v4793
  %v4795 = vrcp.pop %v4766
  %v4796 = vmul.f32 1.0, %v4795
  %v4797 = vrcp.pop %v4767
  %v4798 = vmul.f32 1.0, %v4797
  %v4799 = vrcp.pop %v4768
  %v4800 = vmul.f32 1.0, %v4799
  %v4801 = vtanh.pop %v4689
  %v4802 = vtanh.pop %v4690
  %v4803 = vtanh.pop %v4691
  %v4804 = vtanh.pop %v4692
  %v4805 = vtanh.pop %v4693
  %v4806 = vtanh.pop %v4694
  %v4807 = vtanh.pop %v4695
  %v4808 = vtanh.pop %v4696
  %v4809 = vtanh.pop %v4697
  %v4810 = vtanh.pop %v4698
  %v4811 = vtanh.pop %v4699
  %v4812 = vtanh.pop %v4700
  %v4813 = vtanh.pop %v4701
  %v4814 = vtanh.pop %v4702
  %v4815 = vtanh.pop %v4703
  %v4816 = vtanh.pop %v4704
  %v4817 = vmul.f32 %v4770, %v4336
  %v4818 = vmul.f32 %v4772, %v4337
  %v4819 = vmul.f32 %v4774, %v4338
  %v4820 = vmul.f32 %v4776, %v4339
  %v4821 = vmul.f32 %v4778, %v4340
  %v4822 = vmul.f32 %v4780, %v4341
  %v4823 = vmul.f32 %v4782, %v4342
  %v4824 = vmul.f32 %v4784, %v4343
  %v4825 = vmul.f32 %v4786, %v4344
  %v4826 = vmul.f32 %v4788, %v4345
  %v4827 = vmul.f32 %v4790, %v4346
  %v4828 = vmul.f32 %v4792, %v4347
  %v4829 = vmul.f32 %v4794, %v4348
  %v4830 = vmul.f32 %v4796, %v4349
  %v4831 = vmul.f32 %v4798, %v4350
  %v4832 = vmul.f32 %v4800, %v4351
  %4849 = vrot.lane.b32.xlu0 %v4801, 64
  %v4850 = vpop.permute.xlu0 %4849
  %4851 = vrot.lane.b32.xlu0 %v4802, 64
  %v4852 = vpop.permute.xlu0 %4851
  %4853 = vrot.lane.b32.xlu0 %v4803, 64
  %v4854 = vpop.permute.xlu0 %4853
  %4855 = vrot.lane.b32.xlu0 %v4804, 64
  %v4856 = vpop.permute.xlu0 %4855
  %4857 = vrot.lane.b32.xlu0 %v4805, 64
  %v4858 = vpop.permute.xlu0 %4857
  %4859 = vrot.lane.b32.xlu0 %v4806, 64
  %v4860 = vpop.permute.xlu0 %4859
  %4861 = vrot.lane.b32.xlu0 %v4807, 64
  %v4862 = vpop.permute.xlu0 %4861
  %4863 = vrot.lane.b32.xlu0 %v4808, 64
  %v4864 = vpop.permute.xlu0 %4863
  %4865 = vrot.lane.b32.xlu0 %v4809, 64
  %v4866 = vpop.permute.xlu0 %4865
  %4867 = vrot.lane.b32.xlu0 %v4810, 64
  %v4868 = vpop.permute.xlu0 %4867
  %4869 = vrot.lane.b32.xlu0 %v4811, 64
  %v4870 = vpop.permute.xlu0 %4869
  %4871 = vrot.lane.b32.xlu0 %v4812, 64
  %v4872 = vpop.permute.xlu0 %4871
  %4873 = vrot.lane.b32.xlu0 %v4813, 64
  %v4874 = vpop.permute.xlu0 %4873
  %4875 = vrot.lane.b32.xlu0 %v4814, 64
  %v4876 = vpop.permute.xlu0 %4875
  %4877 = vrot.lane.b32.xlu0 %v4815, 64
  %v4878 = vpop.permute.xlu0 %4877
  %4879 = vrot.lane.b32.xlu0 %v4816, 64
  %v4880 = vpop.permute.xlu0 %4879
  %v4897 = vmul.f32 %v4770, %v4850
  %v4898 = vmul.f32 %v4772, %v4852
  %v4899 = vmul.f32 %v4774, %v4854
  %v4900 = vmul.f32 %v4776, %v4856
  %v4901 = vmul.f32 %v4778, %v4858
  %v4902 = vmul.f32 %v4780, %v4860
  %v4903 = vmul.f32 %v4782, %v4862
  %v4904 = vmul.f32 %v4784, %v4864
  %v4905 = vmul.f32 %v4786, %v4866
  %v4906 = vmul.f32 %v4788, %v4868
  %v4907 = vmul.f32 %v4790, %v4870
  %v4908 = vmul.f32 %v4792, %v4872
  %v4909 = vmul.f32 %v4794, %v4874
  %v4910 = vmul.f32 %v4796, %v4876
  %v4911 = vmul.f32 %v4798, %v4878
  %v4912 = vmul.f32 %v4800, %v4880
  %4929 = vrot.lane.b32.xlu0 %v4897, 32
  %v4930 = vpop.permute.xlu0 %4929
  %4931 = vrot.lane.b32.xlu0 %v4898, 32
  %v4932 = vpop.permute.xlu0 %4931
  %4933 = vrot.lane.b32.xlu0 %v4899, 32
  %v4934 = vpop.permute.xlu0 %4933
  %4935 = vrot.lane.b32.xlu0 %v4900, 32
  %v4936 = vpop.permute.xlu0 %4935
  %4937 = vrot.lane.b32.xlu0 %v4901, 32
  %v4938 = vpop.permute.xlu0 %4937
  %4939 = vrot.lane.b32.xlu0 %v4902, 32
  %v4940 = vpop.permute.xlu0 %4939
  %4941 = vrot.lane.b32.xlu0 %v4903, 32
  %v4942 = vpop.permute.xlu0 %4941
  %4943 = vrot.lane.b32.xlu0 %v4904, 32
  %v4944 = vpop.permute.xlu0 %4943
  %4945 = vrot.lane.b32.xlu0 %v4905, 32
  %v4946 = vpop.permute.xlu0 %4945
  %4947 = vrot.lane.b32.xlu0 %v4906, 32
  %v4948 = vpop.permute.xlu0 %4947
  %4949 = vrot.lane.b32.xlu0 %v4907, 32
  %v4950 = vpop.permute.xlu0 %4949
  %4951 = vrot.lane.b32.xlu0 %v4908, 32
  %v4952 = vpop.permute.xlu0 %4951
  %4953 = vrot.lane.b32.xlu0 %v4909, 32
  %v4954 = vpop.permute.xlu0 %4953
  %4955 = vrot.lane.b32.xlu0 %v4910, 32
  %v4956 = vpop.permute.xlu0 %4955
  %4957 = vrot.lane.b32.xlu0 %v4911, 32
  %v4958 = vpop.permute.xlu0 %4957
  %4959 = vrot.lane.b32.xlu0 %v4912, 32
  %v4960 = vpop.permute.xlu0 %4959
  %v4977 = vadd.f32 %v4817, %v4930
  %v4978 = vadd.f32 %v4818, %v4932
  %v4979 = vadd.f32 %v4819, %v4934
  %v4980 = vadd.f32 %v4820, %v4936
  %v4981 = vadd.f32 %v4821, %v4938
  %v4982 = vadd.f32 %v4822, %v4940
  %v4983 = vadd.f32 %v4823, %v4942
  %v4984 = vadd.f32 %v4824, %v4944
  %v4985 = vadd.f32 %v4825, %v4946
  %v4986 = vadd.f32 %v4826, %v4948
  %v4987 = vadd.f32 %v4827, %v4950
  %v4988 = vadd.f32 %v4828, %v4952
  %v4989 = vadd.f32 %v4829, %v4954
  %v4990 = vadd.f32 %v4830, %v4956
  %v4991 = vadd.f32 %v4831, %v4958
  %v4992 = vadd.f32 %v4832, %v4960
  %v4993 = vtanh.pop %v4977
  %v4994 = vtanh.pop %v4978
  %v4995 = vtanh.pop %v4979
  %v4996 = vtanh.pop %v4980
  %v4997 = vtanh.pop %v4981
  %v4998 = vtanh.pop %v4982
  %v4999 = vtanh.pop %v4983
  %v5000 = vtanh.pop %v4984
  %v5001 = vtanh.pop %v4985
  %v5002 = vtanh.pop %v4986
  %v5003 = vtanh.pop %v4987
  %v5004 = vtanh.pop %v4988
  %v5005 = vtanh.pop %v4989
  %v5006 = vtanh.pop %v4990
  %v5007 = vtanh.pop %v4991
  %v5008 = vtanh.pop %v4992
  %5025 = vrot.lane.b32.xlu0 %v4993, 64
  %v5026 = vpop.permute.xlu0 %5025
  %5027 = vrot.lane.b32.xlu0 %v4994, 64
  %v5028 = vpop.permute.xlu0 %5027
  %5029 = vrot.lane.b32.xlu0 %v4995, 64
  %v5030 = vpop.permute.xlu0 %5029
  %5031 = vrot.lane.b32.xlu0 %v4996, 64
  %v5032 = vpop.permute.xlu0 %5031
  %5033 = vrot.lane.b32.xlu0 %v4997, 64
  %v5034 = vpop.permute.xlu0 %5033
  %5035 = vrot.lane.b32.xlu0 %v4998, 64
  %v5036 = vpop.permute.xlu0 %5035
  %5037 = vrot.lane.b32.xlu0 %v4999, 64
  %v5038 = vpop.permute.xlu0 %5037
  %5039 = vrot.lane.b32.xlu0 %v5000, 64
  %v5040 = vpop.permute.xlu0 %5039
  %5041 = vrot.lane.b32.xlu0 %v5001, 64
  %v5042 = vpop.permute.xlu0 %5041
  %5043 = vrot.lane.b32.xlu0 %v5002, 64
  %v5044 = vpop.permute.xlu0 %5043
  %5045 = vrot.lane.b32.xlu0 %v5003, 64
  %v5046 = vpop.permute.xlu0 %5045
  %5047 = vrot.lane.b32.xlu0 %v5004, 64
  %v5048 = vpop.permute.xlu0 %5047
  %5049 = vrot.lane.b32.xlu0 %v5005, 64
  %v5050 = vpop.permute.xlu0 %5049
  %5051 = vrot.lane.b32.xlu0 %v5006, 64
  %v5052 = vpop.permute.xlu0 %5051
  %5053 = vrot.lane.b32.xlu0 %v5007, 64
  %v5054 = vpop.permute.xlu0 %5053
  %5055 = vrot.lane.b32.xlu0 %v5008, 64
  %v5056 = vpop.permute.xlu0 %5055
  %v5073 = vmul.f32 %v4770, %v5026
  %v5074 = vmul.f32 %v4772, %v5028
  %v5075 = vmul.f32 %v4774, %v5030
  %v5076 = vmul.f32 %v4776, %v5032
  %v5077 = vmul.f32 %v4778, %v5034
  %v5078 = vmul.f32 %v4780, %v5036
  %v5079 = vmul.f32 %v4782, %v5038
  %v5080 = vmul.f32 %v4784, %v5040
  %v5081 = vmul.f32 %v4786, %v5042
  %v5082 = vmul.f32 %v4788, %v5044
  %v5083 = vmul.f32 %v4790, %v5046
  %v5084 = vmul.f32 %v4792, %v5048
  %v5085 = vmul.f32 %v4794, %v5050
  %v5086 = vmul.f32 %v4796, %v5052
  %v5087 = vmul.f32 %v4798, %v5054
  %v5088 = vmul.f32 %v4800, %v5056
  %v5089 = vld [vmem:[%s1939] sm:$0xff]
  %v5090 = vld [vmem:[%s1939 + $0x8] sm:$0xff]
  %v5091 = vld [vmem:[%s1939 + $0x10] sm:$0xff]
  %v5092 = vld [vmem:[%s1939 + $0x18] sm:$0xff]
  %v5093 = vld [vmem:[%s1939 + $0x20] sm:$0xff]
  %v5094 = vld [vmem:[%s1939 + $0x28] sm:$0xff]
  %v5095 = vld [vmem:[%s1939 + $0x30] sm:$0xff]
  %v5096 = vld [vmem:[%s1939 + $0x38] sm:$0xff]
  %v5097 = vld [vmem:[%s1939 + $0x40] sm:$0xff]
  %v5098 = vld [vmem:[%s1939 + $0x48] sm:$0xff]
  %v5099 = vld [vmem:[%s1939 + $0x50] sm:$0xff]
  %v5100 = vld [vmem:[%s1939 + $0x58] sm:$0xff]
  %v5101 = vld [vmem:[%s1939 + $0x60] sm:$0xff]
  %v5102 = vld [vmem:[%s1939 + $0x68] sm:$0xff]
  %v5103 = vld [vmem:[%s1939 + $0x70] sm:$0xff]
  %v5104 = vld [vmem:[%s1939 + $0x78] sm:$0xff]
  %5121 = vrot.lane.b32.xlu0 %v5073, 32
  %v5122 = vpop.permute.xlu0 %5121
  %5123 = vrot.lane.b32.xlu0 %v5074, 32
  %v5124 = vpop.permute.xlu0 %5123
  %5125 = vrot.lane.b32.xlu0 %v5075, 32
  %v5126 = vpop.permute.xlu0 %5125
  %5127 = vrot.lane.b32.xlu0 %v5076, 32
  %v5128 = vpop.permute.xlu0 %5127
  %5129 = vrot.lane.b32.xlu0 %v5077, 32
  %v5130 = vpop.permute.xlu0 %5129
  %5131 = vrot.lane.b32.xlu0 %v5078, 32
  %v5132 = vpop.permute.xlu0 %5131
  %5133 = vrot.lane.b32.xlu0 %v5079, 32
  %v5134 = vpop.permute.xlu0 %5133
  %5135 = vrot.lane.b32.xlu0 %v5080, 32
  %v5136 = vpop.permute.xlu0 %5135
  %5137 = vrot.lane.b32.xlu0 %v5081, 32
  %v5138 = vpop.permute.xlu0 %5137
  %5139 = vrot.lane.b32.xlu0 %v5082, 32
  %v5140 = vpop.permute.xlu0 %5139
  %5141 = vrot.lane.b32.xlu0 %v5083, 32
  %v5142 = vpop.permute.xlu0 %5141
  %5143 = vrot.lane.b32.xlu0 %v5084, 32
  %v5144 = vpop.permute.xlu0 %5143
  %5145 = vrot.lane.b32.xlu0 %v5085, 32
  %v5146 = vpop.permute.xlu0 %5145
  %5147 = vrot.lane.b32.xlu0 %v5086, 32
  %v5148 = vpop.permute.xlu0 %5147
  %5149 = vrot.lane.b32.xlu0 %v5087, 32
  %v5150 = vpop.permute.xlu0 %5149
  %5151 = vrot.lane.b32.xlu0 %v5088, 32
  %v5152 = vpop.permute.xlu0 %5151
  %v5153 = vsel %vm1976, %v5122, 0
  %v5155 = vsel %vm1976, %v5124, 0
  %v5157 = vsel %vm1976, %v5126, 0
  %v5159 = vsel %vm1976, %v5128, 0
  %v5161 = vsel %vm1976, %v5130, 0
  %v5163 = vsel %vm1976, %v5132, 0
  %v5165 = vsel %vm1976, %v5134, 0
  %v5167 = vsel %vm1976, %v5136, 0
  %v5169 = vsel %vm1976, %v5138, 0
  %v5171 = vsel %vm1976, %v5140, 0
  %v5173 = vsel %vm1976, %v5142, 0
  %v5175 = vsel %vm1976, %v5144, 0
  %v5177 = vsel %vm1976, %v5146, 0
  %v5179 = vsel %vm1976, %v5148, 0
  %v5181 = vsel %vm1976, %v5150, 0
  %v5183 = vsel %vm1976, %v5152, 0
  %5185 = vmatprep.subr.mxu0 0.0
  %5186 = vmatpush1.msra.mxu0 %v1956
  %5187 = vmatprep.subr.mxu0 0.0
  %5188 = vmatpush1.msra.mxu0 %v1957
  %5189 = vmatprep.subr.mxu0 0.0
  %5190 = vmatpush1.msra.mxu0 %v1958
  %5191 = vmatprep.subr.mxu0 0.0
  %5192 = vmatpush1.msra.mxu0 %v1959
  %5193 = vmatprep.subr.mxu0 0.0
  %5194 = vmatpush1.msra.mxu0 0.0
  %5195 = vmatprep.subr.mxu0 0.0
  %5196 = vmatpush1.msra.mxu0 0.0
  %5197 = vmatprep.subr.mxu0 0.0
  %5198 = vmatpush1.msra.mxu0 0.0
  %5199 = vmatprep.subr.mxu0 0.0
  %5200 = vmatpush1.msra.mxu0 0.0
  %5201 = vmatprep.subr.mxu0 0.0
  %5202 = vmatpush1.msra.mxu0 0.0
  %5203 = vmatprep.subr.mxu0 0.0
  %5204 = vmatpush1.msra.mxu0 0.0
  %5205 = vmatprep.subr.mxu0 0.0
  %5206 = vmatpush1.msra.mxu0 0.0
  %5207 = vmatprep.subr.mxu0 0.0
  %5208 = vmatpush1.msra.mxu0 0.0
  %5209 = vmatprep.subr.mxu0 0.0
  %5210 = vmatpush1.msra.mxu0 0.0
  %5211 = vmatprep.subr.mxu0 0.0
  %5212 = vmatpush1.msra.mxu0 0.0
  %5213 = vmatprep.subr.mxu0 0.0
  %5214 = vmatpush1.msra.mxu0 0.0
  %5215 = vmatprep.subr.mxu0 0.0
  %5216 = vmatpush1.msra.mxu0 0.0
  %5217 = vmatprep.subr.mxu0 0.0
  %5218 = vmatpush1.msra.mxu0 0.0
  %5219 = vmatprep.subr.mxu0 0.0
  %5220 = vmatpush1.msra.mxu0 0.0
  %5221 = vmatprep.subr.mxu0 0.0
  %5222 = vmatpush1.msra.mxu0 0.0
  %5223 = vmatprep.subr.mxu0 0.0
  %5224 = vmatpush1.msra.mxu0 0.0
  %5225 = vmatprep.subr.mxu0 0.0
  %5226 = vmatpush1.msra.mxu0 0.0
  %5227 = vmatprep.subr.mxu0 0.0
  %5228 = vmatpush1.msra.mxu0 0.0
  %5229 = vmatprep.subr.mxu0 0.0
  %5230 = vmatpush1.msra.mxu0 0.0
  %5231 = vmatprep.subr.mxu0 0.0
  %5232 = vmatpush1.msra.mxu0 0.0
  %5233 = vmatprep.subr.mxu0 0.0
  %5234 = vmatpush1.msra.mxu0 0.0
  %5235 = vmatprep.subr.mxu0 0.0
  %5236 = vmatpush1.msra.mxu0 0.0
  %5237 = vmatprep.subr.mxu0 0.0
  %5238 = vmatpush1.msra.mxu0 0.0
  %5239 = vmatprep.subr.mxu0 0.0
  %5240 = vmatpush1.msra.mxu0 0.0
  %5241 = vmatprep.subr.mxu0 0.0
  %5242 = vmatpush1.msra.mxu0 0.0
  %5243 = vmatprep.subr.mxu0 0.0
  %5244 = vmatpush1.msra.mxu0 0.0
  %5245 = vmatprep.subr.mxu0 0.0
  %5246 = vmatpush1.msra.mxu0 0.0
  %5247 = vmatprep.subr.mxu0 0.0
  %5248 = vmatpush1.msra.mxu0 0.0
  %5249 = vmatprep.mubr.f32.mxu0 0.0
  %5250 = vmatmul.mubr.f32.gmra.mrb[0].mxu0 %v5153
  %v5251 = vpop.f32.mrb[0].mxu0
  %v5252 = vadd.f32 0.0, %v5251
  %v5253 = vpop.f32.mrb[0].mxu0
  %5254 = vmatprep.mubr.f32.mxu0 0.0
  %5255 = vmatmul.mubr.f32.gmra.mrb[0].mxu0 %v5155
  %v5256 = vpop.f32.mrb[0].mxu0
  %v5257 = vadd.f32 0.0, %v5256
  %v5258 = vpop.f32.mrb[0].mxu0
  %5259 = vmatprep.mubr.f32.mxu0 0.0
  %5260 = vmatmul.mubr.f32.gmra.mrb[0].mxu0 %v5157
  %v5261 = vpop.f32.mrb[0].mxu0
  %v5262 = vadd.f32 0.0, %v5261
  %v5263 = vpop.f32.mrb[0].mxu0
  %5264 = vmatprep.mubr.f32.mxu0 0.0
  %5265 = vmatmul.mubr.f32.gmra.mrb[0].mxu0 %v5159
  %v5266 = vpop.f32.mrb[0].mxu0
  %v5267 = vadd.f32 0.0, %v5266
  %v5268 = vpop.f32.mrb[0].mxu0
  %5269 = vmatprep.mubr.f32.mxu0 0.0
  %5270 = vmatmul.mubr.f32.gmra.mrb[0].mxu0 %v5161
  %v5271 = vpop.f32.mrb[0].mxu0
  %v5272 = vadd.f32 0.0, %v5271
  %v5273 = vpop.f32.mrb[0].mxu0
  %5274 = vmatprep.mubr.f32.mxu0 0.0
  %5275 = vmatmul.mubr.f32.gmra.mrb[0].mxu0 %v5163
  %v5276 = vpop.f32.mrb[0].mxu0
  %v5277 = vadd.f32 0.0, %v5276
  %v5278 = vpop.f32.mrb[0].mxu0
  %5279 = vmatprep.mubr.f32.mxu0 0.0
  %5280 = vmatmul.mubr.f32.gmra.mrb[0].mxu0 %v5165
  %v5281 = vpop.f32.mrb[0].mxu0
  %v5282 = vadd.f32 0.0, %v5281
  %v5283 = vpop.f32.mrb[0].mxu0
  %5284 = vmatprep.mubr.f32.mxu0 0.0
  %5285 = vmatmul.mubr.f32.gmra.mrb[0].mxu0 %v5167
  %v5286 = vpop.f32.mrb[0].mxu0
  %v5287 = vadd.f32 0.0, %v5286
  %v5288 = vpop.f32.mrb[0].mxu0
  %5289 = vmatprep.mubr.f32.mxu0 0.0
  %5290 = vmatmul.mubr.f32.gmra.mrb[0].mxu0 %v5169
  %v5291 = vpop.f32.mrb[0].mxu0
  %v5292 = vadd.f32 0.0, %v5291
  %v5293 = vpop.f32.mrb[0].mxu0
  %5294 = vmatprep.mubr.f32.mxu0 0.0
  %5295 = vmatmul.mubr.f32.gmra.mrb[0].mxu0 %v5171
  %v5296 = vpop.f32.mrb[0].mxu0
  %v5297 = vadd.f32 0.0, %v5296
  %v5298 = vpop.f32.mrb[0].mxu0
  %5299 = vmatprep.mubr.f32.mxu0 0.0
  %5300 = vmatmul.mubr.f32.gmra.mrb[0].mxu0 %v5173
  %v5301 = vpop.f32.mrb[0].mxu0
  %v5302 = vadd.f32 0.0, %v5301
  %v5303 = vpop.f32.mrb[0].mxu0
  %5304 = vmatprep.mubr.f32.mxu0 0.0
  %5305 = vmatmul.mubr.f32.gmra.mrb[0].mxu0 %v5175
  %v5306 = vpop.f32.mrb[0].mxu0
  %v5307 = vadd.f32 0.0, %v5306
  %v5308 = vpop.f32.mrb[0].mxu0
  %5309 = vmatprep.mubr.f32.mxu0 0.0
  %5310 = vmatmul.mubr.f32.gmra.mrb[0].mxu0 %v5177
  %v5311 = vpop.f32.mrb[0].mxu0
  %v5312 = vadd.f32 0.0, %v5311
  %v5313 = vpop.f32.mrb[0].mxu0
  %5314 = vmatprep.mubr.f32.mxu0 0.0
  %5315 = vmatmul.mubr.f32.gmra.mrb[0].mxu0 %v5179
  %v5316 = vpop.f32.mrb[0].mxu0
  %v5317 = vadd.f32 0.0, %v5316
  %v5318 = vpop.f32.mrb[0].mxu0
  %5319 = vmatprep.mubr.f32.mxu0 0.0
  %5320 = vmatmul.mubr.f32.gmra.mrb[0].mxu0 %v5181
  %v5321 = vpop.f32.mrb[0].mxu0
  %v5322 = vadd.f32 0.0, %v5321
  %v5323 = vpop.f32.mrb[0].mxu0
  %5324 = vmatprep.mubr.f32.mxu0 0.0
  %5325 = vmatmul.mubr.f32.gmra.mrb[0].mxu0 %v5183
  %v5326 = vpop.f32.mrb[0].mxu0
  %v5327 = vadd.f32 0.0, %v5326
  %v5328 = vpop.f32.mrb[0].mxu0
  %5329 = vdwg.mxu0
  %v5330 = vadd.f32 %v5089, %v5252
  %v5331 = vadd.f32 %v5090, %v5257
  %v5332 = vadd.f32 %v5091, %v5262
  %v5333 = vadd.f32 %v5092, %v5267
  %v5334 = vadd.f32 %v5093, %v5272
  %v5335 = vadd.f32 %v5094, %v5277
  %v5336 = vadd.f32 %v5095, %v5282
  %v5337 = vadd.f32 %v5096, %v5287
  %v5338 = vadd.f32 %v5097, %v5292
  %v5339 = vadd.f32 %v5098, %v5297
  %v5340 = vadd.f32 %v5099, %v5302
  %v5341 = vadd.f32 %v5100, %v5307
  %v5342 = vadd.f32 %v5101, %v5312
  %v5343 = vadd.f32 %v5102, %v5317
  %v5344 = vadd.f32 %v5103, %v5322
  %v5345 = vadd.f32 %v5104, %v5327
  %v5346 = vxor.u32 %v5330, 2147483648
  %v5347 = vxor.u32 %v5331, 2147483648
  %v5348 = vxor.u32 %v5332, 2147483648
  %v5349 = vxor.u32 %v5333, 2147483648
  %v5350 = vxor.u32 %v5334, 2147483648
  %v5351 = vxor.u32 %v5335, 2147483648
  %v5352 = vxor.u32 %v5336, 2147483648
  %v5353 = vxor.u32 %v5337, 2147483648
  %v5354 = vxor.u32 %v5338, 2147483648
  %v5355 = vxor.u32 %v5339, 2147483648
  %v5356 = vxor.u32 %v5340, 2147483648
  %v5357 = vxor.u32 %v5341, 2147483648
  %v5358 = vxor.u32 %v5342, 2147483648
  %v5359 = vxor.u32 %v5343, 2147483648
  %v5360 = vxor.u32 %v5344, 2147483648
  %v5361 = vxor.u32 %v5345, 2147483648
  %v5362 = vmul.f32 %v5346, 1.442695
  %v5363 = vpow.pop %v5362
  %v5364 = vmul.f32 %v5347, 1.442695
  %v5365 = vpow.pop %v5364
  %v5366 = vmul.f32 %v5348, 1.442695
  %v5367 = vpow.pop %v5366
  %v5368 = vmul.f32 %v5349, 1.442695
  %v5369 = vpow.pop %v5368
  %v5370 = vmul.f32 %v5350, 1.442695
  %v5371 = vpow.pop %v5370
  %v5372 = vmul.f32 %v5351, 1.442695
  %v5373 = vpow.pop %v5372
  %v5374 = vmul.f32 %v5352, 1.442695
  %v5375 = vpow.pop %v5374
  %v5376 = vmul.f32 %v5353, 1.442695
  %v5377 = vpow.pop %v5376
  %v5378 = vmul.f32 %v5354, 1.442695
  %v5379 = vpow.pop %v5378
  %v5380 = vmul.f32 %v5355, 1.442695
  %v5381 = vpow.pop %v5380
  %v5382 = vmul.f32 %v5356, 1.442695
  %v5383 = vpow.pop %v5382
  %v5384 = vmul.f32 %v5357, 1.442695
  %v5385 = vpow.pop %v5384
  %v5386 = vmul.f32 %v5358, 1.442695
  %v5387 = vpow.pop %v5386
  %v5388 = vmul.f32 %v5359, 1.442695
  %v5389 = vpow.pop %v5388
  %v5390 = vmul.f32 %v5360, 1.442695
  %v5391 = vpow.pop %v5390
  %v5392 = vmul.f32 %v5361, 1.442695
  %v5393 = vpow.pop %v5392
  %v5394 = vadd.f32 %v5363, 1.0
  %v5395 = vadd.f32 %v5365, 1.0
  %v5396 = vadd.f32 %v5367, 1.0
  %v5397 = vadd.f32 %v5369, 1.0
  %v5398 = vadd.f32 %v5371, 1.0
  %v5399 = vadd.f32 %v5373, 1.0
  %v5400 = vadd.f32 %v5375, 1.0
  %v5401 = vadd.f32 %v5377, 1.0
  %v5402 = vadd.f32 %v5379, 1.0
  %v5403 = vadd.f32 %v5381, 1.0
  %v5404 = vadd.f32 %v5383, 1.0
  %v5405 = vadd.f32 %v5385, 1.0
  %v5406 = vadd.f32 %v5387, 1.0
  %v5407 = vadd.f32 %v5389, 1.0
  %v5408 = vadd.f32 %v5391, 1.0
  %v5409 = vadd.f32 %v5393, 1.0
  %v5410 = vrcp.pop %v5394
  %v5411 = vmul.f32 1.0, %v5410
  %v5412 = vrcp.pop %v5395
  %v5413 = vmul.f32 1.0, %v5412
  %v5414 = vrcp.pop %v5396
  %v5415 = vmul.f32 1.0, %v5414
  %v5416 = vrcp.pop %v5397
  %v5417 = vmul.f32 1.0, %v5416
  %v5418 = vrcp.pop %v5398
  %v5419 = vmul.f32 1.0, %v5418
  %v5420 = vrcp.pop %v5399
  %v5421 = vmul.f32 1.0, %v5420
  %v5422 = vrcp.pop %v5400
  %v5423 = vmul.f32 1.0, %v5422
  %v5424 = vrcp.pop %v5401
  %v5425 = vmul.f32 1.0, %v5424
  %v5426 = vrcp.pop %v5402
  %v5427 = vmul.f32 1.0, %v5426
  %v5428 = vrcp.pop %v5403
  %v5429 = vmul.f32 1.0, %v5428
  %v5430 = vrcp.pop %v5404
  %v5431 = vmul.f32 1.0, %v5430
  %v5432 = vrcp.pop %v5405
  %v5433 = vmul.f32 1.0, %v5432
  %v5434 = vrcp.pop %v5406
  %v5435 = vmul.f32 1.0, %v5434
  %v5436 = vrcp.pop %v5407
  %v5437 = vmul.f32 1.0, %v5436
  %v5438 = vrcp.pop %v5408
  %v5439 = vmul.f32 1.0, %v5438
  %v5440 = vrcp.pop %v5409
  %v5441 = vmul.f32 1.0, %v5440
  %v5442 = vtanh.pop %v5330
  %v5443 = vtanh.pop %v5331
  %v5444 = vtanh.pop %v5332
  %v5445 = vtanh.pop %v5333
  %v5446 = vtanh.pop %v5334
  %v5447 = vtanh.pop %v5335
  %v5448 = vtanh.pop %v5336
  %v5449 = vtanh.pop %v5337
  %v5450 = vtanh.pop %v5338
  %v5451 = vtanh.pop %v5339
  %v5452 = vtanh.pop %v5340
  %v5453 = vtanh.pop %v5341
  %v5454 = vtanh.pop %v5342
  %v5455 = vtanh.pop %v5343
  %v5456 = vtanh.pop %v5344
  %v5457 = vtanh.pop %v5345
  %v5458 = vmul.f32 %v5411, %v4977
  %v5459 = vmul.f32 %v5413, %v4978
  %v5460 = vmul.f32 %v5415, %v4979
  %v5461 = vmul.f32 %v5417, %v4980
  %v5462 = vmul.f32 %v5419, %v4981
  %v5463 = vmul.f32 %v5421, %v4982
  %v5464 = vmul.f32 %v5423, %v4983
  %v5465 = vmul.f32 %v5425, %v4984
  %v5466 = vmul.f32 %v5427, %v4985
  %v5467 = vmul.f32 %v5429, %v4986
  %v5468 = vmul.f32 %v5431, %v4987
  %v5469 = vmul.f32 %v5433, %v4988
  %v5470 = vmul.f32 %v5435, %v4989
  %v5471 = vmul.f32 %v5437, %v4990
  %v5472 = vmul.f32 %v5439, %v4991
  %v5473 = vmul.f32 %v5441, %v4992
  %5490 = vrot.lane.b32.xlu0 %v5442, 64
  %v5491 = vpop.permute.xlu0 %5490
  %5492 = vrot.lane.b32.xlu0 %v5443, 64
  %v5493 = vpop.permute.xlu0 %5492
  %5494 = vrot.lane.b32.xlu0 %v5444, 64
  %v5495 = vpop.permute.xlu0 %5494
  %5496 = vrot.lane.b32.xlu0 %v5445, 64
  %v5497 = vpop.permute.xlu0 %5496
  %5498 = vrot.lane.b32.xlu0 %v5446, 64
  %v5499 = vpop.permute.xlu0 %5498
  %5500 = vrot.lane.b32.xlu0 %v5447, 64
  %v5501 = vpop.permute.xlu0 %5500
  %5502 = vrot.lane.b32.xlu0 %v5448, 64
  %v5503 = vpop.permute.xlu0 %5502
  %5504 = vrot.lane.b32.xlu0 %v5449, 64
  %v5505 = vpop.permute.xlu0 %5504
  %5506 = vrot.lane.b32.xlu0 %v5450, 64
  %v5507 = vpop.permute.xlu0 %5506
  %5508 = vrot.lane.b32.xlu0 %v5451, 64
  %v5509 = vpop.permute.xlu0 %5508
  %5510 = vrot.lane.b32.xlu0 %v5452, 64
  %v5511 = vpop.permute.xlu0 %5510
  %5512 = vrot.lane.b32.xlu0 %v5453, 64
  %v5513 = vpop.permute.xlu0 %5512
  %5514 = vrot.lane.b32.xlu0 %v5454, 64
  %v5515 = vpop.permute.xlu0 %5514
  %5516 = vrot.lane.b32.xlu0 %v5455, 64
  %v5517 = vpop.permute.xlu0 %5516
  %5518 = vrot.lane.b32.xlu0 %v5456, 64
  %v5519 = vpop.permute.xlu0 %5518
  %5520 = vrot.lane.b32.xlu0 %v5457, 64
  %v5521 = vpop.permute.xlu0 %5520
  %v5538 = vmul.f32 %v5411, %v5491
  %v5539 = vmul.f32 %v5413, %v5493
  %v5540 = vmul.f32 %v5415, %v5495
  %v5541 = vmul.f32 %v5417, %v5497
  %v5542 = vmul.f32 %v5419, %v5499
  %v5543 = vmul.f32 %v5421, %v5501
  %v5544 = vmul.f32 %v5423, %v5503
  %v5545 = vmul.f32 %v5425, %v5505
  %v5546 = vmul.f32 %v5427, %v5507
  %v5547 = vmul.f32 %v5429, %v5509
  %v5548 = vmul.f32 %v5431, %v5511
  %v5549 = vmul.f32 %v5433, %v5513
  %v5550 = vmul.f32 %v5435, %v5515
  %v5551 = vmul.f32 %v5437, %v5517
  %v5552 = vmul.f32 %v5439, %v5519
  %v5553 = vmul.f32 %v5441, %v5521
  %5570 = vrot.lane.b32.xlu0 %v5538, 32
  %v5571 = vpop.permute.xlu0 %5570
  %5572 = vrot.lane.b32.xlu0 %v5539, 32
  %v5573 = vpop.permute.xlu0 %5572
  %5574 = vrot.lane.b32.xlu0 %v5540, 32
  %v5575 = vpop.permute.xlu0 %5574
  %5576 = vrot.lane.b32.xlu0 %v5541, 32
  %v5577 = vpop.permute.xlu0 %5576
  %5578 = vrot.lane.b32.xlu0 %v5542, 32
  %v5579 = vpop.permute.xlu0 %5578
  %5580 = vrot.lane.b32.xlu0 %v5543, 32
  %v5581 = vpop.permute.xlu0 %5580
  %5582 = vrot.lane.b32.xlu0 %v5544, 32
  %v5583 = vpop.permute.xlu0 %5582
  %5584 = vrot.lane.b32.xlu0 %v5545, 32
  %v5585 = vpop.permute.xlu0 %5584
  %5586 = vrot.lane.b32.xlu0 %v5546, 32
  %v5587 = vpop.permute.xlu0 %5586
  %5588 = vrot.lane.b32.xlu0 %v5547, 32
  %v5589 = vpop.permute.xlu0 %5588
  %5590 = vrot.lane.b32.xlu0 %v5548, 32
  %v5591 = vpop.permute.xlu0 %5590
  %5592 = vrot.lane.b32.xlu0 %v5549, 32
  %v5593 = vpop.permute.xlu0 %5592
  %5594 = vrot.lane.b32.xlu0 %v5550, 32
  %v5595 = vpop.permute.xlu0 %5594
  %5596 = vrot.lane.b32.xlu0 %v5551, 32
  %v5597 = vpop.permute.xlu0 %5596
  %5598 = vrot.lane.b32.xlu0 %v5552, 32
  %v5599 = vpop.permute.xlu0 %5598
  %5600 = vrot.lane.b32.xlu0 %v5553, 32
  %v5601 = vpop.permute.xlu0 %5600
  %v5618 = vadd.f32 %v5458, %v5571
  %v5619 = vadd.f32 %v5459, %v5573
  %v5620 = vadd.f32 %v5460, %v5575
  %v5621 = vadd.f32 %v5461, %v5577
  %v5622 = vadd.f32 %v5462, %v5579
  %v5623 = vadd.f32 %v5463, %v5581
  %v5624 = vadd.f32 %v5464, %v5583
  %v5625 = vadd.f32 %v5465, %v5585
  %v5626 = vadd.f32 %v5466, %v5587
  %v5627 = vadd.f32 %v5467, %v5589
  %v5628 = vadd.f32 %v5468, %v5591
  %v5629 = vadd.f32 %v5469, %v5593
  %v5630 = vadd.f32 %v5470, %v5595
  %v5631 = vadd.f32 %v5471, %v5597
  %v5632 = vadd.f32 %v5472, %v5599
  %v5633 = vadd.f32 %v5473, %v5601
  %v5634 = vtanh.pop %v5618
  %v5635 = vtanh.pop %v5619
  %v5636 = vtanh.pop %v5620
  %v5637 = vtanh.pop %v5621
  %v5638 = vtanh.pop %v5622
  %v5639 = vtanh.pop %v5623
  %v5640 = vtanh.pop %v5624
  %v5641 = vtanh.pop %v5625
  %v5642 = vtanh.pop %v5626
  %v5643 = vtanh.pop %v5627
  %v5644 = vtanh.pop %v5628
  %v5645 = vtanh.pop %v5629
  %v5646 = vtanh.pop %v5630
  %v5647 = vtanh.pop %v5631
  %v5648 = vtanh.pop %v5632
  %v5649 = vtanh.pop %v5633
  %5666 = vrot.lane.b32.xlu0 %v5634, 64
  %v5667 = vpop.permute.xlu0 %5666
  %5668 = vrot.lane.b32.xlu0 %v5635, 64
  %v5669 = vpop.permute.xlu0 %5668
  %5670 = vrot.lane.b32.xlu0 %v5636, 64
  %v5671 = vpop.permute.xlu0 %5670
  %5672 = vrot.lane.b32.xlu0 %v5637, 64
  %v5673 = vpop.permute.xlu0 %5672
  %5674 = vrot.lane.b32.xlu0 %v5638, 64
  %v5675 = vpop.permute.xlu0 %5674
  %5676 = vrot.lane.b32.xlu0 %v5639, 64
  %v5677 = vpop.permute.xlu0 %5676
  %5678 = vrot.lane.b32.xlu0 %v5640, 64
  %v5679 = vpop.permute.xlu0 %5678
  %5680 = vrot.lane.b32.xlu0 %v5641, 64
  %v5681 = vpop.permute.xlu0 %5680
  %5682 = vrot.lane.b32.xlu0 %v5642, 64
  %v5683 = vpop.permute.xlu0 %5682
  %5684 = vrot.lane.b32.xlu0 %v5643, 64
  %v5685 = vpop.permute.xlu0 %5684
  %5686 = vrot.lane.b32.xlu0 %v5644, 64
  %v5687 = vpop.permute.xlu0 %5686
  %5688 = vrot.lane.b32.xlu0 %v5645, 64
  %v5689 = vpop.permute.xlu0 %5688
  %5690 = vrot.lane.b32.xlu0 %v5646, 64
  %v5691 = vpop.permute.xlu0 %5690
  %5692 = vrot.lane.b32.xlu0 %v5647, 64
  %v5693 = vpop.permute.xlu0 %5692
  %5694 = vrot.lane.b32.xlu0 %v5648, 64
  %v5695 = vpop.permute.xlu0 %5694
  %5696 = vrot.lane.b32.xlu0 %v5649, 64
  %v5697 = vpop.permute.xlu0 %5696
  %v5714 = vmul.f32 %v5411, %v5667
  %v5715 = vmul.f32 %v5413, %v5669
  %v5716 = vmul.f32 %v5415, %v5671
  %v5717 = vmul.f32 %v5417, %v5673
  %v5718 = vmul.f32 %v5419, %v5675
  %v5719 = vmul.f32 %v5421, %v5677
  %v5720 = vmul.f32 %v5423, %v5679
  %v5721 = vmul.f32 %v5425, %v5681
  %v5722 = vmul.f32 %v5427, %v5683
  %v5723 = vmul.f32 %v5429, %v5685
  %v5724 = vmul.f32 %v5431, %v5687
  %v5725 = vmul.f32 %v5433, %v5689
  %v5726 = vmul.f32 %v5435, %v5691
  %v5727 = vmul.f32 %v5437, %v5693
  %v5728 = vmul.f32 %v5439, %v5695
  %v5729 = vmul.f32 %v5441, %v5697
  %5746 = vrot.lane.b32.xlu0 %v5714, 32
  %v5747 = vpop.permute.xlu0 %5746
  %5748 = vrot.lane.b32.xlu0 %v5715, 32
  %v5749 = vpop.permute.xlu0 %5748
  %5750 = vrot.lane.b32.xlu0 %v5716, 32
  %v5751 = vpop.permute.xlu0 %5750
  %5752 = vrot.lane.b32.xlu0 %v5717, 32
  %v5753 = vpop.permute.xlu0 %5752
  %5754 = vrot.lane.b32.xlu0 %v5718, 32
  %v5755 = vpop.permute.xlu0 %5754
  %5756 = vrot.lane.b32.xlu0 %v5719, 32
  %v5757 = vpop.permute.xlu0 %5756
  %5758 = vrot.lane.b32.xlu0 %v5720, 32
  %v5759 = vpop.permute.xlu0 %5758
  %5760 = vrot.lane.b32.xlu0 %v5721, 32
  %v5761 = vpop.permute.xlu0 %5760
  %5762 = vrot.lane.b32.xlu0 %v5722, 32
  %v5763 = vpop.permute.xlu0 %5762
  %5764 = vrot.lane.b32.xlu0 %v5723, 32
  %v5765 = vpop.permute.xlu0 %5764
  %5766 = vrot.lane.b32.xlu0 %v5724, 32
  %v5767 = vpop.permute.xlu0 %5766
  %5768 = vrot.lane.b32.xlu0 %v5725, 32
  %v5769 = vpop.permute.xlu0 %5768
  %5770 = vrot.lane.b32.xlu0 %v5726, 32
  %v5771 = vpop.permute.xlu0 %5770
  %5772 = vrot.lane.b32.xlu0 %v5727, 32
  %v5773 = vpop.permute.xlu0 %5772
  %5774 = vrot.lane.b32.xlu0 %v5728, 32
  %v5775 = vpop.permute.xlu0 %5774
  %5776 = vrot.lane.b32.xlu0 %v5729, 32
  %v5777 = vpop.permute.xlu0 %5776
  %5794 = vst.msk [vmem:[%s3] sm:$0xff] %vm1976, %v5747
  %5795 = vst.msk [vmem:[%s3 + $0x8] sm:$0xff] %vm1976, %v5749
  %5796 = vst.msk [vmem:[%s3 + $0x10] sm:$0xff] %vm1976, %v5751
  %5797 = vst.msk [vmem:[%s3 + $0x18] sm:$0xff] %vm1976, %v5753
  %5798 = vst.msk [vmem:[%s3 + $0x20] sm:$0xff] %vm1976, %v5755
  %5799 = vst.msk [vmem:[%s3 + $0x28] sm:$0xff] %vm1976, %v5757
  %5800 = vst.msk [vmem:[%s3 + $0x30] sm:$0xff] %vm1976, %v5759
  %5801 = vst.msk [vmem:[%s3 + $0x38] sm:$0xff] %vm1976, %v5761
  %5802 = vst.msk [vmem:[%s3 + $0x40] sm:$0xff] %vm1976, %v5763
  %5803 = vst.msk [vmem:[%s3 + $0x48] sm:$0xff] %vm1976, %v5765
  %5804 = vst.msk [vmem:[%s3 + $0x50] sm:$0xff] %vm1976, %v5767
  %5805 = vst.msk [vmem:[%s3 + $0x58] sm:$0xff] %vm1976, %v5769
  %5806 = vst.msk [vmem:[%s3 + $0x60] sm:$0xff] %vm1976, %v5771
  %5807 = vst.msk [vmem:[%s3 + $0x68] sm:$0xff] %vm1976, %v5773
  %5808 = vst.msk [vmem:[%s3 + $0x70] sm:$0xff] %vm1976, %v5775
  %5809 = vst.msk [vmem:[%s3 + $0x78] sm:$0xff] %vm1976, %v5777
  // Predicated region
  $region14: #{tpu_custom_call.1} parent=0 // pred_check
    _
  $region15: #{tpu_custom_call.1} parent=0 // pred_check_branch
    %5811 = sbr.rel (0) target = $region17
  $region16: #{tpu_custom_call.1} parent=0 // pred_region
    _
  $region17: #{tpu_custom_call.1} parent=0 // pred_fallthru
    _
  // Predicated region
  $region18: #{tpu_custom_call.1} parent=0 // pred_check
    _
  $region19: #{tpu_custom_call.1} parent=0 // pred_check_branch
    %5813 = sbr.rel (0) target = $region21
  $region20: #{tpu_custom_call.1} parent=0 // pred_region
    _
  $region21: #{tpu_custom_call.1} parent=0 // pred_fallthru
    _

</llo_original>
